<compile_context>
chip_gen: v5e
topology: v5e:2x2
jax: 0.10.0
libtpu: 0.0.40
codegen_flags: <defaults>
</compile_context>

<pallas_src>
import jax
import jax.numpy as jnp
from jax.experimental import pallas as pl
from jax.experimental.pallas import tpu as pltpu

MAX_LENGTH = 20


def _round_up(x, m):
    return ((x + m - 1) // m) * m


def _decoder_seq_kernel(emb_ref,    # (T, H)      pre-gathered embedding rows (dropout = identity)
                        h0_ref,     # (1, H)      initial hidden
                        enc_ref,    # (L, H)      encoder outputs
                        we_ref,     # (H, A+H)    [wae | 0 | wce]   embedded-side (prologue)
                        wh_ref,     # (H, A+3H)   [wah | 0 | whh]   hidden-side (fused per step)
                        wca_ref,    # (H, H)      attn_combine, attended half
                        wih_ref,    # (H, 3H)     GRU W_ih^T
                        wout_ref,   # (H, V)      out W^T
                        bias_ref,   # (8, bw)     packed biases
                        logp_ref,   # (T, V) out  log-probs per step
                        hid_ref,    # (1, H) out  final hidden
                        attn_ref):  # (T, L) out  attention weights per step
    T, H = emb_ref.shape
    L = enc_ref.shape[0]
    V = wout_ref.shape[1]
    A = we_ref.shape[1] - H          # lane-aligned start of the second stacked-weight half

    # Loop-invariant bias slices, hoisted out of the recurrence.
    bias_e = bias_ref[0:1, 0:A + H]  # [attn_b | 0 | comb_b]
    bih = bias_ref[1:2, 0:3 * H]
    bhh = bias_ref[2:3, 0:3 * H]
    out_b = bias_ref[3:4, 0:V]

    # ---- Prologue (once per call, not per step) --------------------------------------------
    # Embedding-side matmuls for ALL T steps in one MXU push (M = T rows):
    #   E[t, :L]    = emb_t @ wae + attn_b     (attention logits, embedded half)
    #   E[t, A:A+H] = emb_t @ wce + comb_b     (attn_combine,     embedded half)
    E = jnp.dot(emb_ref[...], we_ref[...], preferred_element_type=jnp.float32) + bias_e  # (T, A+H)
    # Fold encoder_outputs into the attended half of attn_combine:
    #   attn_applied @ wca == attn_w @ (enc @ wca)
    enc_ca = jnp.dot(enc_ref[...], wca_ref[...], preferred_element_type=jnp.float32)     # (L, H)

    hid = h0_ref[...]                # (1, H), carried in vregs across the unrolled loop

    # ---- Fully-unrolled decode recurrence (T is a trace-time constant, <= MAX_LENGTH) ------
    for t in range(T):
        e_t = E[t:t + 1, :]          # (1, A+H) static row slice

        # Single fused hidden-side MXU push: [attn hidden-half | GRU W_hh].
        hh = jnp.dot(hid, wh_ref[...], preferred_element_type=jnp.float32)   # (1, A+3H)

        # attn_weights = softmax(attn(cat(embedded, hidden))).
        a_logits = e_t[:, 0:L] + hh[:, 0:L]
        am = jnp.max(a_logits, axis=1, keepdims=True)
        ae = jnp.exp(a_logits - am)
        attn_w = ae * pl.reciprocal(jnp.sum(ae, axis=1, keepdims=True), approx=True)  # (1, L)

        # relu(attn_combine(cat(embedded, attn_applied))); attended half folded into enc_ca.
        x = jnp.maximum(
            e_t[:, A:] + jnp.dot(attn_w, enc_ca, preferred_element_type=jnp.float32), 0.0)

        # GRU cell (PyTorch gate order r, z, n; b_hn stays inside the r*(...) term).
        gi = jnp.dot(x, wih_ref[...], preferred_element_type=jnp.float32) + bih   # (1, 3H)
        gh = hh[:, A:] + bhh                                                      # (1, 3H)
        r = jax.nn.sigmoid(gi[:, 0:H] + gh[:, 0:H])
        z = jax.nn.sigmoid(gi[:, H:2 * H] + gh[:, H:2 * H])
        n = jnp.tanh(gi[:, 2 * H:] + r * gh[:, 2 * H:])
        hid = (1.0 - z) * n + z * hid                                             # (1, H)

        # out linear + (exact) log_softmax.
        logits = jnp.dot(hid, wout_ref[...], preferred_element_type=jnp.float32) + out_b
        lm = jnp.max(logits, axis=1, keepdims=True)
        lse = lm + jnp.log(jnp.sum(jnp.exp(logits - lm), axis=1, keepdims=True))

        logp_ref[pl.ds(t, 1), :] = logits - lse
        attn_ref[pl.ds(t, 1), :] = attn_w

    hid_ref[...] = hid


def prepare_decoder_params(params):
    """One-time (hoisted) prep: transposes, casts, weight stacking, bias packing."""
    f32 = jnp.float32
    H = params["comb_w"].shape[0]
    L = params["attn_w"].shape[0]
    V = params["out_w"].shape[0]
    A = _round_up(L, 128)            # lane-aligned start of the second stacked-weight half

    attn_wT = params["attn_w"].astype(f32).T   # (2H, L): rows [wae; wah]
    comb_wT = params["comb_w"].astype(f32).T   # (2H, H): rows [wce; wca]
    wae, wah = attn_wT[:H], attn_wT[H:]
    wce, wca = comb_wT[:H], comb_wT[H:]
    whh = params["gru_whh"].astype(f32).T      # (H, 3H)

    # Stacked weights; second half starts at a 128-lane boundary.
    we = jnp.zeros((H, A + H), f32)
    we = we.at[:, :L].set(wae).at[:, A:].set(wce)          # embedded-side (prologue)
    wh = jnp.zeros((H, A + 3 * H), f32)
    wh = wh.at[:, :L].set(wah).at[:, A:].set(whh)          # hidden-side (per step, fused)

    bw = _round_up(max(A + H, 3 * H, V), 128)
    bias = jnp.zeros((8, bw), f32)
    bias = bias.at[0, :L].set(params["attn_b"].astype(f32))
    bias = bias.at[0, A:A + H].set(params["comb_b"].astype(f32))
    bias = bias.at[1, :3 * H].set(params["gru_bih"].astype(f32))
    bias = bias.at[2, :3 * H].set(params["gru_bhh"].astype(f32))
    bias = bias.at[3, :V].set(params["out_b"].astype(f32))

    return {
        "emb": params["embedding"].astype(f32),   # (V, H) table; rows gathered in the wrapper
        "we": we, "wh": wh, "wca": wca,
        "wih": params["gru_wih"].astype(f32).T,   # (H, 3H)
        "wout": params["out_w"].astype(f32).T,    # (H, V)
        "bias": bias,                             # (8, bw) packed biases
    }


def final_decoder_rnn_decode(tokens, hidden0, encoder_outputs, prepared):
    """Run T teacher-forced decoder steps in one pallas_call (single kernel invocation).

    tokens: (T,) int32; hidden0: (1,1,H); encoder_outputs: (L,H).
    Returns (log_probs (T,V), final_hidden (1,1,H), attn_weights (T,L)).
    """
    emb_tab = prepared["emb"]
    V, H = emb_tab.shape
    L = encoder_outputs.shape[0]
    T = int(tokens.shape[0])
    A = prepared["we"].shape[1] - H
    bw = prepared["bias"].shape[1]

    # Pre-gather embedding rows (tiny XLA gather, hoisted); removes per-step data-dependent
    # DMA + scalar-prefetch machinery. Token ids clamped so bad ids can't go OOB.
    tok = jnp.clip(tokens.astype(jnp.int32), 0, V - 1)
    emb_rows = jnp.take(emb_tab, tok, axis=0)                 # (T, H)
    h0 = hidden0.reshape(1, H).astype(jnp.float32)
    enc = encoder_outputs.astype(jnp.float32)

    c2 = lambda i: (0, 0)
    grid_spec = pltpu.PrefetchScalarGridSpec(
        num_scalar_prefetch=0,
        grid=(1,),                                            # decode loop runs in-kernel
        in_specs=[
            pl.BlockSpec((T, H), c2),          # embedding rows
            pl.BlockSpec((1, H), c2),          # h0
            pl.BlockSpec((L, H), c2),          # encoder outputs
            pl.BlockSpec((H, A + H), c2),      # [wae | wce]
            pl.BlockSpec((H, A + 3 * H), c2),  # [wah | whh]
            pl.BlockSpec((H, H), c2),          # wca
            pl.BlockSpec((H, 3 * H), c2),      # GRU W_ih^T
            pl.BlockSpec((H, V), c2),          # out W^T
            pl.BlockSpec((8, bw), c2),         # packed biases
        ],
        out_specs=[
            pl.BlockSpec((T, V), c2),
            pl.BlockSpec((1, H), c2),
            pl.BlockSpec((T, L), c2),
        ],
    )

    flops_step = 2 * H * ((A + 3 * H) + 3 * H + V) + 2 * L * H
    flops_pro = 2 * T * H * (A + H) + 2 * L * H * H
    in_bytes = 4 * (emb_rows.size + h0.size + enc.size
                    + prepared["we"].size + prepared["wh"].size + prepared["wca"].size
                    + prepared["wih"].size + prepared["wout"].size + prepared["bias"].size)
    cost = pl.CostEstimate(
        flops=int(flops_pro + T * flops_step),
        transcendentals=int(T * (L + V + 3 * H)),
        bytes_accessed=int(in_bytes + 4 * (T * V + H + T * L)),
    )

    logp, hid, attn = pl.pallas_call(
        _decoder_seq_kernel,
        grid_spec=grid_spec,
        out_shape=(jax.ShapeDtypeStruct((T, V), jnp.float32),
                   jax.ShapeDtypeStruct((1, H), jnp.float32),
                   jax.ShapeDtypeStruct((T, L), jnp.float32)),
        compiler_params=pltpu.CompilerParams(dimension_semantics=("arbitrary",)),
        cost_estimate=cost,
    )(emb_rows, h0, enc, prepared["we"], prepared["wh"], prepared["wca"],
      prepared["wih"], prepared["wout"], prepared["bias"])

    return logp, hid.reshape(1, 1, H), attn


def final_decoder_rnn(token, hidden, encoder_outputs, prepared):
    """Single-step API matching the PyTorch module forward (T=1)."""
    tokens = jnp.asarray(token, jnp.int32).reshape(1)
    return final_decoder_rnn_decode(tokens, hidden, encoder_outputs, prepared)


def _reference_step(tok, hid2d, encoder_outputs, params):
    """Pure-JAX single-step reference mirroring the PyTorch forward (eval mode)."""
    H = params["comb_w"].shape[0]
    emb = params["embedding"][tok].reshape(1, H)
    cat1 = jnp.concatenate([emb, hid2d], axis=1)
    aw = jax.nn.softmax(cat1 @ params["attn_w"].T + params["attn_b"], axis=1)
    applied = aw @ encoder_outputs
    x = jnp.concatenate([emb, applied], axis=1) @ params["comb_w"].T + params["comb_b"]
    x = jax.nn.relu(x)
    gi = x @ params["gru_wih"].T + params["gru_bih"]
    gh = hid2d @ params["gru_whh"].T + params["gru_bhh"]
    r = jax.nn.sigmoid(gi[:, :H] + gh[:, :H])
    z = jax.nn.sigmoid(gi[:, H:2 * H] + gh[:, H:2 * H])
    n = jnp.tanh(gi[:, 2 * H:] + r * gh[:, 2 * H:])
    h_new = (1.0 - z) * n + z * hid2d
    logits = h_new @ params["out_w"].T + params["out_b"]
    logp = jax.nn.log_softmax(logits, axis=1)
    return logp, h_new, aw


def _reference_decode(tokens, hidden0, encoder_outputs, params):
    H = params["comb_w"].shape[0]
    hid = hidden0.reshape(1, H)
    logps, aws = [], []
    for t in range(tokens.shape[0]):
        logp, hid, aw = _reference_step(tokens[t], hid, encoder_outputs, params)
        logps.append(logp[0])
        aws.append(aw[0])
    return jnp.stack(logps), hid.reshape(1, 1, H), jnp.stack(aws)


def _init_params(key, word_dim, vocab_size, max_length):
    H, V, L = word_dim, vocab_size, max_length
    ks = jax.random.split(key, 12)
    u = lambda k, shape, fan: jax.random.uniform(
        k, shape, jnp.float32, -1.0 / jnp.sqrt(fan), 1.0 / jnp.sqrt(fan))
    return {
        "embedding": jax.random.normal(ks[0], (V, H), jnp.float32),
        "attn_w": u(ks[1], (L, 2 * H), 2 * H),
        "attn_b": u(ks[2], (L,), 2 * H),
        "comb_w": u(ks[3], (H, 2 * H), 2 * H),
        "comb_b": u(ks[4], (H,), 2 * H),
        "gru_wih": u(ks[5], (3 * H, H), H),
        "gru_whh": u(ks[6], (3 * H, H), H),
        "gru_bih": u(ks[7], (3 * H,), H),
        "gru_bhh": u(ks[8], (3 * H,), H),
        "out_w": u(ks[9], (V, H), H),
        "out_b": u(ks[10], (V,), H),
    }


if __name__ == "__main__":
    word_dim = 32      # hidden size H
    vocab_size = 64    # output size V
    max_length = MAX_LENGTH
    T = 8              # decode steps per kernel launch

    key = jax.random.PRNGKey(0)
    pkey, hkey, ekey, tkey = jax.random.split(key, 4)
    params = _init_params(pkey, word_dim, vocab_size, max_length)

    hidden0 = jax.random.normal(hkey, (1, 1, word_dim), jnp.float32)
    encoder_outputs = jax.random.normal(ekey, (max_length, word_dim), jnp.float32)
    tokens = jax.random.randint(tkey, (T,), 0, vocab_size, dtype=jnp.int32)

    prepared = prepare_decoder_params(params)   # hoisted: done once per weight set

    # Full-sequence decode (one pallas_call, one kernel invocation, for all T steps).
    logp_seq, final_hidden, attn_seq = final_decoder_rnn_decode(
        tokens, hidden0, encoder_outputs, prepared)
    jax.block_until_ready((logp_seq, final_hidden, attn_seq))

    # Single-step API (shapes match the PyTorch module forward).
    logp1, hid1, aw1 = final_decoder_rnn(tokens[0], hidden0, encoder_outputs, prepared)
    jax.block_until_ready((logp1, hid1, aw1))

    # Reference checks (tolerance covers the approx reciprocal in the attention softmax).
    tol = 2e-3
    r_logp, r_hid, r_aw = _reference_decode(tokens, hidden0, encoder_outputs, params)
    assert logp_seq.shape == (T, vocab_size)
    assert attn_seq.shape == (T, max_length)
    assert final_hidden.shape == (1, 1, word_dim)
    assert jnp.allclose(logp_seq, r_logp, atol=tol), "sequence logp mismatch"
    assert jnp.allclose(attn_seq, r_aw, atol=tol), "sequence attn mismatch"
    assert jnp.allclose(final_hidden, r_hid, atol=tol), "final hidden mismatch"

    r1_logp, r1_hid, r1_aw = _reference_decode(tokens[:1], hidden0, encoder_outputs, params)
    assert logp1.shape == (1, vocab_size)
    assert hid1.shape == (1, 1, word_dim)
    assert aw1.shape == (1, max_length)
    assert jnp.allclose(logp1, r1_logp, atol=tol), "step logp mismatch"
    assert jnp.allclose(hid1, r1_hid, atol=tol), "step hidden mismatch"
    assert jnp.allclose(aw1, r1_aw, atol=tol), "step attn mismatch"

    print("KERNEL_OK")
</pallas_src>

<mosaic_0001>
module attributes {stable_mosaic.version = 11 : i64} {
  func.func @_decoder_seq_kernel(%arg0: i32, %arg1: memref<8x32xf32, #tpu.memory_space<vmem>>, %arg2: memref<1x32xf32, #tpu.memory_space<vmem>>, %arg3: memref<20x32xf32, #tpu.memory_space<vmem>>, %arg4: memref<32x160xf32, #tpu.memory_space<vmem>>, %arg5: memref<32x224xf32, #tpu.memory_space<vmem>>, %arg6: memref<32x32xf32, #tpu.memory_space<vmem>>, %arg7: memref<32x96xf32, #tpu.memory_space<vmem>>, %arg8: memref<32x64xf32, #tpu.memory_space<vmem>>, %arg9: memref<8x256xf32, #tpu.memory_space<vmem>>, %arg10: memref<8x64xf32, #tpu.memory_space<vmem>>, %arg11: memref<1x32xf32, #tpu.memory_space<vmem>>, %arg12: memref<8x20xf32, #tpu.memory_space<vmem>>) attributes {dimension_semantics = [#tpu.dimension_semantics<arbitrary>], iteration_bounds = array<i64: 1>, scalar_prefetch = 0 : i64, scratch_operands = 0 : i64, tpu.core_type = #tpu.core_type<tc>, window_params = [{pipeline_mode = #tpu.pipeline_mode<synchronous>, transform_indices = @transform_0, window_bounds = array<i64: 8, 32>}, {pipeline_mode = #tpu.pipeline_mode<synchronous>, transform_indices = @transform_1, window_bounds = array<i64: 1, 32>}, {pipeline_mode = #tpu.pipeline_mode<synchronous>, transform_indices = @transform_2, window_bounds = array<i64: 20, 32>}, {pipeline_mode = #tpu.pipeline_mode<synchronous>, transform_indices = @transform_3, window_bounds = array<i64: 32, 160>}, {pipeline_mode = #tpu.pipeline_mode<synchronous>, transform_indices = @transform_4, window_bounds = array<i64: 32, 224>}, {pipeline_mode = #tpu.pipeline_mode<synchronous>, transform_indices = @transform_5, window_bounds = array<i64: 32, 32>}, {pipeline_mode = #tpu.pipeline_mode<synchronous>, transform_indices = @transform_6, window_bounds = array<i64: 32, 96>}, {pipeline_mode = #tpu.pipeline_mode<synchronous>, transform_indices = @transform_7, window_bounds = array<i64: 32, 64>}, {pipeline_mode = #tpu.pipeline_mode<synchronous>, transform_indices = @transform_8, window_bounds = array<i64: 8, 256>}, {pipeline_mode = #tpu.pipeline_mode<synchronous>, transform_indices = @transform_9, window_bounds = array<i64: 8, 64>}, {pipeline_mode = #tpu.pipeline_mode<synchronous>, transform_indices = @transform_10, window_bounds = array<i64: 1, 32>}, {pipeline_mode = #tpu.pipeline_mode<synchronous>, transform_indices = @transform_11, window_bounds = array<i64: 8, 20>}]} {
    %c0 = arith.constant 0 : index
    %c0_0 = arith.constant 0 : index
    %0 = vector.load %arg9[%c0, %c0_0] : memref<8x256xf32, #tpu.memory_space<vmem>>, vector<1x160xf32>
    %c1 = arith.constant 1 : index
    %c0_1 = arith.constant 0 : index
    %1 = vector.load %arg9[%c1, %c0_1] : memref<8x256xf32, #tpu.memory_space<vmem>>, vector<1x96xf32>
    %c2 = arith.constant 2 : index
    %c0_2 = arith.constant 0 : index
    %2 = vector.load %arg9[%c2, %c0_2] : memref<8x256xf32, #tpu.memory_space<vmem>>, vector<1x96xf32>
    %c3 = arith.constant 3 : index
    %c0_3 = arith.constant 0 : index
    %3 = vector.load %arg9[%c3, %c0_3] : memref<8x256xf32, #tpu.memory_space<vmem>>, vector<1x64xf32>
    %c0_4 = arith.constant 0 : index
    %c0_5 = arith.constant 0 : index
    %4 = vector.load %arg1[%c0_4, %c0_5] : memref<8x32xf32, #tpu.memory_space<vmem>>, vector<8x32xf32>
    %c0_6 = arith.constant 0 : index
    %c0_7 = arith.constant 0 : index
    %5 = vector.load %arg4[%c0_6, %c0_7] : memref<32x160xf32, #tpu.memory_space<vmem>>, vector<32x160xf32>
    %cst = arith.constant dense<0.000000e+00> : vector<8x160xf32>
    %6 = tpu.matmul %4, %5, %cst {dimension_numbers = #tpu.dot_dimension_numbers<[1], [0], [0], [1], [0, 0, 1, 1], [], []>} : vector<8x32xf32>, vector<32x160xf32>, vector<8x160xf32> -> vector<8x160xf32>
    %7 = vector.broadcast %0 : vector<1x160xf32> to vector<8x160xf32>
    %8 = arith.addf %6, %7 : vector<8x160xf32>
    %c0_8 = arith.constant 0 : index
    %c0_9 = arith.constant 0 : index
    %9 = vector.load %arg3[%c0_8, %c0_9] : memref<20x32xf32, #tpu.memory_space<vmem>>, vector<20x32xf32>
    %c0_10 = arith.constant 0 : index
    %c0_11 = arith.constant 0 : index
    %10 = vector.load %arg6[%c0_10, %c0_11] : memref<32x32xf32, #tpu.memory_space<vmem>>, vector<32x32xf32>
    %cst_12 = arith.constant dense<0.000000e+00> : vector<20x32xf32>
    %11 = tpu.matmul %9, %10, %cst_12 {dimension_numbers = #tpu.dot_dimension_numbers<[1], [0], [0], [1], [0, 0, 1, 1], [], []>} : vector<20x32xf32>, vector<32x32xf32>, vector<20x32xf32> -> vector<20x32xf32>
    %c0_13 = arith.constant 0 : index
    %c0_14 = arith.constant 0 : index
    %12 = vector.load %arg2[%c0_13, %c0_14] : memref<1x32xf32, #tpu.memory_space<vmem>>, vector<1x32xf32>
    %13 = vector.extract_strided_slice %8 {offsets = [0, 0], sizes = [1, 160], strides = [1, 1]} : vector<8x160xf32> to vector<1x160xf32>
    %c0_15 = arith.constant 0 : index
    %c0_16 = arith.constant 0 : index
    %14 = vector.load %arg5[%c0_15, %c0_16] : memref<32x224xf32, #tpu.memory_space<vmem>>, vector<32x224xf32>
    %cst_17 = arith.constant dense<0.000000e+00> : vector<1x224xf32>
    %15 = tpu.matmul %12, %14, %cst_17 {dimension_numbers = #tpu.dot_dimension_numbers<[1], [0], [0], [1], [0, 0, 1, 1], [], []>} : vector<1x32xf32>, vector<32x224xf32>, vector<1x224xf32> -> vector<1x224xf32>
    %16 = vector.extract_strided_slice %13 {offsets = [0, 0], sizes = [1, 20], strides = [1, 1]} : vector<1x160xf32> to vector<1x20xf32>
    %17 = vector.extract_strided_slice %15 {offsets = [0, 0], sizes = [1, 20], strides = [1, 1]} : vector<1x224xf32> to vector<1x20xf32>
    %18 = arith.addf %16, %17 : vector<1x20xf32>
    %cst_18 = arith.constant dense<0xFF800000> : vector<1xf32>
    %19 = vector.multi_reduction <maximumf>, %18, %cst_18 [1] : vector<1x20xf32> to vector<1xf32>
    %20 = vector.shape_cast %19 : vector<1xf32> to vector<1x1xf32>
    %21 = vector.broadcast %20 : vector<1x1xf32> to vector<1x20xf32>
    %22 = arith.subf %18, %21 : vector<1x20xf32>
    %23 = math.exp %22 : vector<1x20xf32>
    %cst_19 = arith.constant dense<0.000000e+00> : vector<1xf32>
    %24 = vector.multi_reduction <add>, %23, %cst_19 [1] : vector<1x20xf32> to vector<1xf32>
    %25 = vector.shape_cast %24 : vector<1xf32> to vector<1x1xf32>
    %26 = tpu.reciprocal %25 {approx = true} : vector<1x1xf32> -> vector<1x1xf32>
    %27 = vector.broadcast %26 : vector<1x1xf32> to vector<1x20xf32>
    %28 = arith.mulf %23, %27 : vector<1x20xf32>
    %29 = vector.extract_strided_slice %13 {offsets = [0, 128], sizes = [1, 32], strides = [1, 1]} : vector<1x160xf32> to vector<1x32xf32>
    %cst_20 = arith.constant dense<0.000000e+00> : vector<1x32xf32>
    %30 = tpu.matmul %28, %11, %cst_20 {dimension_numbers = #tpu.dot_dimension_numbers<[1], [0], [0], [1], [0, 0, 1, 1], [], []>} : vector<1x20xf32>, vector<20x32xf32>, vector<1x32xf32> -> vector<1x32xf32>
    %31 = arith.addf %29, %30 : vector<1x32xf32>
    %cst_21 = arith.constant 0.000000e+00 : f32
    %32 = vector.broadcast %cst_21 : f32 to vector<1x32xf32>
    %33 = arith.maximumf %31, %32 : vector<1x32xf32>
    %c0_22 = arith.constant 0 : index
    %c0_23 = arith.constant 0 : index
    %34 = vector.load %arg7[%c0_22, %c0_23] : memref<32x96xf32, #tpu.memory_space<vmem>>, vector<32x96xf32>
    %cst_24 = arith.constant dense<0.000000e+00> : vector<1x96xf32>
    %35 = tpu.matmul %33, %34, %cst_24 {dimension_numbers = #tpu.dot_dimension_numbers<[1], [0], [0], [1], [0, 0, 1, 1], [], []>} : vector<1x32xf32>, vector<32x96xf32>, vector<1x96xf32> -> vector<1x96xf32>
    %36 = arith.addf %35, %1 : vector<1x96xf32>
    %37 = vector.extract_strided_slice %15 {offsets = [0, 128], sizes = [1, 96], strides = [1, 1]} : vector<1x224xf32> to vector<1x96xf32>
    %38 = arith.addf %37, %2 : vector<1x96xf32>
    %39 = vector.extract_strided_slice %36 {offsets = [0, 0], sizes = [1, 32], strides = [1, 1]} : vector<1x96xf32> to vector<1x32xf32>
    %40 = vector.extract_strided_slice %38 {offsets = [0, 0], sizes = [1, 32], strides = [1, 1]} : vector<1x96xf32> to vector<1x32xf32>
    %41 = arith.addf %39, %40 : vector<1x32xf32>
    %42 = arith.negf %41 : vector<1x32xf32>
    %43 = math.exp %42 : vector<1x32xf32>
    %cst_25 = arith.constant 1.000000e+00 : f32
    %44 = vector.broadcast %cst_25 : f32 to vector<1x32xf32>
    %45 = arith.addf %44, %43 : vector<1x32xf32>
    %46 = arith.divf %44, %45 : vector<1x32xf32>
    %47 = vector.extract_strided_slice %36 {offsets = [0, 32], sizes = [1, 32], strides = [1, 1]} : vector<1x96xf32> to vector<1x32xf32>
    %48 = vector.extract_strided_slice %38 {offsets = [0, 32], sizes = [1, 32], strides = [1, 1]} : vector<1x96xf32> to vector<1x32xf32>
    %49 = arith.addf %47, %48 : vector<1x32xf32>
    %50 = arith.negf %49 : vector<1x32xf32>
    %51 = math.exp %50 : vector<1x32xf32>
    %cst_26 = arith.constant 1.000000e+00 : f32
    %52 = vector.broadcast %cst_26 : f32 to vector<1x32xf32>
    %53 = arith.addf %52, %51 : vector<1x32xf32>
    %54 = arith.divf %52, %53 : vector<1x32xf32>
    %55 = vector.extract_strided_slice %36 {offsets = [0, 64], sizes = [1, 32], strides = [1, 1]} : vector<1x96xf32> to vector<1x32xf32>
    %56 = vector.extract_strided_slice %38 {offsets = [0, 64], sizes = [1, 32], strides = [1, 1]} : vector<1x96xf32> to vector<1x32xf32>
    %57 = arith.mulf %46, %56 : vector<1x32xf32>
    %58 = arith.addf %55, %57 : vector<1x32xf32>
    %59 = math.tanh %58 : vector<1x32xf32>
    %cst_27 = arith.constant 1.000000e+00 : f32
    %60 = vector.broadcast %cst_27 : f32 to vector<1x32xf32>
    %61 = arith.subf %60, %54 : vector<1x32xf32>
    %62 = arith.mulf %61, %59 : vector<1x32xf32>
    %63 = arith.mulf %54, %12 : vector<1x32xf32>
    %64 = arith.addf %62, %63 : vector<1x32xf32>
    %c0_28 = arith.constant 0 : index
    %c0_29 = arith.constant 0 : index
    %65 = vector.load %arg8[%c0_28, %c0_29] : memref<32x64xf32, #tpu.memory_space<vmem>>, vector<32x64xf32>
    %cst_30 = arith.constant dense<0.000000e+00> : vector<1x64xf32>
    %66 = tpu.matmul %64, %65, %cst_30 {dimension_numbers = #tpu.dot_dimension_numbers<[1], [0], [0], [1], [0, 0, 1, 1], [], []>} : vector<1x32xf32>, vector<32x64xf32>, vector<1x64xf32> -> vector<1x64xf32>
    %67 = arith.addf %66, %3 : vector<1x64xf32>
    %cst_31 = arith.constant dense<0xFF800000> : vector<1xf32>
    %68 = vector.multi_reduction <maximumf>, %67, %cst_31 [1] : vector<1x64xf32> to vector<1xf32>
    %69 = vector.shape_cast %68 : vector<1xf32> to vector<1x1xf32>
    %70 = vector.broadcast %69 : vector<1x1xf32> to vector<1x64xf32>
    %71 = arith.subf %67, %70 : vector<1x64xf32>
    %72 = math.exp %71 : vector<1x64xf32>
    %cst_32 = arith.constant dense<0.000000e+00> : vector<1xf32>
    %73 = vector.multi_reduction <add>, %72, %cst_32 [1] : vector<1x64xf32> to vector<1xf32>
    %74 = vector.shape_cast %73 : vector<1xf32> to vector<1x1xf32>
    %75 = math.log %74 : vector<1x1xf32>
    %76 = arith.addf %69, %75 : vector<1x1xf32>
    %77 = vector.broadcast %76 : vector<1x1xf32> to vector<1x64xf32>
    %78 = arith.subf %67, %77 : vector<1x64xf32>
    %c0_33 = arith.constant 0 : index
    %c0_34 = arith.constant 0 : index
    %79 = vector.load %arg10[%c0_33, %c0_34] : memref<8x64xf32, #tpu.memory_space<vmem>>, vector<1x64xf32>
    tpu.vector_store %arg10[%c0_33, %c0_34], %78 {strides = array<i32>} : memref<8x64xf32, #tpu.memory_space<vmem>>, vector<1x64xf32>,
    %c0_35 = arith.constant 0 : index
    %c0_36 = arith.constant 0 : index
    %80 = vector.load %arg12[%c0_35, %c0_36] : memref<8x20xf32, #tpu.memory_space<vmem>>, vector<1x20xf32>
    tpu.vector_store %arg12[%c0_35, %c0_36], %28 {strides = array<i32>} : memref<8x20xf32, #tpu.memory_space<vmem>>, vector<1x20xf32>,
    %81 = vector.extract_strided_slice %8 {offsets = [1, 0], sizes = [1, 160], strides = [1, 1]} : vector<8x160xf32> to vector<1x160xf32>
    %c0_37 = arith.constant 0 : index
    %c0_38 = arith.constant 0 : index
    %82 = vector.load %arg5[%c0_37, %c0_38] : memref<32x224xf32, #tpu.memory_space<vmem>>, vector<32x224xf32>
    %cst_39 = arith.constant dense<0.000000e+00> : vector<1x224xf32>
    %83 = tpu.matmul %64, %82, %cst_39 {dimension_numbers = #tpu.dot_dimension_numbers<[1], [0], [0], [1], [0, 0, 1, 1], [], []>} : vector<1x32xf32>, vector<32x224xf32>, vector<1x224xf32> -> vector<1x224xf32>
    %84 = vector.extract_strided_slice %81 {offsets = [0, 0], sizes = [1, 20], strides = [1, 1]} : vector<1x160xf32> to vector<1x20xf32>
    %85 = vector.extract_strided_slice %83 {offsets = [0, 0], sizes = [1, 20], strides = [1, 1]} : vector<1x224xf32> to vector<1x20xf32>
    %86 = arith.addf %84, %85 : vector<1x20xf32>
    %cst_40 = arith.constant dense<0xFF800000> : vector<1xf32>
    %87 = vector.multi_reduction <maximumf>, %86, %cst_40 [1] : vector<1x20xf32> to vector<1xf32>
    %88 = vector.shape_cast %87 : vector<1xf32> to vector<1x1xf32>
    %89 = vector.broadcast %88 : vector<1x1xf32> to vector<1x20xf32>
    %90 = arith.subf %86, %89 : vector<1x20xf32>
    %91 = math.exp %90 : vector<1x20xf32>
    %cst_41 = arith.constant dense<0.000000e+00> : vector<1xf32>
    %92 = vector.multi_reduction <add>, %91, %cst_41 [1] : vector<1x20xf32> to vector<1xf32>
    %93 = vector.shape_cast %92 : vector<1xf32> to vector<1x1xf32>
    %94 = tpu.reciprocal %93 {approx = true} : vector<1x1xf32> -> vector<1x1xf32>
    %95 = vector.broadcast %94 : vector<1x1xf32> to vector<1x20xf32>
    %96 = arith.mulf %91, %95 : vector<1x20xf32>
    %97 = vector.extract_strided_slice %81 {offsets = [0, 128], sizes = [1, 32], strides = [1, 1]} : vector<1x160xf32> to vector<1x32xf32>
    %cst_42 = arith.constant dense<0.000000e+00> : vector<1x32xf32>
    %98 = tpu.matmul %96, %11, %cst_42 {dimension_numbers = #tpu.dot_dimension_numbers<[1], [0], [0], [1], [0, 0, 1, 1], [], []>} : vector<1x20xf32>, vector<20x32xf32>, vector<1x32xf32> -> vector<1x32xf32>
    %99 = arith.addf %97, %98 : vector<1x32xf32>
    %cst_43 = arith.constant 0.000000e+00 : f32
    %100 = vector.broadcast %cst_43 : f32 to vector<1x32xf32>
    %101 = arith.maximumf %99, %100 : vector<1x32xf32>
    %c0_44 = arith.constant 0 : index
    %c0_45 = arith.constant 0 : index
    %102 = vector.load %arg7[%c0_44, %c0_45] : memref<32x96xf32, #tpu.memory_space<vmem>>, vector<32x96xf32>
    %cst_46 = arith.constant dense<0.000000e+00> : vector<1x96xf32>
    %103 = tpu.matmul %101, %102, %cst_46 {dimension_numbers = #tpu.dot_dimension_numbers<[1], [0], [0], [1], [0, 0, 1, 1], [], []>} : vector<1x32xf32>, vector<32x96xf32>, vector<1x96xf32> -> vector<1x96xf32>
    %104 = arith.addf %103, %1 : vector<1x96xf32>
    %105 = vector.extract_strided_slice %83 {offsets = [0, 128], sizes = [1, 96], strides = [1, 1]} : vector<1x224xf32> to vector<1x96xf32>
    %106 = arith.addf %105, %2 : vector<1x96xf32>
    %107 = vector.extract_strided_slice %104 {offsets = [0, 0], sizes = [1, 32], strides = [1, 1]} : vector<1x96xf32> to vector<1x32xf32>
    %108 = vector.extract_strided_slice %106 {offsets = [0, 0], sizes = [1, 32], strides = [1, 1]} : vector<1x96xf32> to vector<1x32xf32>
    %109 = arith.addf %107, %108 : vector<1x32xf32>
    %110 = arith.negf %109 : vector<1x32xf32>
    %111 = math.exp %110 : vector<1x32xf32>
    %cst_47 = arith.constant 1.000000e+00 : f32
    %112 = vector.broadcast %cst_47 : f32 to vector<1x32xf32>
    %113 = arith.addf %112, %111 : vector<1x32xf32>
    %114 = arith.divf %112, %113 : vector<1x32xf32>
    %115 = vector.extract_strided_slice %104 {offsets = [0, 32], sizes = [1, 32], strides = [1, 1]} : vector<1x96xf32> to vector<1x32xf32>
    %116 = vector.extract_strided_slice %106 {offsets = [0, 32], sizes = [1, 32], strides = [1, 1]} : vector<1x96xf32> to vector<1x32xf32>
    %117 = arith.addf %115, %116 : vector<1x32xf32>
    %118 = arith.negf %117 : vector<1x32xf32>
    %119 = math.exp %118 : vector<1x32xf32>
    %cst_48 = arith.constant 1.000000e+00 : f32
    %120 = vector.broadcast %cst_48 : f32 to vector<1x32xf32>
    %121 = arith.addf %120, %119 : vector<1x32xf32>
    %122 = arith.divf %120, %121 : vector<1x32xf32>
    %123 = vector.extract_strided_slice %104 {offsets = [0, 64], sizes = [1, 32], strides = [1, 1]} : vector<1x96xf32> to vector<1x32xf32>
    %124 = vector.extract_strided_slice %106 {offsets = [0, 64], sizes = [1, 32], strides = [1, 1]} : vector<1x96xf32> to vector<1x32xf32>
    %125 = arith.mulf %114, %124 : vector<1x32xf32>
    %126 = arith.addf %123, %125 : vector<1x32xf32>
    %127 = math.tanh %126 : vector<1x32xf32>
    %cst_49 = arith.constant 1.000000e+00 : f32
    %128 = vector.broadcast %cst_49 : f32 to vector<1x32xf32>
    %129 = arith.subf %128, %122 : vector<1x32xf32>
    %130 = arith.mulf %129, %127 : vector<1x32xf32>
    %131 = arith.mulf %122, %64 : vector<1x32xf32>
    %132 = arith.addf %130, %131 : vector<1x32xf32>
    %c0_50 = arith.constant 0 : index
    %c0_51 = arith.constant 0 : index
    %133 = vector.load %arg8[%c0_50, %c0_51] : memref<32x64xf32, #tpu.memory_space<vmem>>, vector<32x64xf32>
    %cst_52 = arith.constant dense<0.000000e+00> : vector<1x64xf32>
    %134 = tpu.matmul %132, %133, %cst_52 {dimension_numbers = #tpu.dot_dimension_numbers<[1], [0], [0], [1], [0, 0, 1, 1], [], []>} : vector<1x32xf32>, vector<32x64xf32>, vector<1x64xf32> -> vector<1x64xf32>
    %135 = arith.addf %134, %3 : vector<1x64xf32>
    %cst_53 = arith.constant dense<0xFF800000> : vector<1xf32>
    %136 = vector.multi_reduction <maximumf>, %135, %cst_53 [1] : vector<1x64xf32> to vector<1xf32>
    %137 = vector.shape_cast %136 : vector<1xf32> to vector<1x1xf32>
    %138 = vector.broadcast %137 : vector<1x1xf32> to vector<1x64xf32>
    %139 = arith.subf %135, %138 : vector<1x64xf32>
    %140 = math.exp %139 : vector<1x64xf32>
    %cst_54 = arith.constant dense<0.000000e+00> : vector<1xf32>
    %141 = vector.multi_reduction <add>, %140, %cst_54 [1] : vector<1x64xf32> to vector<1xf32>
    %142 = vector.shape_cast %141 : vector<1xf32> to vector<1x1xf32>
    %143 = math.log %142 : vector<1x1xf32>
    %144 = arith.addf %137, %143 : vector<1x1xf32>
    %145 = vector.broadcast %144 : vector<1x1xf32> to vector<1x64xf32>
    %146 = arith.subf %135, %145 : vector<1x64xf32>
    %c1_55 = arith.constant 1 : index
    %c0_56 = arith.constant 0 : index
    %147 = vector.load %arg10[%c1_55, %c0_56] : memref<8x64xf32, #tpu.memory_space<vmem>>, vector<1x64xf32>
    tpu.vector_store %arg10[%c1_55, %c0_56], %146 {strides = array<i32>} : memref<8x64xf32, #tpu.memory_space<vmem>>, vector<1x64xf32>,
    %c1_57 = arith.constant 1 : index
    %c0_58 = arith.constant 0 : index
    %148 = vector.load %arg12[%c1_57, %c0_58] : memref<8x20xf32, #tpu.memory_space<vmem>>, vector<1x20xf32>
    tpu.vector_store %arg12[%c1_57, %c0_58], %96 {strides = array<i32>} : memref<8x20xf32, #tpu.memory_space<vmem>>, vector<1x20xf32>,
    %149 = vector.extract_strided_slice %8 {offsets = [2, 0], sizes = [1, 160], strides = [1, 1]} : vector<8x160xf32> to vector<1x160xf32>
    %c0_59 = arith.constant 0 : index
    %c0_60 = arith.constant 0 : index
    %150 = vector.load %arg5[%c0_59, %c0_60] : memref<32x224xf32, #tpu.memory_space<vmem>>, vector<32x224xf32>
    %cst_61 = arith.constant dense<0.000000e+00> : vector<1x224xf32>
    %151 = tpu.matmul %132, %150, %cst_61 {dimension_numbers = #tpu.dot_dimension_numbers<[1], [0], [0], [1], [0, 0, 1, 1], [], []>} : vector<1x32xf32>, vector<32x224xf32>, vector<1x224xf32> -> vector<1x224xf32>
    %152 = vector.extract_strided_slice %149 {offsets = [0, 0], sizes = [1, 20], strides = [1, 1]} : vector<1x160xf32> to vector<1x20xf32>
    %153 = vector.extract_strided_slice %151 {offsets = [0, 0], sizes = [1, 20], strides = [1, 1]} : vector<1x224xf32> to vector<1x20xf32>
    %154 = arith.addf %152, %153 : vector<1x20xf32>
    %cst_62 = arith.constant dense<0xFF800000> : vector<1xf32>
    %155 = vector.multi_reduction <maximumf>, %154, %cst_62 [1] : vector<1x20xf32> to vector<1xf32>
    %156 = vector.shape_cast %155 : vector<1xf32> to vector<1x1xf32>
    %157 = vector.broadcast %156 : vector<1x1xf32> to vector<1x20xf32>
    %158 = arith.subf %154, %157 : vector<1x20xf32>
    %159 = math.exp %158 : vector<1x20xf32>
    %cst_63 = arith.constant dense<0.000000e+00> : vector<1xf32>
    %160 = vector.multi_reduction <add>, %159, %cst_63 [1] : vector<1x20xf32> to vector<1xf32>
    %161 = vector.shape_cast %160 : vector<1xf32> to vector<1x1xf32>
    %162 = tpu.reciprocal %161 {approx = true} : vector<1x1xf32> -> vector<1x1xf32>
    %163 = vector.broadcast %162 : vector<1x1xf32> to vector<1x20xf32>
    %164 = arith.mulf %159, %163 : vector<1x20xf32>
    %165 = vector.extract_strided_slice %149 {offsets = [0, 128], sizes = [1, 32], strides = [1, 1]} : vector<1x160xf32> to vector<1x32xf32>
    %cst_64 = arith.constant dense<0.000000e+00> : vector<1x32xf32>
    %166 = tpu.matmul %164, %11, %cst_64 {dimension_numbers = #tpu.dot_dimension_numbers<[1], [0], [0], [1], [0, 0, 1, 1], [], []>} : vector<1x20xf32>, vector<20x32xf32>, vector<1x32xf32> -> vector<1x32xf32>
    %167 = arith.addf %165, %166 : vector<1x32xf32>
    %cst_65 = arith.constant 0.000000e+00 : f32
    %168 = vector.broadcast %cst_65 : f32 to vector<1x32xf32>
    %169 = arith.maximumf %167, %168 : vector<1x32xf32>
    %c0_66 = arith.constant 0 : index
    %c0_67 = arith.constant 0 : index
    %170 = vector.load %arg7[%c0_66, %c0_67] : memref<32x96xf32, #tpu.memory_space<vmem>>, vector<32x96xf32>
    %cst_68 = arith.constant dense<0.000000e+00> : vector<1x96xf32>
    %171 = tpu.matmul %169, %170, %cst_68 {dimension_numbers = #tpu.dot_dimension_numbers<[1], [0], [0], [1], [0, 0, 1, 1], [], []>} : vector<1x32xf32>, vector<32x96xf32>, vector<1x96xf32> -> vector<1x96xf32>
    %172 = arith.addf %171, %1 : vector<1x96xf32>
    %173 = vector.extract_strided_slice %151 {offsets = [0, 128], sizes = [1, 96], strides = [1, 1]} : vector<1x224xf32> to vector<1x96xf32>
    %174 = arith.addf %173, %2 : vector<1x96xf32>
    %175 = vector.extract_strided_slice %172 {offsets = [0, 0], sizes = [1, 32], strides = [1, 1]} : vector<1x96xf32> to vector<1x32xf32>
    %176 = vector.extract_strided_slice %174 {offsets = [0, 0], sizes = [1, 32], strides = [1, 1]} : vector<1x96xf32> to vector<1x32xf32>
    %177 = arith.addf %175, %176 : vector<1x32xf32>
    %178 = arith.negf %177 : vector<1x32xf32>
    %179 = math.exp %178 : vector<1x32xf32>
    %cst_69 = arith.constant 1.000000e+00 : f32
    %180 = vector.broadcast %cst_69 : f32 to vector<1x32xf32>
    %181 = arith.addf %180, %179 : vector<1x32xf32>
    %182 = arith.divf %180, %181 : vector<1x32xf32>
    %183 = vector.extract_strided_slice %172 {offsets = [0, 32], sizes = [1, 32], strides = [1, 1]} : vector<1x96xf32> to vector<1x32xf32>
    %184 = vector.extract_strided_slice %174 {offsets = [0, 32], sizes = [1, 32], strides = [1, 1]} : vector<1x96xf32> to vector<1x32xf32>
    %185 = arith.addf %183, %184 : vector<1x32xf32>
    %186 = arith.negf %185 : vector<1x32xf32>
    %187 = math.exp %186 : vector<1x32xf32>
    %cst_70 = arith.constant 1.000000e+00 : f32
    %188 = vector.broadcast %cst_70 : f32 to vector<1x32xf32>
    %189 = arith.addf %188, %187 : vector<1x32xf32>
    %190 = arith.divf %188, %189 : vector<1x32xf32>
    %191 = vector.extract_strided_slice %172 {offsets = [0, 64], sizes = [1, 32], strides = [1, 1]} : vector<1x96xf32> to vector<1x32xf32>
    %192 = vector.extract_strided_slice %174 {offsets = [0, 64], sizes = [1, 32], strides = [1, 1]} : vector<1x96xf32> to vector<1x32xf32>
    %193 = arith.mulf %182, %192 : vector<1x32xf32>
    %194 = arith.addf %191, %193 : vector<1x32xf32>
    %195 = math.tanh %194 : vector<1x32xf32>
    %cst_71 = arith.constant 1.000000e+00 : f32
    %196 = vector.broadcast %cst_71 : f32 to vector<1x32xf32>
    %197 = arith.subf %196, %190 : vector<1x32xf32>
    %198 = arith.mulf %197, %195 : vector<1x32xf32>
    %199 = arith.mulf %190, %132 : vector<1x32xf32>
    %200 = arith.addf %198, %199 : vector<1x32xf32>
    %c0_72 = arith.constant 0 : index
    %c0_73 = arith.constant 0 : index
    %201 = vector.load %arg8[%c0_72, %c0_73] : memref<32x64xf32, #tpu.memory_space<vmem>>, vector<32x64xf32>
    %cst_74 = arith.constant dense<0.000000e+00> : vector<1x64xf32>
    %202 = tpu.matmul %200, %201, %cst_74 {dimension_numbers = #tpu.dot_dimension_numbers<[1], [0], [0], [1], [0, 0, 1, 1], [], []>} : vector<1x32xf32>, vector<32x64xf32>, vector<1x64xf32> -> vector<1x64xf32>
    %203 = arith.addf %202, %3 : vector<1x64xf32>
    %cst_75 = arith.constant dense<0xFF800000> : vector<1xf32>
    %204 = vector.multi_reduction <maximumf>, %203, %cst_75 [1] : vector<1x64xf32> to vector<1xf32>
    %205 = vector.shape_cast %204 : vector<1xf32> to vector<1x1xf32>
    %206 = vector.broadcast %205 : vector<1x1xf32> to vector<1x64xf32>
    %207 = arith.subf %203, %206 : vector<1x64xf32>
    %208 = math.exp %207 : vector<1x64xf32>
    %cst_76 = arith.constant dense<0.000000e+00> : vector<1xf32>
    %209 = vector.multi_reduction <add>, %208, %cst_76 [1] : vector<1x64xf32> to vector<1xf32>
    %210 = vector.shape_cast %209 : vector<1xf32> to vector<1x1xf32>
    %211 = math.log %210 : vector<1x1xf32>
    %212 = arith.addf %205, %211 : vector<1x1xf32>
    %213 = vector.broadcast %212 : vector<1x1xf32> to vector<1x64xf32>
    %214 = arith.subf %203, %213 : vector<1x64xf32>
    %c2_77 = arith.constant 2 : index
    %c0_78 = arith.constant 0 : index
    %215 = vector.load %arg10[%c2_77, %c0_78] : memref<8x64xf32, #tpu.memory_space<vmem>>, vector<1x64xf32>
    tpu.vector_store %arg10[%c2_77, %c0_78], %214 {strides = array<i32>} : memref<8x64xf32, #tpu.memory_space<vmem>>, vector<1x64xf32>,
    %c2_79 = arith.constant 2 : index
    %c0_80 = arith.constant 0 : index
    %216 = vector.load %arg12[%c2_79, %c0_80] : memref<8x20xf32, #tpu.memory_space<vmem>>, vector<1x20xf32>
    tpu.vector_store %arg12[%c2_79, %c0_80], %164 {strides = array<i32>} : memref<8x20xf32, #tpu.memory_space<vmem>>, vector<1x20xf32>,
    %217 = vector.extract_strided_slice %8 {offsets = [3, 0], sizes = [1, 160], strides = [1, 1]} : vector<8x160xf32> to vector<1x160xf32>
    %c0_81 = arith.constant 0 : index
    %c0_82 = arith.constant 0 : index
    %218 = vector.load %arg5[%c0_81, %c0_82] : memref<32x224xf32, #tpu.memory_space<vmem>>, vector<32x224xf32>
    %cst_83 = arith.constant dense<0.000000e+00> : vector<1x224xf32>
    %219 = tpu.matmul %200, %218, %cst_83 {dimension_numbers = #tpu.dot_dimension_numbers<[1], [0], [0], [1], [0, 0, 1, 1], [], []>} : vector<1x32xf32>, vector<32x224xf32>, vector<1x224xf32> -> vector<1x224xf32>
    %220 = vector.extract_strided_slice %217 {offsets = [0, 0], sizes = [1, 20], strides = [1, 1]} : vector<1x160xf32> to vector<1x20xf32>
    %221 = vector.extract_strided_slice %219 {offsets = [0, 0], sizes = [1, 20], strides = [1, 1]} : vector<1x224xf32> to vector<1x20xf32>
    %222 = arith.addf %220, %221 : vector<1x20xf32>
    %cst_84 = arith.constant dense<0xFF800000> : vector<1xf32>
    %223 = vector.multi_reduction <maximumf>, %222, %cst_84 [1] : vector<1x20xf32> to vector<1xf32>
    %224 = vector.shape_cast %223 : vector<1xf32> to vector<1x1xf32>
    %225 = vector.broadcast %224 : vector<1x1xf32> to vector<1x20xf32>
    %226 = arith.subf %222, %225 : vector<1x20xf32>
    %227 = math.exp %226 : vector<1x20xf32>
    %cst_85 = arith.constant dense<0.000000e+00> : vector<1xf32>
    %228 = vector.multi_reduction <add>, %227, %cst_85 [1] : vector<1x20xf32> to vector<1xf32>
    %229 = vector.shape_cast %228 : vector<1xf32> to vector<1x1xf32>
    %230 = tpu.reciprocal %229 {approx = true} : vector<1x1xf32> -> vector<1x1xf32>
    %231 = vector.broadcast %230 : vector<1x1xf32> to vector<1x20xf32>
    %232 = arith.mulf %227, %231 : vector<1x20xf32>
    %233 = vector.extract_strided_slice %217 {offsets = [0, 128], sizes = [1, 32], strides = [1, 1]} : vector<1x160xf32> to vector<1x32xf32>
    %cst_86 = arith.constant dense<0.000000e+00> : vector<1x32xf32>
    %234 = tpu.matmul %232, %11, %cst_86 {dimension_numbers = #tpu.dot_dimension_numbers<[1], [0], [0], [1], [0, 0, 1, 1], [], []>} : vector<1x20xf32>, vector<20x32xf32>, vector<1x32xf32> -> vector<1x32xf32>
    %235 = arith.addf %233, %234 : vector<1x32xf32>
    %cst_87 = arith.constant 0.000000e+00 : f32
    %236 = vector.broadcast %cst_87 : f32 to vector<1x32xf32>
    %237 = arith.maximumf %235, %236 : vector<1x32xf32>
    %c0_88 = arith.constant 0 : index
    %c0_89 = arith.constant 0 : index
    %238 = vector.load %arg7[%c0_88, %c0_89] : memref<32x96xf32, #tpu.memory_space<vmem>>, vector<32x96xf32>
    %cst_90 = arith.constant dense<0.000000e+00> : vector<1x96xf32>
    %239 = tpu.matmul %237, %238, %cst_90 {dimension_numbers = #tpu.dot_dimension_numbers<[1], [0], [0], [1], [0, 0, 1, 1], [], []>} : vector<1x32xf32>, vector<32x96xf32>, vector<1x96xf32> -> vector<1x96xf32>
    %240 = arith.addf %239, %1 : vector<1x96xf32>
    %241 = vector.extract_strided_slice %219 {offsets = [0, 128], sizes = [1, 96], strides = [1, 1]} : vector<1x224xf32> to vector<1x96xf32>
    %242 = arith.addf %241, %2 : vector<1x96xf32>
    %243 = vector.extract_strided_slice %240 {offsets = [0, 0], sizes = [1, 32], strides = [1, 1]} : vector<1x96xf32> to vector<1x32xf32>
    %244 = vector.extract_strided_slice %242 {offsets = [0, 0], sizes = [1, 32], strides = [1, 1]} : vector<1x96xf32> to vector<1x32xf32>
    %245 = arith.addf %243, %244 : vector<1x32xf32>
    %246 = arith.negf %245 : vector<1x32xf32>
    %247 = math.exp %246 : vector<1x32xf32>
    %cst_91 = arith.constant 1.000000e+00 : f32
    %248 = vector.broadcast %cst_91 : f32 to vector<1x32xf32>
    %249 = arith.addf %248, %247 : vector<1x32xf32>
    %250 = arith.divf %248, %249 : vector<1x32xf32>
    %251 = vector.extract_strided_slice %240 {offsets = [0, 32], sizes = [1, 32], strides = [1, 1]} : vector<1x96xf32> to vector<1x32xf32>
    %252 = vector.extract_strided_slice %242 {offsets = [0, 32], sizes = [1, 32], strides = [1, 1]} : vector<1x96xf32> to vector<1x32xf32>
    %253 = arith.addf %251, %252 : vector<1x32xf32>
    %254 = arith.negf %253 : vector<1x32xf32>
    %255 = math.exp %254 : vector<1x32xf32>
    %cst_92 = arith.constant 1.000000e+00 : f32
    %256 = vector.broadcast %cst_92 : f32 to vector<1x32xf32>
    %257 = arith.addf %256, %255 : vector<1x32xf32>
    %258 = arith.divf %256, %257 : vector<1x32xf32>
    %259 = vector.extract_strided_slice %240 {offsets = [0, 64], sizes = [1, 32], strides = [1, 1]} : vector<1x96xf32> to vector<1x32xf32>
    %260 = vector.extract_strided_slice %242 {offsets = [0, 64], sizes = [1, 32], strides = [1, 1]} : vector<1x96xf32> to vector<1x32xf32>
    %261 = arith.mulf %250, %260 : vector<1x32xf32>
    %262 = arith.addf %259, %261 : vector<1x32xf32>
    %263 = math.tanh %262 : vector<1x32xf32>
    %cst_93 = arith.constant 1.000000e+00 : f32
    %264 = vector.broadcast %cst_93 : f32 to vector<1x32xf32>
    %265 = arith.subf %264, %258 : vector<1x32xf32>
    %266 = arith.mulf %265, %263 : vector<1x32xf32>
    %267 = arith.mulf %258, %200 : vector<1x32xf32>
    %268 = arith.addf %266, %267 : vector<1x32xf32>
    %c0_94 = arith.constant 0 : index
    %c0_95 = arith.constant 0 : index
    %269 = vector.load %arg8[%c0_94, %c0_95] : memref<32x64xf32, #tpu.memory_space<vmem>>, vector<32x64xf32>
    %cst_96 = arith.constant dense<0.000000e+00> : vector<1x64xf32>
    %270 = tpu.matmul %268, %269, %cst_96 {dimension_numbers = #tpu.dot_dimension_numbers<[1], [0], [0], [1], [0, 0, 1, 1], [], []>} : vector<1x32xf32>, vector<32x64xf32>, vector<1x64xf32> -> vector<1x64xf32>
    %271 = arith.addf %270, %3 : vector<1x64xf32>
    %cst_97 = arith.constant dense<0xFF800000> : vector<1xf32>
    %272 = vector.multi_reduction <maximumf>, %271, %cst_97 [1] : vector<1x64xf32> to vector<1xf32>
    %273 = vector.shape_cast %272 : vector<1xf32> to vector<1x1xf32>
    %274 = vector.broadcast %273 : vector<1x1xf32> to vector<1x64xf32>
    %275 = arith.subf %271, %274 : vector<1x64xf32>
    %276 = math.exp %275 : vector<1x64xf32>
    %cst_98 = arith.constant dense<0.000000e+00> : vector<1xf32>
    %277 = vector.multi_reduction <add>, %276, %cst_98 [1] : vector<1x64xf32> to vector<1xf32>
    %278 = vector.shape_cast %277 : vector<1xf32> to vector<1x1xf32>
    %279 = math.log %278 : vector<1x1xf32>
    %280 = arith.addf %273, %279 : vector<1x1xf32>
    %281 = vector.broadcast %280 : vector<1x1xf32> to vector<1x64xf32>
    %282 = arith.subf %271, %281 : vector<1x64xf32>
    %c3_99 = arith.constant 3 : index
    %c0_100 = arith.constant 0 : index
    %283 = vector.load %arg10[%c3_99, %c0_100] : memref<8x64xf32, #tpu.memory_space<vmem>>, vector<1x64xf32>
    tpu.vector_store %arg10[%c3_99, %c0_100], %282 {strides = array<i32>} : memref<8x64xf32, #tpu.memory_space<vmem>>, vector<1x64xf32>,
    %c3_101 = arith.constant 3 : index
    %c0_102 = arith.constant 0 : index
    %284 = vector.load %arg12[%c3_101, %c0_102] : memref<8x20xf32, #tpu.memory_space<vmem>>, vector<1x20xf32>
    tpu.vector_store %arg12[%c3_101, %c0_102], %232 {strides = array<i32>} : memref<8x20xf32, #tpu.memory_space<vmem>>, vector<1x20xf32>,
    %285 = vector.extract_strided_slice %8 {offsets = [4, 0], sizes = [1, 160], strides = [1, 1]} : vector<8x160xf32> to vector<1x160xf32>
    %c0_103 = arith.constant 0 : index
    %c0_104 = arith.constant 0 : index
    %286 = vector.load %arg5[%c0_103, %c0_104] : memref<32x224xf32, #tpu.memory_space<vmem>>, vector<32x224xf32>
    %cst_105 = arith.constant dense<0.000000e+00> : vector<1x224xf32>
    %287 = tpu.matmul %268, %286, %cst_105 {dimension_numbers = #tpu.dot_dimension_numbers<[1], [0], [0], [1], [0, 0, 1, 1], [], []>} : vector<1x32xf32>, vector<32x224xf32>, vector<1x224xf32> -> vector<1x224xf32>
    %288 = vector.extract_strided_slice %285 {offsets = [0, 0], sizes = [1, 20], strides = [1, 1]} : vector<1x160xf32> to vector<1x20xf32>
    %289 = vector.extract_strided_slice %287 {offsets = [0, 0], sizes = [1, 20], strides = [1, 1]} : vector<1x224xf32> to vector<1x20xf32>
    %290 = arith.addf %288, %289 : vector<1x20xf32>
    %cst_106 = arith.constant dense<0xFF800000> : vector<1xf32>
    %291 = vector.multi_reduction <maximumf>, %290, %cst_106 [1] : vector<1x20xf32> to vector<1xf32>
    %292 = vector.shape_cast %291 : vector<1xf32> to vector<1x1xf32>
    %293 = vector.broadcast %292 : vector<1x1xf32> to vector<1x20xf32>
    %294 = arith.subf %290, %293 : vector<1x20xf32>
    %295 = math.exp %294 : vector<1x20xf32>
    %cst_107 = arith.constant dense<0.000000e+00> : vector<1xf32>
    %296 = vector.multi_reduction <add>, %295, %cst_107 [1] : vector<1x20xf32> to vector<1xf32>
    %297 = vector.shape_cast %296 : vector<1xf32> to vector<1x1xf32>
    %298 = tpu.reciprocal %297 {approx = true} : vector<1x1xf32> -> vector<1x1xf32>
    %299 = vector.broadcast %298 : vector<1x1xf32> to vector<1x20xf32>
    %300 = arith.mulf %295, %299 : vector<1x20xf32>
    %301 = vector.extract_strided_slice %285 {offsets = [0, 128], sizes = [1, 32], strides = [1, 1]} : vector<1x160xf32> to vector<1x32xf32>
    %cst_108 = arith.constant dense<0.000000e+00> : vector<1x32xf32>
    %302 = tpu.matmul %300, %11, %cst_108 {dimension_numbers = #tpu.dot_dimension_numbers<[1], [0], [0], [1], [0, 0, 1, 1], [], []>} : vector<1x20xf32>, vector<20x32xf32>, vector<1x32xf32> -> vector<1x32xf32>
    %303 = arith.addf %301, %302 : vector<1x32xf32>
    %cst_109 = arith.constant 0.000000e+00 : f32
    %304 = vector.broadcast %cst_109 : f32 to vector<1x32xf32>
    %305 = arith.maximumf %303, %304 : vector<1x32xf32>
    %c0_110 = arith.constant 0 : index
    %c0_111 = arith.constant 0 : index
    %306 = vector.load %arg7[%c0_110, %c0_111] : memref<32x96xf32, #tpu.memory_space<vmem>>, vector<32x96xf32>
    %cst_112 = arith.constant dense<0.000000e+00> : vector<1x96xf32>
    %307 = tpu.matmul %305, %306, %cst_112 {dimension_numbers = #tpu.dot_dimension_numbers<[1], [0], [0], [1], [0, 0, 1, 1], [], []>} : vector<1x32xf32>, vector<32x96xf32>, vector<1x96xf32> -> vector<1x96xf32>
    %308 = arith.addf %307, %1 : vector<1x96xf32>
    %309 = vector.extract_strided_slice %287 {offsets = [0, 128], sizes = [1, 96], strides = [1, 1]} : vector<1x224xf32> to vector<1x96xf32>
    %310 = arith.addf %309, %2 : vector<1x96xf32>
    %311 = vector.extract_strided_slice %308 {offsets = [0, 0], sizes = [1, 32], strides = [1, 1]} : vector<1x96xf32> to vector<1x32xf32>
    %312 = vector.extract_strided_slice %310 {offsets = [0, 0], sizes = [1, 32], strides = [1, 1]} : vector<1x96xf32> to vector<1x32xf32>
    %313 = arith.addf %311, %312 : vector<1x32xf32>
    %314 = arith.negf %313 : vector<1x32xf32>
    %315 = math.exp %314 : vector<1x32xf32>
    %cst_113 = arith.constant 1.000000e+00 : f32
    %316 = vector.broadcast %cst_113 : f32 to vector<1x32xf32>
    %317 = arith.addf %316, %315 : vector<1x32xf32>
    %318 = arith.divf %316, %317 : vector<1x32xf32>
    %319 = vector.extract_strided_slice %308 {offsets = [0, 32], sizes = [1, 32], strides = [1, 1]} : vector<1x96xf32> to vector<1x32xf32>
    %320 = vector.extract_strided_slice %310 {offsets = [0, 32], sizes = [1, 32], strides = [1, 1]} : vector<1x96xf32> to vector<1x32xf32>
    %321 = arith.addf %319, %320 : vector<1x32xf32>
    %322 = arith.negf %321 : vector<1x32xf32>
    %323 = math.exp %322 : vector<1x32xf32>
    %cst_114 = arith.constant 1.000000e+00 : f32
    %324 = vector.broadcast %cst_114 : f32 to vector<1x32xf32>
    %325 = arith.addf %324, %323 : vector<1x32xf32>
    %326 = arith.divf %324, %325 : vector<1x32xf32>
    %327 = vector.extract_strided_slice %308 {offsets = [0, 64], sizes = [1, 32], strides = [1, 1]} : vector<1x96xf32> to vector<1x32xf32>
    %328 = vector.extract_strided_slice %310 {offsets = [0, 64], sizes = [1, 32], strides = [1, 1]} : vector<1x96xf32> to vector<1x32xf32>
    %329 = arith.mulf %318, %328 : vector<1x32xf32>
    %330 = arith.addf %327, %329 : vector<1x32xf32>
    %331 = math.tanh %330 : vector<1x32xf32>
    %cst_115 = arith.constant 1.000000e+00 : f32
    %332 = vector.broadcast %cst_115 : f32 to vector<1x32xf32>
    %333 = arith.subf %332, %326 : vector<1x32xf32>
    %334 = arith.mulf %333, %331 : vector<1x32xf32>
    %335 = arith.mulf %326, %268 : vector<1x32xf32>
    %336 = arith.addf %334, %335 : vector<1x32xf32>
    %c0_116 = arith.constant 0 : index
    %c0_117 = arith.constant 0 : index
    %337 = vector.load %arg8[%c0_116, %c0_117] : memref<32x64xf32, #tpu.memory_space<vmem>>, vector<32x64xf32>
    %cst_118 = arith.constant dense<0.000000e+00> : vector<1x64xf32>
    %338 = tpu.matmul %336, %337, %cst_118 {dimension_numbers = #tpu.dot_dimension_numbers<[1], [0], [0], [1], [0, 0, 1, 1], [], []>} : vector<1x32xf32>, vector<32x64xf32>, vector<1x64xf32> -> vector<1x64xf32>
    %339 = arith.addf %338, %3 : vector<1x64xf32>
    %cst_119 = arith.constant dense<0xFF800000> : vector<1xf32>
    %340 = vector.multi_reduction <maximumf>, %339, %cst_119 [1] : vector<1x64xf32> to vector<1xf32>
    %341 = vector.shape_cast %340 : vector<1xf32> to vector<1x1xf32>
    %342 = vector.broadcast %341 : vector<1x1xf32> to vector<1x64xf32>
    %343 = arith.subf %339, %342 : vector<1x64xf32>
    %344 = math.exp %343 : vector<1x64xf32>
    %cst_120 = arith.constant dense<0.000000e+00> : vector<1xf32>
    %345 = vector.multi_reduction <add>, %344, %cst_120 [1] : vector<1x64xf32> to vector<1xf32>
    %346 = vector.shape_cast %345 : vector<1xf32> to vector<1x1xf32>
    %347 = math.log %346 : vector<1x1xf32>
    %348 = arith.addf %341, %347 : vector<1x1xf32>
    %349 = vector.broadcast %348 : vector<1x1xf32> to vector<1x64xf32>
    %350 = arith.subf %339, %349 : vector<1x64xf32>
    %c4 = arith.constant 4 : index
    %c0_121 = arith.constant 0 : index
    %351 = vector.load %arg10[%c4, %c0_121] : memref<8x64xf32, #tpu.memory_space<vmem>>, vector<1x64xf32>
    tpu.vector_store %arg10[%c4, %c0_121], %350 {strides = array<i32>} : memref<8x64xf32, #tpu.memory_space<vmem>>, vector<1x64xf32>,
    %c4_122 = arith.constant 4 : index
    %c0_123 = arith.constant 0 : index
    %352 = vector.load %arg12[%c4_122, %c0_123] : memref<8x20xf32, #tpu.memory_space<vmem>>, vector<1x20xf32>
    tpu.vector_store %arg12[%c4_122, %c0_123], %300 {strides = array<i32>} : memref<8x20xf32, #tpu.memory_space<vmem>>, vector<1x20xf32>,
    %353 = vector.extract_strided_slice %8 {offsets = [5, 0], sizes = [1, 160], strides = [1, 1]} : vector<8x160xf32> to vector<1x160xf32>
    %c0_124 = arith.constant 0 : index
    %c0_125 = arith.constant 0 : index
    %354 = vector.load %arg5[%c0_124, %c0_125] : memref<32x224xf32, #tpu.memory_space<vmem>>, vector<32x224xf32>
    %cst_126 = arith.constant dense<0.000000e+00> : vector<1x224xf32>
    %355 = tpu.matmul %336, %354, %cst_126 {dimension_numbers = #tpu.dot_dimension_numbers<[1], [0], [0], [1], [0, 0, 1, 1], [], []>} : vector<1x32xf32>, vector<32x224xf32>, vector<1x224xf32> -> vector<1x224xf32>
    %356 = vector.extract_strided_slice %353 {offsets = [0, 0], sizes = [1, 20], strides = [1, 1]} : vector<1x160xf32> to vector<1x20xf32>
    %357 = vector.extract_strided_slice %355 {offsets = [0, 0], sizes = [1, 20], strides = [1, 1]} : vector<1x224xf32> to vector<1x20xf32>
    %358 = arith.addf %356, %357 : vector<1x20xf32>
    %cst_127 = arith.constant dense<0xFF800000> : vector<1xf32>
    %359 = vector.multi_reduction <maximumf>, %358, %cst_127 [1] : vector<1x20xf32> to vector<1xf32>
    %360 = vector.shape_cast %359 : vector<1xf32> to vector<1x1xf32>
    %361 = vector.broadcast %360 : vector<1x1xf32> to vector<1x20xf32>
    %362 = arith.subf %358, %361 : vector<1x20xf32>
    %363 = math.exp %362 : vector<1x20xf32>
    %cst_128 = arith.constant dense<0.000000e+00> : vector<1xf32>
    %364 = vector.multi_reduction <add>, %363, %cst_128 [1] : vector<1x20xf32> to vector<1xf32>
    %365 = vector.shape_cast %364 : vector<1xf32> to vector<1x1xf32>
    %366 = tpu.reciprocal %365 {approx = true} : vector<1x1xf32> -> vector<1x1xf32>
    %367 = vector.broadcast %366 : vector<1x1xf32> to vector<1x20xf32>
    %368 = arith.mulf %363, %367 : vector<1x20xf32>
    %369 = vector.extract_strided_slice %353 {offsets = [0, 128], sizes = [1, 32], strides = [1, 1]} : vector<1x160xf32> to vector<1x32xf32>
    %cst_129 = arith.constant dense<0.000000e+00> : vector<1x32xf32>
    %370 = tpu.matmul %368, %11, %cst_129 {dimension_numbers = #tpu.dot_dimension_numbers<[1], [0], [0], [1], [0, 0, 1, 1], [], []>} : vector<1x20xf32>, vector<20x32xf32>, vector<1x32xf32> -> vector<1x32xf32>
    %371 = arith.addf %369, %370 : vector<1x32xf32>
    %cst_130 = arith.constant 0.000000e+00 : f32
    %372 = vector.broadcast %cst_130 : f32 to vector<1x32xf32>
    %373 = arith.maximumf %371, %372 : vector<1x32xf32>
    %c0_131 = arith.constant 0 : index
    %c0_132 = arith.constant 0 : index
    %374 = vector.load %arg7[%c0_131, %c0_132] : memref<32x96xf32, #tpu.memory_space<vmem>>, vector<32x96xf32>
    %cst_133 = arith.constant dense<0.000000e+00> : vector<1x96xf32>
    %375 = tpu.matmul %373, %374, %cst_133 {dimension_numbers = #tpu.dot_dimension_numbers<[1], [0], [0], [1], [0, 0, 1, 1], [], []>} : vector<1x32xf32>, vector<32x96xf32>, vector<1x96xf32> -> vector<1x96xf32>
    %376 = arith.addf %375, %1 : vector<1x96xf32>
    %377 = vector.extract_strided_slice %355 {offsets = [0, 128], sizes = [1, 96], strides = [1, 1]} : vector<1x224xf32> to vector<1x96xf32>
    %378 = arith.addf %377, %2 : vector<1x96xf32>
    %379 = vector.extract_strided_slice %376 {offsets = [0, 0], sizes = [1, 32], strides = [1, 1]} : vector<1x96xf32> to vector<1x32xf32>
    %380 = vector.extract_strided_slice %378 {offsets = [0, 0], sizes = [1, 32], strides = [1, 1]} : vector<1x96xf32> to vector<1x32xf32>
    %381 = arith.addf %379, %380 : vector<1x32xf32>
    %382 = arith.negf %381 : vector<1x32xf32>
    %383 = math.exp %382 : vector<1x32xf32>
    %cst_134 = arith.constant 1.000000e+00 : f32
    %384 = vector.broadcast %cst_134 : f32 to vector<1x32xf32>
    %385 = arith.addf %384, %383 : vector<1x32xf32>
    %386 = arith.divf %384, %385 : vector<1x32xf32>
    %387 = vector.extract_strided_slice %376 {offsets = [0, 32], sizes = [1, 32], strides = [1, 1]} : vector<1x96xf32> to vector<1x32xf32>
    %388 = vector.extract_strided_slice %378 {offsets = [0, 32], sizes = [1, 32], strides = [1, 1]} : vector<1x96xf32> to vector<1x32xf32>
    %389 = arith.addf %387, %388 : vector<1x32xf32>
    %390 = arith.negf %389 : vector<1x32xf32>
    %391 = math.exp %390 : vector<1x32xf32>
    %cst_135 = arith.constant 1.000000e+00 : f32
    %392 = vector.broadcast %cst_135 : f32 to vector<1x32xf32>
    %393 = arith.addf %392, %391 : vector<1x32xf32>
    %394 = arith.divf %392, %393 : vector<1x32xf32>
    %395 = vector.extract_strided_slice %376 {offsets = [0, 64], sizes = [1, 32], strides = [1, 1]} : vector<1x96xf32> to vector<1x32xf32>
    %396 = vector.extract_strided_slice %378 {offsets = [0, 64], sizes = [1, 32], strides = [1, 1]} : vector<1x96xf32> to vector<1x32xf32>
    %397 = arith.mulf %386, %396 : vector<1x32xf32>
    %398 = arith.addf %395, %397 : vector<1x32xf32>
    %399 = math.tanh %398 : vector<1x32xf32>
    %cst_136 = arith.constant 1.000000e+00 : f32
    %400 = vector.broadcast %cst_136 : f32 to vector<1x32xf32>
    %401 = arith.subf %400, %394 : vector<1x32xf32>
    %402 = arith.mulf %401, %399 : vector<1x32xf32>
    %403 = arith.mulf %394, %336 : vector<1x32xf32>
    %404 = arith.addf %402, %403 : vector<1x32xf32>
    %c0_137 = arith.constant 0 : index
    %c0_138 = arith.constant 0 : index
    %405 = vector.load %arg8[%c0_137, %c0_138] : memref<32x64xf32, #tpu.memory_space<vmem>>, vector<32x64xf32>
    %cst_139 = arith.constant dense<0.000000e+00> : vector<1x64xf32>
    %406 = tpu.matmul %404, %405, %cst_139 {dimension_numbers = #tpu.dot_dimension_numbers<[1], [0], [0], [1], [0, 0, 1, 1], [], []>} : vector<1x32xf32>, vector<32x64xf32>, vector<1x64xf32> -> vector<1x64xf32>
    %407 = arith.addf %406, %3 : vector<1x64xf32>
    %cst_140 = arith.constant dense<0xFF800000> : vector<1xf32>
    %408 = vector.multi_reduction <maximumf>, %407, %cst_140 [1] : vector<1x64xf32> to vector<1xf32>
    %409 = vector.shape_cast %408 : vector<1xf32> to vector<1x1xf32>
    %410 = vector.broadcast %409 : vector<1x1xf32> to vector<1x64xf32>
    %411 = arith.subf %407, %410 : vector<1x64xf32>
    %412 = math.exp %411 : vector<1x64xf32>
    %cst_141 = arith.constant dense<0.000000e+00> : vector<1xf32>
    %413 = vector.multi_reduction <add>, %412, %cst_141 [1] : vector<1x64xf32> to vector<1xf32>
    %414 = vector.shape_cast %413 : vector<1xf32> to vector<1x1xf32>
    %415 = math.log %414 : vector<1x1xf32>
    %416 = arith.addf %409, %415 : vector<1x1xf32>
    %417 = vector.broadcast %416 : vector<1x1xf32> to vector<1x64xf32>
    %418 = arith.subf %407, %417 : vector<1x64xf32>
    %c5 = arith.constant 5 : index
    %c0_142 = arith.constant 0 : index
    %419 = vector.load %arg10[%c5, %c0_142] : memref<8x64xf32, #tpu.memory_space<vmem>>, vector<1x64xf32>
    tpu.vector_store %arg10[%c5, %c0_142], %418 {strides = array<i32>} : memref<8x64xf32, #tpu.memory_space<vmem>>, vector<1x64xf32>,
    %c5_143 = arith.constant 5 : index
    %c0_144 = arith.constant 0 : index
    %420 = vector.load %arg12[%c5_143, %c0_144] : memref<8x20xf32, #tpu.memory_space<vmem>>, vector<1x20xf32>
    tpu.vector_store %arg12[%c5_143, %c0_144], %368 {strides = array<i32>} : memref<8x20xf32, #tpu.memory_space<vmem>>, vector<1x20xf32>,
    %421 = vector.extract_strided_slice %8 {offsets = [6, 0], sizes = [1, 160], strides = [1, 1]} : vector<8x160xf32> to vector<1x160xf32>
    %c0_145 = arith.constant 0 : index
    %c0_146 = arith.constant 0 : index
    %422 = vector.load %arg5[%c0_145, %c0_146] : memref<32x224xf32, #tpu.memory_space<vmem>>, vector<32x224xf32>
    %cst_147 = arith.constant dense<0.000000e+00> : vector<1x224xf32>
    %423 = tpu.matmul %404, %422, %cst_147 {dimension_numbers = #tpu.dot_dimension_numbers<[1], [0], [0], [1], [0, 0, 1, 1], [], []>} : vector<1x32xf32>, vector<32x224xf32>, vector<1x224xf32> -> vector<1x224xf32>
    %424 = vector.extract_strided_slice %421 {offsets = [0, 0], sizes = [1, 20], strides = [1, 1]} : vector<1x160xf32> to vector<1x20xf32>
    %425 = vector.extract_strided_slice %423 {offsets = [0, 0], sizes = [1, 20], strides = [1, 1]} : vector<1x224xf32> to vector<1x20xf32>
    %426 = arith.addf %424, %425 : vector<1x20xf32>
    %cst_148 = arith.constant dense<0xFF800000> : vector<1xf32>
    %427 = vector.multi_reduction <maximumf>, %426, %cst_148 [1] : vector<1x20xf32> to vector<1xf32>
    %428 = vector.shape_cast %427 : vector<1xf32> to vector<1x1xf32>
    %429 = vector.broadcast %428 : vector<1x1xf32> to vector<1x20xf32>
    %430 = arith.subf %426, %429 : vector<1x20xf32>
    %431 = math.exp %430 : vector<1x20xf32>
    %cst_149 = arith.constant dense<0.000000e+00> : vector<1xf32>
    %432 = vector.multi_reduction <add>, %431, %cst_149 [1] : vector<1x20xf32> to vector<1xf32>
    %433 = vector.shape_cast %432 : vector<1xf32> to vector<1x1xf32>
    %434 = tpu.reciprocal %433 {approx = true} : vector<1x1xf32> -> vector<1x1xf32>
    %435 = vector.broadcast %434 : vector<1x1xf32> to vector<1x20xf32>
    %436 = arith.mulf %431, %435 : vector<1x20xf32>
    %437 = vector.extract_strided_slice %421 {offsets = [0, 128], sizes = [1, 32], strides = [1, 1]} : vector<1x160xf32> to vector<1x32xf32>
    %cst_150 = arith.constant dense<0.000000e+00> : vector<1x32xf32>
    %438 = tpu.matmul %436, %11, %cst_150 {dimension_numbers = #tpu.dot_dimension_numbers<[1], [0], [0], [1], [0, 0, 1, 1], [], []>} : vector<1x20xf32>, vector<20x32xf32>, vector<1x32xf32> -> vector<1x32xf32>
    %439 = arith.addf %437, %438 : vector<1x32xf32>
    %cst_151 = arith.constant 0.000000e+00 : f32
    %440 = vector.broadcast %cst_151 : f32 to vector<1x32xf32>
    %441 = arith.maximumf %439, %440 : vector<1x32xf32>
    %c0_152 = arith.constant 0 : index
    %c0_153 = arith.constant 0 : index
    %442 = vector.load %arg7[%c0_152, %c0_153] : memref<32x96xf32, #tpu.memory_space<vmem>>, vector<32x96xf32>
    %cst_154 = arith.constant dense<0.000000e+00> : vector<1x96xf32>
    %443 = tpu.matmul %441, %442, %cst_154 {dimension_numbers = #tpu.dot_dimension_numbers<[1], [0], [0], [1], [0, 0, 1, 1], [], []>} : vector<1x32xf32>, vector<32x96xf32>, vector<1x96xf32> -> vector<1x96xf32>
    %444 = arith.addf %443, %1 : vector<1x96xf32>
    %445 = vector.extract_strided_slice %423 {offsets = [0, 128], sizes = [1, 96], strides = [1, 1]} : vector<1x224xf32> to vector<1x96xf32>
    %446 = arith.addf %445, %2 : vector<1x96xf32>
    %447 = vector.extract_strided_slice %444 {offsets = [0, 0], sizes = [1, 32], strides = [1, 1]} : vector<1x96xf32> to vector<1x32xf32>
    %448 = vector.extract_strided_slice %446 {offsets = [0, 0], sizes = [1, 32], strides = [1, 1]} : vector<1x96xf32> to vector<1x32xf32>
    %449 = arith.addf %447, %448 : vector<1x32xf32>
    %450 = arith.negf %449 : vector<1x32xf32>
    %451 = math.exp %450 : vector<1x32xf32>
    %cst_155 = arith.constant 1.000000e+00 : f32
    %452 = vector.broadcast %cst_155 : f32 to vector<1x32xf32>
    %453 = arith.addf %452, %451 : vector<1x32xf32>
    %454 = arith.divf %452, %453 : vector<1x32xf32>
    %455 = vector.extract_strided_slice %444 {offsets = [0, 32], sizes = [1, 32], strides = [1, 1]} : vector<1x96xf32> to vector<1x32xf32>
    %456 = vector.extract_strided_slice %446 {offsets = [0, 32], sizes = [1, 32], strides = [1, 1]} : vector<1x96xf32> to vector<1x32xf32>
    %457 = arith.addf %455, %456 : vector<1x32xf32>
    %458 = arith.negf %457 : vector<1x32xf32>
    %459 = math.exp %458 : vector<1x32xf32>
    %cst_156 = arith.constant 1.000000e+00 : f32
    %460 = vector.broadcast %cst_156 : f32 to vector<1x32xf32>
    %461 = arith.addf %460, %459 : vector<1x32xf32>
    %462 = arith.divf %460, %461 : vector<1x32xf32>
    %463 = vector.extract_strided_slice %444 {offsets = [0, 64], sizes = [1, 32], strides = [1, 1]} : vector<1x96xf32> to vector<1x32xf32>
    %464 = vector.extract_strided_slice %446 {offsets = [0, 64], sizes = [1, 32], strides = [1, 1]} : vector<1x96xf32> to vector<1x32xf32>
    %465 = arith.mulf %454, %464 : vector<1x32xf32>
    %466 = arith.addf %463, %465 : vector<1x32xf32>
    %467 = math.tanh %466 : vector<1x32xf32>
    %cst_157 = arith.constant 1.000000e+00 : f32
    %468 = vector.broadcast %cst_157 : f32 to vector<1x32xf32>
    %469 = arith.subf %468, %462 : vector<1x32xf32>
    %470 = arith.mulf %469, %467 : vector<1x32xf32>
    %471 = arith.mulf %462, %404 : vector<1x32xf32>
    %472 = arith.addf %470, %471 : vector<1x32xf32>
    %c0_158 = arith.constant 0 : index
    %c0_159 = arith.constant 0 : index
    %473 = vector.load %arg8[%c0_158, %c0_159] : memref<32x64xf32, #tpu.memory_space<vmem>>, vector<32x64xf32>
    %cst_160 = arith.constant dense<0.000000e+00> : vector<1x64xf32>
    %474 = tpu.matmul %472, %473, %cst_160 {dimension_numbers = #tpu.dot_dimension_numbers<[1], [0], [0], [1], [0, 0, 1, 1], [], []>} : vector<1x32xf32>, vector<32x64xf32>, vector<1x64xf32> -> vector<1x64xf32>
    %475 = arith.addf %474, %3 : vector<1x64xf32>
    %cst_161 = arith.constant dense<0xFF800000> : vector<1xf32>
    %476 = vector.multi_reduction <maximumf>, %475, %cst_161 [1] : vector<1x64xf32> to vector<1xf32>
    %477 = vector.shape_cast %476 : vector<1xf32> to vector<1x1xf32>
    %478 = vector.broadcast %477 : vector<1x1xf32> to vector<1x64xf32>
    %479 = arith.subf %475, %478 : vector<1x64xf32>
    %480 = math.exp %479 : vector<1x64xf32>
    %cst_162 = arith.constant dense<0.000000e+00> : vector<1xf32>
    %481 = vector.multi_reduction <add>, %480, %cst_162 [1] : vector<1x64xf32> to vector<1xf32>
    %482 = vector.shape_cast %481 : vector<1xf32> to vector<1x1xf32>
    %483 = math.log %482 : vector<1x1xf32>
    %484 = arith.addf %477, %483 : vector<1x1xf32>
    %485 = vector.broadcast %484 : vector<1x1xf32> to vector<1x64xf32>
    %486 = arith.subf %475, %485 : vector<1x64xf32>
    %c6 = arith.constant 6 : index
    %c0_163 = arith.constant 0 : index
    %487 = vector.load %arg10[%c6, %c0_163] : memref<8x64xf32, #tpu.memory_space<vmem>>, vector<1x64xf32>
    tpu.vector_store %arg10[%c6, %c0_163], %486 {strides = array<i32>} : memref<8x64xf32, #tpu.memory_space<vmem>>, vector<1x64xf32>,
    %c6_164 = arith.constant 6 : index
    %c0_165 = arith.constant 0 : index
    %488 = vector.load %arg12[%c6_164, %c0_165] : memref<8x20xf32, #tpu.memory_space<vmem>>, vector<1x20xf32>
    tpu.vector_store %arg12[%c6_164, %c0_165], %436 {strides = array<i32>} : memref<8x20xf32, #tpu.memory_space<vmem>>, vector<1x20xf32>,
    %489 = vector.extract_strided_slice %8 {offsets = [7, 0], sizes = [1, 160], strides = [1, 1]} : vector<8x160xf32> to vector<1x160xf32>
    %c0_166 = arith.constant 0 : index
    %c0_167 = arith.constant 0 : index
    %490 = vector.load %arg5[%c0_166, %c0_167] : memref<32x224xf32, #tpu.memory_space<vmem>>, vector<32x224xf32>
    %cst_168 = arith.constant dense<0.000000e+00> : vector<1x224xf32>
    %491 = tpu.matmul %472, %490, %cst_168 {dimension_numbers = #tpu.dot_dimension_numbers<[1], [0], [0], [1], [0, 0, 1, 1], [], []>} : vector<1x32xf32>, vector<32x224xf32>, vector<1x224xf32> -> vector<1x224xf32>
    %492 = vector.extract_strided_slice %489 {offsets = [0, 0], sizes = [1, 20], strides = [1, 1]} : vector<1x160xf32> to vector<1x20xf32>
    %493 = vector.extract_strided_slice %491 {offsets = [0, 0], sizes = [1, 20], strides = [1, 1]} : vector<1x224xf32> to vector<1x20xf32>
    %494 = arith.addf %492, %493 : vector<1x20xf32>
    %cst_169 = arith.constant dense<0xFF800000> : vector<1xf32>
    %495 = vector.multi_reduction <maximumf>, %494, %cst_169 [1] : vector<1x20xf32> to vector<1xf32>
    %496 = vector.shape_cast %495 : vector<1xf32> to vector<1x1xf32>
    %497 = vector.broadcast %496 : vector<1x1xf32> to vector<1x20xf32>
    %498 = arith.subf %494, %497 : vector<1x20xf32>
    %499 = math.exp %498 : vector<1x20xf32>
    %cst_170 = arith.constant dense<0.000000e+00> : vector<1xf32>
    %500 = vector.multi_reduction <add>, %499, %cst_170 [1] : vector<1x20xf32> to vector<1xf32>
    %501 = vector.shape_cast %500 : vector<1xf32> to vector<1x1xf32>
    %502 = tpu.reciprocal %501 {approx = true} : vector<1x1xf32> -> vector<1x1xf32>
    %503 = vector.broadcast %502 : vector<1x1xf32> to vector<1x20xf32>
    %504 = arith.mulf %499, %503 : vector<1x20xf32>
    %505 = vector.extract_strided_slice %489 {offsets = [0, 128], sizes = [1, 32], strides = [1, 1]} : vector<1x160xf32> to vector<1x32xf32>
    %cst_171 = arith.constant dense<0.000000e+00> : vector<1x32xf32>
    %506 = tpu.matmul %504, %11, %cst_171 {dimension_numbers = #tpu.dot_dimension_numbers<[1], [0], [0], [1], [0, 0, 1, 1], [], []>} : vector<1x20xf32>, vector<20x32xf32>, vector<1x32xf32> -> vector<1x32xf32>
    %507 = arith.addf %505, %506 : vector<1x32xf32>
    %cst_172 = arith.constant 0.000000e+00 : f32
    %508 = vector.broadcast %cst_172 : f32 to vector<1x32xf32>
    %509 = arith.maximumf %507, %508 : vector<1x32xf32>
    %c0_173 = arith.constant 0 : index
    %c0_174 = arith.constant 0 : index
    %510 = vector.load %arg7[%c0_173, %c0_174] : memref<32x96xf32, #tpu.memory_space<vmem>>, vector<32x96xf32>
    %cst_175 = arith.constant dense<0.000000e+00> : vector<1x96xf32>
    %511 = tpu.matmul %509, %510, %cst_175 {dimension_numbers = #tpu.dot_dimension_numbers<[1], [0], [0], [1], [0, 0, 1, 1], [], []>} : vector<1x32xf32>, vector<32x96xf32>, vector<1x96xf32> -> vector<1x96xf32>
    %512 = arith.addf %511, %1 : vector<1x96xf32>
    %513 = vector.extract_strided_slice %491 {offsets = [0, 128], sizes = [1, 96], strides = [1, 1]} : vector<1x224xf32> to vector<1x96xf32>
    %514 = arith.addf %513, %2 : vector<1x96xf32>
    %515 = vector.extract_strided_slice %512 {offsets = [0, 0], sizes = [1, 32], strides = [1, 1]} : vector<1x96xf32> to vector<1x32xf32>
    %516 = vector.extract_strided_slice %514 {offsets = [0, 0], sizes = [1, 32], strides = [1, 1]} : vector<1x96xf32> to vector<1x32xf32>
    %517 = arith.addf %515, %516 : vector<1x32xf32>
    %518 = arith.negf %517 : vector<1x32xf32>
    %519 = math.exp %518 : vector<1x32xf32>
    %cst_176 = arith.constant 1.000000e+00 : f32
    %520 = vector.broadcast %cst_176 : f32 to vector<1x32xf32>
    %521 = arith.addf %520, %519 : vector<1x32xf32>
    %522 = arith.divf %520, %521 : vector<1x32xf32>
    %523 = vector.extract_strided_slice %512 {offsets = [0, 32], sizes = [1, 32], strides = [1, 1]} : vector<1x96xf32> to vector<1x32xf32>
    %524 = vector.extract_strided_slice %514 {offsets = [0, 32], sizes = [1, 32], strides = [1, 1]} : vector<1x96xf32> to vector<1x32xf32>
    %525 = arith.addf %523, %524 : vector<1x32xf32>
    %526 = arith.negf %525 : vector<1x32xf32>
    %527 = math.exp %526 : vector<1x32xf32>
    %cst_177 = arith.constant 1.000000e+00 : f32
    %528 = vector.broadcast %cst_177 : f32 to vector<1x32xf32>
    %529 = arith.addf %528, %527 : vector<1x32xf32>
    %530 = arith.divf %528, %529 : vector<1x32xf32>
    %531 = vector.extract_strided_slice %512 {offsets = [0, 64], sizes = [1, 32], strides = [1, 1]} : vector<1x96xf32> to vector<1x32xf32>
    %532 = vector.extract_strided_slice %514 {offsets = [0, 64], sizes = [1, 32], strides = [1, 1]} : vector<1x96xf32> to vector<1x32xf32>
    %533 = arith.mulf %522, %532 : vector<1x32xf32>
    %534 = arith.addf %531, %533 : vector<1x32xf32>
    %535 = math.tanh %534 : vector<1x32xf32>
    %cst_178 = arith.constant 1.000000e+00 : f32
    %536 = vector.broadcast %cst_178 : f32 to vector<1x32xf32>
    %537 = arith.subf %536, %530 : vector<1x32xf32>
    %538 = arith.mulf %537, %535 : vector<1x32xf32>
    %539 = arith.mulf %530, %472 : vector<1x32xf32>
    %540 = arith.addf %538, %539 : vector<1x32xf32>
    %c0_179 = arith.constant 0 : index
    %c0_180 = arith.constant 0 : index
    %541 = vector.load %arg8[%c0_179, %c0_180] : memref<32x64xf32, #tpu.memory_space<vmem>>, vector<32x64xf32>
    %cst_181 = arith.constant dense<0.000000e+00> : vector<1x64xf32>
    %542 = tpu.matmul %540, %541, %cst_181 {dimension_numbers = #tpu.dot_dimension_numbers<[1], [0], [0], [1], [0, 0, 1, 1], [], []>} : vector<1x32xf32>, vector<32x64xf32>, vector<1x64xf32> -> vector<1x64xf32>
    %543 = arith.addf %542, %3 : vector<1x64xf32>
    %cst_182 = arith.constant dense<0xFF800000> : vector<1xf32>
    %544 = vector.multi_reduction <maximumf>, %543, %cst_182 [1] : vector<1x64xf32> to vector<1xf32>
    %545 = vector.shape_cast %544 : vector<1xf32> to vector<1x1xf32>
    %546 = vector.broadcast %545 : vector<1x1xf32> to vector<1x64xf32>
    %547 = arith.subf %543, %546 : vector<1x64xf32>
    %548 = math.exp %547 : vector<1x64xf32>
    %cst_183 = arith.constant dense<0.000000e+00> : vector<1xf32>
    %549 = vector.multi_reduction <add>, %548, %cst_183 [1] : vector<1x64xf32> to vector<1xf32>
    %550 = vector.shape_cast %549 : vector<1xf32> to vector<1x1xf32>
    %551 = math.log %550 : vector<1x1xf32>
    %552 = arith.addf %545, %551 : vector<1x1xf32>
    %553 = vector.broadcast %552 : vector<1x1xf32> to vector<1x64xf32>
    %554 = arith.subf %543, %553 : vector<1x64xf32>
    %c7 = arith.constant 7 : index
    %c0_184 = arith.constant 0 : index
    %555 = vector.load %arg10[%c7, %c0_184] : memref<8x64xf32, #tpu.memory_space<vmem>>, vector<1x64xf32>
    tpu.vector_store %arg10[%c7, %c0_184], %554 {strides = array<i32>} : memref<8x64xf32, #tpu.memory_space<vmem>>, vector<1x64xf32>,
    %c7_185 = arith.constant 7 : index
    %c0_186 = arith.constant 0 : index
    %556 = vector.load %arg12[%c7_185, %c0_186] : memref<8x20xf32, #tpu.memory_space<vmem>>, vector<1x20xf32>
    tpu.vector_store %arg12[%c7_185, %c0_186], %504 {strides = array<i32>} : memref<8x20xf32, #tpu.memory_space<vmem>>, vector<1x20xf32>,
    %c0_187 = arith.constant 0 : index
    %c0_188 = arith.constant 0 : index
    %557 = vector.load %arg11[%c0_187, %c0_188] : memref<1x32xf32, #tpu.memory_space<vmem>>, vector<1x32xf32>
    tpu.vector_store %arg11[%c0_187, %c0_188], %540 {strides = array<i32>} : memref<1x32xf32, #tpu.memory_space<vmem>>, vector<1x32xf32>,
    return
  }
  func.func @transform_0(%arg0: i32) -> (i32, i32) {
    %c0_i32 = arith.constant 0 : i32
    %c0_i32_0 = arith.constant 0 : i32
    %c0_i32_1 = arith.constant 0 : i32
    return %c0_i32, %c0_i32_0 : i32, i32
  }
  func.func @transform_1(%arg0: i32) -> (i32, i32) {
    %c0_i32 = arith.constant 0 : i32
    %c0_i32_0 = arith.constant 0 : i32
    %c0_i32_1 = arith.constant 0 : i32
    return %c0_i32, %c0_i32_0 : i32, i32
  }
  func.func @transform_2(%arg0: i32) -> (i32, i32) {
    %c0_i32 = arith.constant 0 : i32
    %c0_i32_0 = arith.constant 0 : i32
    %c0_i32_1 = arith.constant 0 : i32
    return %c0_i32, %c0_i32_0 : i32, i32
  }
  func.func @transform_3(%arg0: i32) -> (i32, i32) {
    %c0_i32 = arith.constant 0 : i32
    %c0_i32_0 = arith.constant 0 : i32
    %c0_i32_1 = arith.constant 0 : i32
    return %c0_i32, %c0_i32_0 : i32, i32
  }
  func.func @transform_4(%arg0: i32) -> (i32, i32) {
    %c0_i32 = arith.constant 0 : i32
    %c0_i32_0 = arith.constant 0 : i32
    %c0_i32_1 = arith.constant 0 : i32
    return %c0_i32, %c0_i32_0 : i32, i32
  }
  func.func @transform_5(%arg0: i32) -> (i32, i32) {
    %c0_i32 = arith.constant 0 : i32
    %c0_i32_0 = arith.constant 0 : i32
    %c0_i32_1 = arith.constant 0 : i32
    return %c0_i32, %c0_i32_0 : i32, i32
  }
  func.func @transform_6(%arg0: i32) -> (i32, i32) {
    %c0_i32 = arith.constant 0 : i32
    %c0_i32_0 = arith.constant 0 : i32
    %c0_i32_1 = arith.constant 0 : i32
    return %c0_i32, %c0_i32_0 : i32, i32
  }
  func.func @transform_7(%arg0: i32) -> (i32, i32) {
    %c0_i32 = arith.constant 0 : i32
    %c0_i32_0 = arith.constant 0 : i32
    %c0_i32_1 = arith.constant 0 : i32
    return %c0_i32, %c0_i32_0 : i32, i32
  }
  func.func @transform_8(%arg0: i32) -> (i32, i32) {
    %c0_i32 = arith.constant 0 : i32
    %c0_i32_0 = arith.constant 0 : i32
    %c0_i32_1 = arith.constant 0 : i32
    return %c0_i32, %c0_i32_0 : i32, i32
  }
  func.func @transform_9(%arg0: i32) -> (i32, i32) {
    %c0_i32 = arith.constant 0 : i32
    %c0_i32_0 = arith.constant 0 : i32
    %c0_i32_1 = arith.constant 0 : i32
    return %c0_i32, %c0_i32_0 : i32, i32
  }
  func.func @transform_10(%arg0: i32) -> (i32, i32) {
    %c0_i32 = arith.constant 0 : i32
    %c0_i32_0 = arith.constant 0 : i32
    %c0_i32_1 = arith.constant 0 : i32
    return %c0_i32, %c0_i32_0 : i32, i32
  }
  func.func @transform_11(%arg0: i32) -> (i32, i32) {
    %c0_i32 = arith.constant 0 : i32
    %c0_i32_0 = arith.constant 0 : i32
    %c0_i32_1 = arith.constant 0 : i32
    return %c0_i32, %c0_i32_0 : i32, i32
  }
}

</mosaic_0001>

<llo_original>
// kernel: tpu_custom_call.1
$region0: #{tpu_custom_call.1}
  #allocation0 [shape = 'u32[]', space=smem, size = 0x4, offset = 0x4, fixed_abs, tag = 'smem constant byte address 0x4 - core index']
  #allocation1 [shape = 'u32[72,128]{1,0:T(1,128)}', space=vmem, size = 0x9000, scoped, tag = 'internal scratch']
  %s0 = inlined_call_operand.hbm [shape: f32[8,32], index: 0, kind: input, shape index: {}]
  %s1 = inlined_call_operand.hbm [shape: f32[1,32], index: 1, kind: input, shape index: {}]
  %s2 = inlined_call_operand.hbm [shape: f32[20,32], index: 2, kind: input, shape index: {}]
  %s3 = inlined_call_operand.hbm [shape: f32[32,160], index: 3, kind: input, shape index: {}]
  %s4 = inlined_call_operand.hbm [shape: f32[32,224], index: 4, kind: input, shape index: {}]
  %s5 = inlined_call_operand.hbm [shape: f32[32,32], index: 5, kind: input, shape index: {}]
  %s6 = inlined_call_operand.hbm [shape: f32[32,96], index: 6, kind: input, shape index: {}]
  %s7 = inlined_call_operand.hbm [shape: f32[32,64], index: 7, kind: input, shape index: {}]
  %s8 = inlined_call_operand.hbm [shape: f32[8,256], index: 8, kind: input, shape index: {}]
  %s9 = inlined_call_operand.hbm [shape: f32[8,64], index: 9, kind: output, shape index: {0}]
  %s10 = inlined_call_operand.hbm [shape: f32[1,32], index: 10, kind: output, shape index: {1}]
  %s11 = inlined_call_operand.hbm [shape: f32[8,20], index: 11, kind: output, shape index: {2}]
  %12 = xla_tuple %s9, %s10, %s11
  %s13 = sld [smem:[#allocation0]]
  $region98: #{tpu_custom_call.1} parent=0
    _
  %s15 = ssub.s32 1, %s13
  %s16 = scalar_select 0, %s15, %s13
  $region1: #{tpu_custom_call.1} parent=0
    #allocation2 [shape = 'u8[4096]{0}', space=vmem, size = 0x1000, scoped, tag = 'input window, operand 0, single buffered']
    #allocation3 [shape = 's32[1]{0}', space=sflag, size = 0x4, scoped, tag = 'scoped memory for tpu_custom_call.1']
    #allocation4 [shape = 's32[1]{0}', space=sflag, size = 0x4, scoped, tag = 'scoped memory for tpu_custom_call.1']
    #allocation5 [shape = 'u8[512]{0}', space=vmem, size = 0x400, scoped, tag = 'input window, operand 1, single buffered']
    #allocation6 [shape = 's32[1]{0}', space=sflag, size = 0x4, scoped, tag = 'scoped memory for tpu_custom_call.1']
    #allocation7 [shape = 'u8[12288]{0}', space=vmem, size = 0x3000, scoped, tag = 'input window, operand 2, single buffered']
    #allocation8 [shape = 'u8[32768]{0}', space=vmem, size = 0x8000, scoped, tag = 'input window, operand 3, single buffered']
    #allocation9 [shape = 's32[1]{0}', space=sflag, size = 0x4, scoped, tag = 'scoped memory for tpu_custom_call.1']
    #allocation10 [shape = 'u8[32768]{0}', space=vmem, size = 0x8000, scoped, tag = 'input window, operand 4, single buffered']
    #allocation11 [shape = 'u8[16384]{0}', space=vmem, size = 0x4000, scoped, tag = 'input window, operand 5, single buffered']
    #allocation12 [shape = 's32[1]{0}', space=sflag, size = 0x4, scoped, tag = 'scoped memory for tpu_custom_call.1']
    #allocation13 [shape = 'u8[16384]{0}', space=vmem, size = 0x4000, scoped, tag = 'input window, operand 6, single buffered']
    #allocation14 [shape = 'u8[16384]{0}', space=vmem, size = 0x4000, scoped, tag = 'input window, operand 7, single buffered']
    #allocation15 [shape = 's32[1]{0}', space=sflag, size = 0x4, scoped, tag = 'scoped memory for tpu_custom_call.1']
    #allocation16 [shape = 'u8[8192]{0}', space=vmem, size = 0x2000, scoped, tag = 'input window, operand 8, single buffered']
    #allocation17 [shape = 'u8[4096]{0}', space=vmem, size = 0x1000, scoped, tag = 'output window, operand 0, single buffered']
    #allocation18 [shape = 'u8[512]{0}', space=vmem, size = 0x400, scoped, tag = 'output window, operand 1, single buffered']
    #allocation19 [shape = 's32[1]{0}', space=sflag, size = 0x4, scoped, tag = 'scoped memory for tpu_custom_call.1']
    #allocation20 [shape = 'u8[4096]{0}', space=vmem, size = 0x1000, scoped, tag = 'output window, operand 2, single buffered']
    %17 = vsyncpa [#allocation3], 0
    %18 = vsyncpa [#allocation6], 0
    %19 = vsyncpa [#allocation9], 0
    %20 = vsyncpa [#allocation12], 0
    %21 = vsyncpa [#allocation15], 0
    %22 = vsyncpa [#allocation4], 0
    %23 = vsyncpa [#allocation19], 0
    // Predicated region
    $region2: #{tpu_custom_call.1} parent=1 // pred_check
      _
    $region3: #{tpu_custom_call.1} parent=1 // pred_check_branch
      %25 = sbr.rel (0) target = $region5
    $region4: #{tpu_custom_call.1} parent=1 // pred_region
      %27 = vsyncadd [#allocation3], 0
      %s29 = sshll.u32 %s0, 4
      %s30 = int_to_ptr.hbm [resolvable:$true] %s29
      %s31 = sshll.u32 [#allocation2], 4
      %s32 = int_to_ptr.vmem [resolvable:$true] %s31
      %34 = dma.hbm_to_vmem [thread:$0]  %s30, 128, %s32, [#allocation3]
    $region5: #{tpu_custom_call.1} parent=1 // pred_fallthru
      _
    // Predicated region
    $region6: #{tpu_custom_call.1} parent=1 // pred_check
      _
    $region7: #{tpu_custom_call.1} parent=1 // pred_check_branch
      %36 = sbr.rel (0) target = $region9
    $region8: #{tpu_custom_call.1} parent=1 // pred_region
      %38 = vsyncadd [#allocation6], 0
      %s40 = sshll.u32 %s1, 4
      %s41 = int_to_ptr.hbm [resolvable:$true] %s40
      %s42 = sshll.u32 [#allocation5], 4
      %s43 = int_to_ptr.vmem [resolvable:$true] %s42
      %45 = dma.hbm_to_vmem [thread:$0]  %s41, 16, %s43, [#allocation6]
    $region9: #{tpu_custom_call.1} parent=1 // pred_fallthru
      _
    // Predicated region
    $region10: #{tpu_custom_call.1} parent=1 // pred_check
      _
    $region11: #{tpu_custom_call.1} parent=1 // pred_check_branch
      %47 = sbr.rel (0) target = $region13
    $region12: #{tpu_custom_call.1} parent=1 // pred_region
      %49 = vsyncadd [#allocation6], 0
      %s50 = sshll.u32 %s2, 4
      %s51 = int_to_ptr.hbm [resolvable:$true] %s50
      %s52 = sshll.u32 [#allocation7], 4
      %s53 = int_to_ptr.vmem [resolvable:$true] %s52
      %58 = dma.hbm_to_vmem [thread:$0]  %s51, 384, %s53, [#allocation6], 128, 128, 8
    $region13: #{tpu_custom_call.1} parent=1 // pred_fallthru
      _
    // Predicated region
    $region14: #{tpu_custom_call.1} parent=1 // pred_check
      _
    $region15: #{tpu_custom_call.1} parent=1 // pred_check_branch
      %60 = sbr.rel (0) target = $region17
    $region16: #{tpu_custom_call.1} parent=1 // pred_region
      %62 = vsyncadd [#allocation9], 0
      %s63 = sshll.u32 %s3, 4
      %s64 = int_to_ptr.hbm [resolvable:$true] %s63
      %s65 = sshll.u32 [#allocation8], 4
      %s66 = int_to_ptr.vmem [resolvable:$true] %s65
      %71 = dma.hbm_to_vmem [thread:$0]  %s64, 1024, %s66, [#allocation9], 256, 256, 16
    $region17: #{tpu_custom_call.1} parent=1 // pred_fallthru
      _
    // Predicated region
    $region18: #{tpu_custom_call.1} parent=1 // pred_check
      _
    $region19: #{tpu_custom_call.1} parent=1 // pred_check_branch
      %73 = sbr.rel (0) target = $region21
    $region20: #{tpu_custom_call.1} parent=1 // pred_region
      %75 = vsyncadd [#allocation9], 0
      %s76 = sshll.u32 %s4, 4
      %s77 = int_to_ptr.hbm [resolvable:$true] %s76
      %s78 = sshll.u32 [#allocation10], 4
      %s79 = int_to_ptr.vmem [resolvable:$true] %s78
      %84 = dma.hbm_to_vmem [thread:$0]  %s77, 1024, %s79, [#allocation9], 256, 256, 16
    $region21: #{tpu_custom_call.1} parent=1 // pred_fallthru
      _
    // Predicated region
    $region22: #{tpu_custom_call.1} parent=1 // pred_check
      _
    $region23: #{tpu_custom_call.1} parent=1 // pred_check_branch
      %86 = sbr.rel (0) target = $region25
    $region24: #{tpu_custom_call.1} parent=1 // pred_region
      %88 = vsyncadd [#allocation12], 0
      %s89 = sshll.u32 %s5, 4
      %s90 = int_to_ptr.hbm [resolvable:$true] %s89
      %s91 = sshll.u32 [#allocation11], 4
      %s92 = int_to_ptr.vmem [resolvable:$true] %s91
      %97 = dma.hbm_to_vmem [thread:$0]  %s90, 512, %s92, [#allocation12], 128, 128, 8
    $region25: #{tpu_custom_call.1} parent=1 // pred_fallthru
      _
    // Predicated region
    $region26: #{tpu_custom_call.1} parent=1 // pred_check
      _
    $region27: #{tpu_custom_call.1} parent=1 // pred_check_branch
      %99 = sbr.rel (0) target = $region29
    $region28: #{tpu_custom_call.1} parent=1 // pred_region
      %101 = vsyncadd [#allocation12], 0
      %s102 = sshll.u32 %s6, 4
      %s103 = int_to_ptr.hbm [resolvable:$true] %s102
      %s104 = sshll.u32 [#allocation13], 4
      %s105 = int_to_ptr.vmem [resolvable:$true] %s104
      %110 = dma.hbm_to_vmem [thread:$0]  %s103, 512, %s105, [#allocation12], 128, 128, 8
    $region29: #{tpu_custom_call.1} parent=1 // pred_fallthru
      _
    // Predicated region
    $region30: #{tpu_custom_call.1} parent=1 // pred_check
      _
    $region31: #{tpu_custom_call.1} parent=1 // pred_check_branch
      %112 = sbr.rel (0) target = $region33
    $region32: #{tpu_custom_call.1} parent=1 // pred_region
      %114 = vsyncadd [#allocation15], 0
      %s115 = sshll.u32 %s7, 4
      %s116 = int_to_ptr.hbm [resolvable:$true] %s115
      %s117 = sshll.u32 [#allocation14], 4
      %s118 = int_to_ptr.vmem [resolvable:$true] %s117
      %123 = dma.hbm_to_vmem [thread:$0]  %s116, 512, %s118, [#allocation15], 128, 128, 8
    $region33: #{tpu_custom_call.1} parent=1 // pred_fallthru
      _
    // Predicated region
    $region34: #{tpu_custom_call.1} parent=1 // pred_check
      _
    $region35: #{tpu_custom_call.1} parent=1 // pred_check_branch
      %125 = sbr.rel (0) target = $region37
    $region36: #{tpu_custom_call.1} parent=1 // pred_region
      %127 = vsyncadd [#allocation15], 0
      %s129 = sshll.u32 %s8, 4
      %s130 = int_to_ptr.hbm [resolvable:$true] %s129
      %s131 = sshll.u32 [#allocation16], 4
      %s132 = int_to_ptr.vmem [resolvable:$true] %s131
      %134 = dma.hbm_to_vmem [thread:$0]  %s130, 256, %s132, [#allocation15]
    $region37: #{tpu_custom_call.1} parent=1 // pred_fallthru
      _
    // Predicated region
    $region38: #{tpu_custom_call.1} parent=1 // pred_check
      _
    $region39: #{tpu_custom_call.1} parent=1 // pred_check_branch
      %136 = sbr.rel (0) target = $region41
    $region40: #{tpu_custom_call.1} parent=1 // pred_region
      %138 = dma.done [#allocation3], 128
    $region41: #{tpu_custom_call.1} parent=1 // pred_fallthru
      _
    // Predicated region
    $region42: #{tpu_custom_call.1} parent=1 // pred_check
      _
    $region43: #{tpu_custom_call.1} parent=1 // pred_check_branch
      %140 = sbr.rel (0) target = $region45
    $region44: #{tpu_custom_call.1} parent=1 // pred_region
      %142 = dma.done [#allocation6], 16
    $region45: #{tpu_custom_call.1} parent=1 // pred_fallthru
      _
    // Predicated region
    $region46: #{tpu_custom_call.1} parent=1 // pred_check
      _
    $region47: #{tpu_custom_call.1} parent=1 // pred_check_branch
      %144 = sbr.rel (0) target = $region49
    $region48: #{tpu_custom_call.1} parent=1 // pred_region
      %146 = dma.done [#allocation6], 384
    $region49: #{tpu_custom_call.1} parent=1 // pred_fallthru
      _
    // Predicated region
    $region50: #{tpu_custom_call.1} parent=1 // pred_check
      _
    $region51: #{tpu_custom_call.1} parent=1 // pred_check_branch
      %148 = sbr.rel (0) target = $region53
    $region52: #{tpu_custom_call.1} parent=1 // pred_region
      %150 = dma.done [#allocation9], 1024
    $region53: #{tpu_custom_call.1} parent=1 // pred_fallthru
      _
    // Predicated region
    $region54: #{tpu_custom_call.1} parent=1 // pred_check
      _
    $region55: #{tpu_custom_call.1} parent=1 // pred_check_branch
      %152 = sbr.rel (0) target = $region57
    $region56: #{tpu_custom_call.1} parent=1 // pred_region
      %154 = dma.done [#allocation9], 1024
    $region57: #{tpu_custom_call.1} parent=1 // pred_fallthru
      _
    // Predicated region
    $region58: #{tpu_custom_call.1} parent=1 // pred_check
      _
    $region59: #{tpu_custom_call.1} parent=1 // pred_check_branch
      %156 = sbr.rel (0) target = $region61
    $region60: #{tpu_custom_call.1} parent=1 // pred_region
      %158 = dma.done [#allocation12], 512
    $region61: #{tpu_custom_call.1} parent=1 // pred_fallthru
      _
    // Predicated region
    $region62: #{tpu_custom_call.1} parent=1 // pred_check
      _
    $region63: #{tpu_custom_call.1} parent=1 // pred_check_branch
      %160 = sbr.rel (0) target = $region65
    $region64: #{tpu_custom_call.1} parent=1 // pred_region
      %162 = dma.done [#allocation12], 512
    $region65: #{tpu_custom_call.1} parent=1 // pred_fallthru
      _
    // Predicated region
    $region66: #{tpu_custom_call.1} parent=1 // pred_check
      _
    $region67: #{tpu_custom_call.1} parent=1 // pred_check_branch
      %164 = sbr.rel (0) target = $region69
    $region68: #{tpu_custom_call.1} parent=1 // pred_region
      %166 = dma.done [#allocation15], 512
    $region69: #{tpu_custom_call.1} parent=1 // pred_fallthru
      _
    // Predicated region
    $region70: #{tpu_custom_call.1} parent=1 // pred_check
      _
    $region71: #{tpu_custom_call.1} parent=1 // pred_check_branch
      %168 = sbr.rel (0) target = $region73
    $region72: #{tpu_custom_call.1} parent=1 // pred_region
      %170 = dma.done [#allocation15], 256
    $region73: #{tpu_custom_call.1} parent=1 // pred_fallthru
      _
    %v171 = vld [vmem:[#allocation16] ss:$8 sm:$0x3]
    %v172 = vld [vmem:[#allocation16 + $0x1] ss:$0 sm:$0xff]
    %v173 = vld [vmem:[#allocation16 + $0x2] ss:$0 sm:$0xff]
    %v174 = vld [vmem:[#allocation16 + $0x3] ss:$0 sm:$0xff]
    %v175 = vld [vmem:[#allocation2] sm:$0xff]
    %v176 = vld [vmem:[#allocation8] sm:$0xff]
    %v177 = vld [vmem:[#allocation8 + $0x8] sm:$0xff]
    %v178 = vld [vmem:[#allocation8 + $0x10] sm:$0xff]
    %v179 = vld [vmem:[#allocation8 + $0x18] sm:$0xff]
    %v180 = vld [vmem:[#allocation8 + $0x20] sm:$0xff]
    %v181 = vld [vmem:[#allocation8 + $0x28] sm:$0xff]
    %v182 = vld [vmem:[#allocation8 + $0x30] sm:$0xff]
    %v183 = vld [vmem:[#allocation8 + $0x38] sm:$0xff]
    %v185 = vperm.slane %v171, 0
    %v186 = vperm.slane %v171, 1
    %vm189 = vcmask 261120
    %v191 = vsel %vm189, %v175, 0
    %193 = vmatpush.msra.mxu0 0.0
    %194 = vmatpush.msra.mxu0 0.0
    %195 = vmatpush.msra.mxu0 0.0
    %196 = vmatpush.msra.mxu0 0.0
    %197 = vmatpush.msra.mxu0 0.0
    %198 = vmatpush.msra.mxu0 0.0
    %199 = vmatpush.msra.mxu0 0.0
    %200 = vmatpush.msra.mxu0 0.0
    %201 = vmatpush.msra.mxu0 0.0
    %202 = vmatpush.msra.mxu0 0.0
    %203 = vmatpush.msra.mxu0 0.0
    %204 = vmatpush.msra.mxu0 0.0
    %205 = vmatpush.msra.mxu0 %v182
    %206 = vmatpush.msra.mxu0 %v180
    %207 = vmatpush.msra.mxu0 %v178
    %208 = vmatpush.msra.mxu0 %v176
    %209 = vmatmul.f32.gmra.mxu0 %v191
    %v210 = vpop.f32.mrf.mxu0
    %v211 = vadd.f32 %v185, %v210
    %212 = vdwg.mxu0
    %213 = vmatpush.msra.mxu0 0.0
    %214 = vmatpush.msra.mxu0 0.0
    %215 = vmatpush.msra.mxu0 0.0
    %216 = vmatpush.msra.mxu0 0.0
    %217 = vmatpush.msra.mxu0 0.0
    %218 = vmatpush.msra.mxu0 0.0
    %219 = vmatpush.msra.mxu0 0.0
    %220 = vmatpush.msra.mxu0 0.0
    %221 = vmatpush.msra.mxu0 0.0
    %222 = vmatpush.msra.mxu0 0.0
    %223 = vmatpush.msra.mxu0 0.0
    %224 = vmatpush.msra.mxu0 0.0
    %225 = vmatpush.msra.mxu0 %v183
    %226 = vmatpush.msra.mxu0 %v181
    %227 = vmatpush.msra.mxu0 %v179
    %228 = vmatpush.msra.mxu0 %v177
    %229 = vmatmul.f32.gmra.mxu0 %v191
    %v230 = vpop.f32.mrf.mxu0
    %v231 = vadd.f32 %v186, %v230
    %232 = vdwg.mxu0
    %v233 = vld [vmem:[#allocation7] sm:$0xff]
    %v234 = vld [vmem:[#allocation7 + $0x8] sm:$0xff]
    %v235 = vld [vmem:[#allocation7 + $0x10] sm:$0xf]
    %v236 = vld [vmem:[#allocation11] sm:$0xff]
    %v237 = vld [vmem:[#allocation11 + $0x8] sm:$0xff]
    %v238 = vld [vmem:[#allocation11 + $0x10] sm:$0xff]
    %v239 = vld [vmem:[#allocation11 + $0x18] sm:$0xff]
    %v241 = vsel %vm189, %v233, 0
    %v244 = vsel %vm189, %v234, 0
    %v247 = vsel %vm189, %v235, 0
    %249 = vmatpush.msra.mxu0 0.0
    %250 = vmatpush.msra.mxu0 0.0
    %251 = vmatpush.msra.mxu0 0.0
    %252 = vmatpush.msra.mxu0 0.0
    %253 = vmatpush.msra.mxu0 0.0
    %254 = vmatpush.msra.mxu0 0.0
    %255 = vmatpush.msra.mxu0 0.0
    %256 = vmatpush.msra.mxu0 0.0
    %257 = vmatpush.msra.mxu0 0.0
    %258 = vmatpush.msra.mxu0 0.0
    %259 = vmatpush.msra.mxu0 0.0
    %260 = vmatpush.msra.mxu0 0.0
    %261 = vmatpush.msra.mxu0 %v239
    %262 = vmatpush.msra.mxu0 %v238
    %263 = vmatpush.msra.mxu0 %v237
    %264 = vmatpush.msra.mxu0 %v236
    %265 = vmatmul.f32.gmra.mxu0 %v241
    %v266 = vpop.f32.mrf.mxu0
    %v267 = vadd.f32 0.0, %v266
    %268 = vmatmul.f32.gmra.mxu0 %v244
    %v269 = vpop.f32.mrf.mxu0
    %v270 = vadd.f32 0.0, %v269
    %271 = vmatmul.f32.gmra.mxu0 %v247
    %v272 = vpop.f32.mrf.mxu0
    %v273 = vadd.f32 0.0, %v272
    %274 = vdwg.mxu0
    %v275 = vld [vmem:[#allocation5] sm:$0x1]
    %v276 = vld [vmem:[#allocation10] sm:$0xff]
    %v277 = vld [vmem:[#allocation10 + $0x8] sm:$0xff]
    %v278 = vld [vmem:[#allocation10 + $0x10] sm:$0xff]
    %v279 = vld [vmem:[#allocation10 + $0x18] sm:$0xff]
    %v280 = vld [vmem:[#allocation10 + $0x20] sm:$0xff]
    %v281 = vld [vmem:[#allocation10 + $0x28] sm:$0xff]
    %v282 = vld [vmem:[#allocation10 + $0x30] sm:$0xff]
    %v283 = vld [vmem:[#allocation10 + $0x38] sm:$0xff]
    %v285 = vsel %vm189, %v275, 0
    %287 = vmatpush.msra.mxu0 0.0
    %288 = vmatpush.msra.mxu0 0.0
    %289 = vmatpush.msra.mxu0 0.0
    %290 = vmatpush.msra.mxu0 0.0
    %291 = vmatpush.msra.mxu0 0.0
    %292 = vmatpush.msra.mxu0 0.0
    %293 = vmatpush.msra.mxu0 0.0
    %294 = vmatpush.msra.mxu0 0.0
    %295 = vmatpush.msra.mxu0 0.0
    %296 = vmatpush.msra.mxu0 0.0
    %297 = vmatpush.msra.mxu0 0.0
    %298 = vmatpush.msra.mxu0 0.0
    %299 = vmatpush.msra.mxu0 %v282
    %300 = vmatpush.msra.mxu0 %v280
    %301 = vmatpush.msra.mxu0 %v278
    %302 = vmatpush.msra.mxu0 %v276
    %303 = vmatmul.f32.gmra.mxu0 %v285
    %v304 = vpop.f32.mrf.mxu0
    %v305 = vadd.f32 0.0, %v304
    %306 = vdwg.mxu0
    %307 = vmatpush.msra.mxu0 0.0
    %308 = vmatpush.msra.mxu0 0.0
    %309 = vmatpush.msra.mxu0 0.0
    %310 = vmatpush.msra.mxu0 0.0
    %311 = vmatpush.msra.mxu0 0.0
    %312 = vmatpush.msra.mxu0 0.0
    %313 = vmatpush.msra.mxu0 0.0
    %314 = vmatpush.msra.mxu0 0.0
    %315 = vmatpush.msra.mxu0 0.0
    %316 = vmatpush.msra.mxu0 0.0
    %317 = vmatpush.msra.mxu0 0.0
    %318 = vmatpush.msra.mxu0 0.0
    %319 = vmatpush.msra.mxu0 %v283
    %320 = vmatpush.msra.mxu0 %v281
    %321 = vmatpush.msra.mxu0 %v279
    %322 = vmatpush.msra.mxu0 %v277
    %323 = vmatmul.f32.gmra.mxu0 %v285
    %v324 = vpop.f32.mrf.mxu0
    %v325 = vadd.f32 0.0, %v324
    %326 = vdwg.mxu0
    %v327 = vadd.f32 %v211, %v305
    %vm328 = vcmask 155648
    %v329 = vsel %vm328, %v327, -inf
    %330 = vmax.xlane.f32.xlu0 %v329
    %v331 = vpop.xlane.xlu0 %330
    %v332 = vsub.f32 %v327, %v331
    %v333 = vmul.f32 %v332, 1.442695
    %v334 = vpow.pop %v333
    %v335 = vsel %vm328, %v334, 0.0
    %336 = vadd.xlane.f32.xlu0 %v335
    %v337 = vpop.xlane.xlu0 %336
    %v338 = vrcp.pop %v337
    %v339 = vmul.f32 %v334, %v338
    %vm340 = vcmask 162816
    %v342 = vsel %vm340, %v339, 0
    %vm344 = vcmask 1043456
    %v346 = vsel %vm344, %v273, 0
    %348 = vmatpush.msra.mxu0 0.0
    %349 = vmatpush.msra.mxu0 0.0
    %350 = vmatpush.msra.mxu0 0.0
    %351 = vmatpush.msra.mxu0 0.0
    %352 = vmatpush.msra.mxu0 0.0
    %353 = vmatpush.msra.mxu0 0.0
    %354 = vmatpush.msra.mxu0 0.0
    %355 = vmatpush.msra.mxu0 0.0
    %356 = vmatpush.msra.mxu0 0.0
    %357 = vmatpush.msra.mxu0 0.0
    %358 = vmatpush.msra.mxu0 0.0
    %359 = vmatpush.msra.mxu0 0.0
    %360 = vmatpush.msra.mxu0 0.0
    %361 = vmatpush.msra.mxu0 %v346
    %362 = vmatpush.msra.mxu0 %v270
    %363 = vmatpush.msra.mxu0 %v267
    %364 = vmatmul.f32.gmra.mxu0 %v342
    %v365 = vpop.f32.mrf.mxu0
    %v366 = vadd.f32 0.0, %v365
    %367 = vdwg.mxu0
    %v368 = vadd.f32 %v231, %v366
    %v369 = vmax.f32 %v368, 0.0
    %v370 = vld [vmem:[#allocation13] sm:$0xff]
    %v371 = vld [vmem:[#allocation13 + $0x8] sm:$0xff]
    %v372 = vld [vmem:[#allocation13 + $0x10] sm:$0xff]
    %v373 = vld [vmem:[#allocation13 + $0x18] sm:$0xff]
    %v375 = vsel %vm189, %v369, 0
    %377 = vmatpush.msra.mxu0 0.0
    %378 = vmatpush.msra.mxu0 0.0
    %379 = vmatpush.msra.mxu0 0.0
    %380 = vmatpush.msra.mxu0 0.0
    %381 = vmatpush.msra.mxu0 0.0
    %382 = vmatpush.msra.mxu0 0.0
    %383 = vmatpush.msra.mxu0 0.0
    %384 = vmatpush.msra.mxu0 0.0
    %385 = vmatpush.msra.mxu0 0.0
    %386 = vmatpush.msra.mxu0 0.0
    %387 = vmatpush.msra.mxu0 0.0
    %388 = vmatpush.msra.mxu0 0.0
    %389 = vmatpush.msra.mxu0 %v373
    %390 = vmatpush.msra.mxu0 %v372
    %391 = vmatpush.msra.mxu0 %v371
    %392 = vmatpush.msra.mxu0 %v370
    %393 = vmatmul.f32.gmra.mxu0 %v375
    %v394 = vpop.f32.mrf.mxu0
    %v395 = vadd.f32 %v172, %v394
    %396 = vdwg.mxu0
    %v397 = vadd.f32 %v325, %v173
    %v398 = vadd.f32 %v395, %v397
    %v399 = vxor.u32 %v398, 2147483648
    %v400 = vmul.f32 %v399, 1.442695
    %v401 = vpow.pop %v400
    %v402 = vadd.f32 %v401, 1.0
    %v403 = vrcp.pop %v402
    %v404 = vmul.f32 %v402, %v403
    %v405 = vsub.f32 1.0, %v404
    %v406 = vmul.f32 %v403, %v405
    %v407 = vadd.f32 %v403, %v406
    %vm408 = vweird.f32 %v402
    %vm409 = vweird.f32 %v403
    %vm410 = vmor %vm408, %vm409
    %v411 = vsel %vm410, %v403, %v407
    %v412 = vand.u32 2147483647, %v402
    %vm413 = vcmp.eq.f32.partialorder %v412, 8.507059e+37
    %v414 = vand.u32 %v402, 2147483648
    %v415 = vor.u32 1.1754944e-38, %v414
    %v416 = vsel %vm413, %v415, %v411
    %v417 = vmul.f32 1.0, %v416
    %419 = vrot.lane.b32.xlu0 %v397, 64
    %v420 = vpop.permute.xlu0 %419
    %v422 = vmul.f32 %v417, %v420
    %424 = vrot.lane.b32.xlu0 %v422, 64
    %v425 = vpop.permute.xlu0 %424
    %v427 = vadd.f32 %v395, %v425
    %v428 = vtanh.pop %v427
    %v429 = vsub.f32 1.0, %v417
    %431 = vrot.lane.b32.xlu0 %v428, 96
    %v432 = vpop.permute.xlu0 %431
    %v434 = vmul.f32 %v429, %v432
    %v435 = vperm.slane %v275, 0
    %436 = vrot.lane.b32.xlu0 %v435, 32
    %v437 = vpop.permute.xlu0 %436
    %v439 = vmul.f32 %v417, %v437
    %v440 = vadd.f32 %v434, %v439
    %v441 = vld [vmem:[#allocation14] sm:$0xff]
    %v442 = vld [vmem:[#allocation14 + $0x8] sm:$0xff]
    %v443 = vld [vmem:[#allocation14 + $0x10] sm:$0xff]
    %v444 = vld [vmem:[#allocation14 + $0x18] sm:$0xff]
    %446 = vrot.lane.b32.xlu0 %v440, 96
    %v447 = vpop.permute.xlu0 %446
    %v448 = vsel %vm189, %v447, 0
    %450 = vmatpush.msra.mxu0 0.0
    %451 = vmatpush.msra.mxu0 0.0
    %452 = vmatpush.msra.mxu0 0.0
    %453 = vmatpush.msra.mxu0 0.0
    %454 = vmatpush.msra.mxu0 0.0
    %455 = vmatpush.msra.mxu0 0.0
    %456 = vmatpush.msra.mxu0 0.0
    %457 = vmatpush.msra.mxu0 0.0
    %458 = vmatpush.msra.mxu0 0.0
    %459 = vmatpush.msra.mxu0 0.0
    %460 = vmatpush.msra.mxu0 0.0
    %461 = vmatpush.msra.mxu0 0.0
    %462 = vmatpush.msra.mxu0 %v444
    %463 = vmatpush.msra.mxu0 %v443
    %464 = vmatpush.msra.mxu0 %v442
    %465 = vmatpush.msra.mxu0 %v441
    %466 = vmatmul.f32.gmra.mxu0 %v448
    %v467 = vpop.f32.mrf.mxu0
    %v468 = vadd.f32 %v174, %v467
    %469 = vdwg.mxu0
    %vm470 = vcmask 516096
    %v471 = vsel %vm470, %v468, -inf
    %472 = vmax.xlane.f32.xlu0 %v471
    %v473 = vpop.xlane.xlu0 %472
    %v474 = vsub.f32 %v468, %v473
    %v475 = vmul.f32 %v474, 1.442695
    %v476 = vpow.pop %v475
    %v477 = vsel %vm470, %v476, 0.0
    %478 = vadd.xlane.f32.xlu0 %v477
    %v479 = vpop.xlane.xlu0 %478
    %v480 = vlog2.pop %v479
    %v481 = vmul.f32 %v480, 0.6931472
    %v482 = vadd.f32 %v473, %v481
    %v483 = vsub.f32 %v468, %v482
    %484 = vst.msk [vmem:[#allocation17] sm:$0x1] %vm470, %v483
    %485 = vst.msk [vmem:[#allocation20] sm:$0x1] %vm328, %v339
    %v486 = vld [vmem:[#allocation10] sm:$0xff]
    %v487 = vld [vmem:[#allocation10 + $0x8] sm:$0xff]
    %v488 = vld [vmem:[#allocation10 + $0x10] sm:$0xff]
    %v489 = vld [vmem:[#allocation10 + $0x18] sm:$0xff]
    %v490 = vld [vmem:[#allocation10 + $0x20] sm:$0xff]
    %v491 = vld [vmem:[#allocation10 + $0x28] sm:$0xff]
    %v492 = vld [vmem:[#allocation10 + $0x30] sm:$0xff]
    %v493 = vld [vmem:[#allocation10 + $0x38] sm:$0xff]
    %494 = vmatpush.msra.mxu0 0.0
    %495 = vmatpush.msra.mxu0 0.0
    %496 = vmatpush.msra.mxu0 0.0
    %497 = vmatpush.msra.mxu0 0.0
    %498 = vmatpush.msra.mxu0 0.0
    %499 = vmatpush.msra.mxu0 0.0
    %500 = vmatpush.msra.mxu0 0.0
    %501 = vmatpush.msra.mxu0 0.0
    %502 = vmatpush.msra.mxu0 0.0
    %503 = vmatpush.msra.mxu0 0.0
    %504 = vmatpush.msra.mxu0 0.0
    %505 = vmatpush.msra.mxu0 0.0
    %506 = vmatpush.msra.mxu0 %v492
    %507 = vmatpush.msra.mxu0 %v490
    %508 = vmatpush.msra.mxu0 %v488
    %509 = vmatpush.msra.mxu0 %v486
    %510 = vmatmul.f32.gmra.mxu0 %v448
    %v511 = vpop.f32.mrf.mxu0
    %v512 = vadd.f32 0.0, %v511
    %513 = vdwg.mxu0
    %514 = vmatpush.msra.mxu0 0.0
    %515 = vmatpush.msra.mxu0 0.0
    %516 = vmatpush.msra.mxu0 0.0
    %517 = vmatpush.msra.mxu0 0.0
    %518 = vmatpush.msra.mxu0 0.0
    %519 = vmatpush.msra.mxu0 0.0
    %520 = vmatpush.msra.mxu0 0.0
    %521 = vmatpush.msra.mxu0 0.0
    %522 = vmatpush.msra.mxu0 0.0
    %523 = vmatpush.msra.mxu0 0.0
    %524 = vmatpush.msra.mxu0 0.0
    %525 = vmatpush.msra.mxu0 0.0
    %526 = vmatpush.msra.mxu0 %v493
    %527 = vmatpush.msra.mxu0 %v491
    %528 = vmatpush.msra.mxu0 %v489
    %529 = vmatpush.msra.mxu0 %v487
    %530 = vmatmul.f32.gmra.mxu0 %v448
    %v531 = vpop.f32.mrf.mxu0
    %v532 = vadd.f32 0.0, %v531
    %533 = vdwg.mxu0
    %v535 = vrot.slane %v512, 7
    %v537 = vadd.f32 %v211, %v535
    %vm538 = vcmask 156673
    %v539 = vsel %vm538, %v537, -inf
    %540 = vmax.xlane.f32.xlu0 %v539
    %v541 = vpop.xlane.xlu0 %540
    %v542 = vsub.f32 %v537, %v541
    %v543 = vmul.f32 %v542, 1.442695
    %v544 = vpow.pop %v543
    %v545 = vsel %vm538, %v544, 0.0
    %546 = vadd.xlane.f32.xlu0 %v545
    %v547 = vpop.xlane.xlu0 %546
    %v548 = vrcp.pop %v547
    %v549 = vmul.f32 %v544, %v548
    %v551 = vrot.slane %v549, 1
    %v552 = vsel %vm340, %v551, 0
    %554 = vmatpush.msra.mxu0 0.0
    %555 = vmatpush.msra.mxu0 0.0
    %556 = vmatpush.msra.mxu0 0.0
    %557 = vmatpush.msra.mxu0 0.0
    %558 = vmatpush.msra.mxu0 0.0
    %559 = vmatpush.msra.mxu0 0.0
    %560 = vmatpush.msra.mxu0 0.0
    %561 = vmatpush.msra.mxu0 0.0
    %562 = vmatpush.msra.mxu0 0.0
    %563 = vmatpush.msra.mxu0 0.0
    %564 = vmatpush.msra.mxu0 0.0
    %565 = vmatpush.msra.mxu0 0.0
    %566 = vmatpush.msra.mxu0 0.0
    %567 = vmatpush.msra.mxu0 %v346
    %568 = vmatpush.msra.mxu0 %v270
    %569 = vmatpush.msra.mxu0 %v267
    %570 = vmatmul.f32.gmra.mxu0 %v552
    %v571 = vpop.f32.mrf.mxu0
    %v572 = vadd.f32 0.0, %v571
    %573 = vdwg.mxu0
    %v575 = vrot.slane %v572, 7
    %v577 = vadd.f32 %v231, %v575
    %v578 = vmax.f32 %v577, 0.0
    %v579 = vld [vmem:[#allocation13] sm:$0xff]
    %v580 = vld [vmem:[#allocation13 + $0x8] sm:$0xff]
    %v581 = vld [vmem:[#allocation13 + $0x10] sm:$0xff]
    %v582 = vld [vmem:[#allocation13 + $0x18] sm:$0xff]
    %v584 = vrot.slane %v578, 1
    %v585 = vsel %vm189, %v584, 0
    %587 = vmatpush.msra.mxu0 0.0
    %588 = vmatpush.msra.mxu0 0.0
    %589 = vmatpush.msra.mxu0 0.0
    %590 = vmatpush.msra.mxu0 0.0
    %591 = vmatpush.msra.mxu0 0.0
    %592 = vmatpush.msra.mxu0 0.0
    %593 = vmatpush.msra.mxu0 0.0
    %594 = vmatpush.msra.mxu0 0.0
    %595 = vmatpush.msra.mxu0 0.0
    %596 = vmatpush.msra.mxu0 0.0
    %597 = vmatpush.msra.mxu0 0.0
    %598 = vmatpush.msra.mxu0 0.0
    %599 = vmatpush.msra.mxu0 %v582
    %600 = vmatpush.msra.mxu0 %v581
    %601 = vmatpush.msra.mxu0 %v580
    %602 = vmatpush.msra.mxu0 %v579
    %603 = vmatmul.f32.gmra.mxu0 %v585
    %v604 = vpop.f32.mrf.mxu0
    %v605 = vadd.f32 %v172, %v604
    %606 = vdwg.mxu0
    %v607 = vadd.f32 %v532, %v173
    %v608 = vadd.f32 %v605, %v607
    %v609 = vxor.u32 %v608, 2147483648
    %v610 = vmul.f32 %v609, 1.442695
    %v611 = vpow.pop %v610
    %v612 = vadd.f32 %v611, 1.0
    %v613 = vrcp.pop %v612
    %v614 = vmul.f32 %v612, %v613
    %v615 = vsub.f32 1.0, %v614
    %v616 = vmul.f32 %v613, %v615
    %v617 = vadd.f32 %v613, %v616
    %vm618 = vweird.f32 %v612
    %vm619 = vweird.f32 %v613
    %vm620 = vmor %vm618, %vm619
    %v621 = vsel %vm620, %v613, %v617
    %v622 = vand.u32 2147483647, %v612
    %vm623 = vcmp.eq.f32.partialorder %v622, 8.507059e+37
    %v624 = vand.u32 %v612, 2147483648
    %v625 = vor.u32 1.1754944e-38, %v624
    %v626 = vsel %vm623, %v625, %v621
    %v627 = vmul.f32 1.0, %v626
    %629 = vrot.lane.b32.xlu0 %v607, 64
    %v630 = vpop.permute.xlu0 %629
    %v632 = vmul.f32 %v627, %v630
    %634 = vrot.lane.b32.xlu0 %v632, 64
    %v635 = vpop.permute.xlu0 %634
    %v637 = vadd.f32 %v605, %v635
    %v638 = vtanh.pop %v637
    %v639 = vsub.f32 1.0, %v627
    %641 = vrot.lane.b32.xlu0 %v638, 96
    %v642 = vpop.permute.xlu0 %641
    %v644 = vmul.f32 %v639, %v642
    %v645 = vmul.f32 %v627, %v440
    %v646 = vadd.f32 %v644, %v645
    %v647 = vld [vmem:[#allocation14] sm:$0xff]
    %v648 = vld [vmem:[#allocation14 + $0x8] sm:$0xff]
    %v649 = vld [vmem:[#allocation14 + $0x10] sm:$0xff]
    %v650 = vld [vmem:[#allocation14 + $0x18] sm:$0xff]
    %652 = vrot.lane.b32.xlu0 %v646, 96
    %v653 = vpop.permute.xlu0 %652
    %v654 = vsel %vm189, %v653, 0
    %656 = vmatpush.msra.mxu0 0.0
    %657 = vmatpush.msra.mxu0 0.0
    %658 = vmatpush.msra.mxu0 0.0
    %659 = vmatpush.msra.mxu0 0.0
    %660 = vmatpush.msra.mxu0 0.0
    %661 = vmatpush.msra.mxu0 0.0
    %662 = vmatpush.msra.mxu0 0.0
    %663 = vmatpush.msra.mxu0 0.0
    %664 = vmatpush.msra.mxu0 0.0
    %665 = vmatpush.msra.mxu0 0.0
    %666 = vmatpush.msra.mxu0 0.0
    %667 = vmatpush.msra.mxu0 0.0
    %668 = vmatpush.msra.mxu0 %v650
    %669 = vmatpush.msra.mxu0 %v649
    %670 = vmatpush.msra.mxu0 %v648
    %671 = vmatpush.msra.mxu0 %v647
    %672 = vmatmul.f32.gmra.mxu0 %v654
    %v673 = vpop.f32.mrf.mxu0
    %v674 = vadd.f32 %v174, %v673
    %675 = vdwg.mxu0
    %v676 = vsel %vm470, %v674, -inf
    %677 = vmax.xlane.f32.xlu0 %v676
    %v678 = vpop.xlane.xlu0 %677
    %v679 = vsub.f32 %v674, %v678
    %v680 = vmul.f32 %v679, 1.442695
    %v681 = vpow.pop %v680
    %v682 = vsel %vm470, %v681, 0.0
    %683 = vadd.xlane.f32.xlu0 %v682
    %v684 = vpop.xlane.xlu0 %683
    %v685 = vlog2.pop %v684
    %v686 = vmul.f32 %v685, 0.6931472
    %v687 = vadd.f32 %v678, %v686
    %v688 = vsub.f32 %v674, %v687
    %689 = vst.msk [vmem:[#allocation17 + $0x1] sm:$0x1] %vm470, %v688
    %690 = vst.msk [vmem:[#allocation20] sm:$0x2] %vm538, %v549
    %v691 = vld [vmem:[#allocation10] sm:$0xff]
    %v692 = vld [vmem:[#allocation10 + $0x8] sm:$0xff]
    %v693 = vld [vmem:[#allocation10 + $0x10] sm:$0xff]
    %v694 = vld [vmem:[#allocation10 + $0x18] sm:$0xff]
    %v695 = vld [vmem:[#allocation10 + $0x20] sm:$0xff]
    %v696 = vld [vmem:[#allocation10 + $0x28] sm:$0xff]
    %v697 = vld [vmem:[#allocation10 + $0x30] sm:$0xff]
    %v698 = vld [vmem:[#allocation10 + $0x38] sm:$0xff]
    %699 = vmatpush.msra.mxu0 0.0
    %700 = vmatpush.msra.mxu0 0.0
    %701 = vmatpush.msra.mxu0 0.0
    %702 = vmatpush.msra.mxu0 0.0
    %703 = vmatpush.msra.mxu0 0.0
    %704 = vmatpush.msra.mxu0 0.0
    %705 = vmatpush.msra.mxu0 0.0
    %706 = vmatpush.msra.mxu0 0.0
    %707 = vmatpush.msra.mxu0 0.0
    %708 = vmatpush.msra.mxu0 0.0
    %709 = vmatpush.msra.mxu0 0.0
    %710 = vmatpush.msra.mxu0 0.0
    %711 = vmatpush.msra.mxu0 %v697
    %712 = vmatpush.msra.mxu0 %v695
    %713 = vmatpush.msra.mxu0 %v693
    %714 = vmatpush.msra.mxu0 %v691
    %715 = vmatmul.f32.gmra.mxu0 %v654
    %v716 = vpop.f32.mrf.mxu0
    %v717 = vadd.f32 0.0, %v716
    %718 = vdwg.mxu0
    %719 = vmatpush.msra.mxu0 0.0
    %720 = vmatpush.msra.mxu0 0.0
    %721 = vmatpush.msra.mxu0 0.0
    %722 = vmatpush.msra.mxu0 0.0
    %723 = vmatpush.msra.mxu0 0.0
    %724 = vmatpush.msra.mxu0 0.0
    %725 = vmatpush.msra.mxu0 0.0
    %726 = vmatpush.msra.mxu0 0.0
    %727 = vmatpush.msra.mxu0 0.0
    %728 = vmatpush.msra.mxu0 0.0
    %729 = vmatpush.msra.mxu0 0.0
    %730 = vmatpush.msra.mxu0 0.0
    %731 = vmatpush.msra.mxu0 %v698
    %732 = vmatpush.msra.mxu0 %v696
    %733 = vmatpush.msra.mxu0 %v694
    %734 = vmatpush.msra.mxu0 %v692
    %735 = vmatmul.f32.gmra.mxu0 %v654
    %v736 = vpop.f32.mrf.mxu0
    %v737 = vadd.f32 0.0, %v736
    %738 = vdwg.mxu0
    %v740 = vrot.slane %v717, 6
    %v742 = vadd.f32 %v211, %v740
    %vm743 = vcmask 157698
    %v744 = vsel %vm743, %v742, -inf
    %745 = vmax.xlane.f32.xlu0 %v744
    %v746 = vpop.xlane.xlu0 %745
    %v747 = vsub.f32 %v742, %v746
    %v748 = vmul.f32 %v747, 1.442695
    %v749 = vpow.pop %v748
    %v750 = vsel %vm743, %v749, 0.0
    %751 = vadd.xlane.f32.xlu0 %v750
    %v752 = vpop.xlane.xlu0 %751
    %v753 = vrcp.pop %v752
    %v754 = vmul.f32 %v749, %v753
    %v756 = vrot.slane %v754, 2
    %v757 = vsel %vm340, %v756, 0
    %759 = vmatpush.msra.mxu0 0.0
    %760 = vmatpush.msra.mxu0 0.0
    %761 = vmatpush.msra.mxu0 0.0
    %762 = vmatpush.msra.mxu0 0.0
    %763 = vmatpush.msra.mxu0 0.0
    %764 = vmatpush.msra.mxu0 0.0
    %765 = vmatpush.msra.mxu0 0.0
    %766 = vmatpush.msra.mxu0 0.0
    %767 = vmatpush.msra.mxu0 0.0
    %768 = vmatpush.msra.mxu0 0.0
    %769 = vmatpush.msra.mxu0 0.0
    %770 = vmatpush.msra.mxu0 0.0
    %771 = vmatpush.msra.mxu0 0.0
    %772 = vmatpush.msra.mxu0 %v346
    %773 = vmatpush.msra.mxu0 %v270
    %774 = vmatpush.msra.mxu0 %v267
    %775 = vmatmul.f32.gmra.mxu0 %v757
    %v776 = vpop.f32.mrf.mxu0
    %v777 = vadd.f32 0.0, %v776
    %778 = vdwg.mxu0
    %v780 = vrot.slane %v777, 6
    %v782 = vadd.f32 %v231, %v780
    %v783 = vmax.f32 %v782, 0.0
    %v784 = vld [vmem:[#allocation13] sm:$0xff]
    %v785 = vld [vmem:[#allocation13 + $0x8] sm:$0xff]
    %v786 = vld [vmem:[#allocation13 + $0x10] sm:$0xff]
    %v787 = vld [vmem:[#allocation13 + $0x18] sm:$0xff]
    %v789 = vrot.slane %v783, 2
    %v790 = vsel %vm189, %v789, 0
    %792 = vmatpush.msra.mxu0 0.0
    %793 = vmatpush.msra.mxu0 0.0
    %794 = vmatpush.msra.mxu0 0.0
    %795 = vmatpush.msra.mxu0 0.0
    %796 = vmatpush.msra.mxu0 0.0
    %797 = vmatpush.msra.mxu0 0.0
    %798 = vmatpush.msra.mxu0 0.0
    %799 = vmatpush.msra.mxu0 0.0
    %800 = vmatpush.msra.mxu0 0.0
    %801 = vmatpush.msra.mxu0 0.0
    %802 = vmatpush.msra.mxu0 0.0
    %803 = vmatpush.msra.mxu0 0.0
    %804 = vmatpush.msra.mxu0 %v787
    %805 = vmatpush.msra.mxu0 %v786
    %806 = vmatpush.msra.mxu0 %v785
    %807 = vmatpush.msra.mxu0 %v784
    %808 = vmatmul.f32.gmra.mxu0 %v790
    %v809 = vpop.f32.mrf.mxu0
    %v810 = vadd.f32 %v172, %v809
    %811 = vdwg.mxu0
    %v812 = vadd.f32 %v737, %v173
    %v813 = vadd.f32 %v810, %v812
    %v814 = vxor.u32 %v813, 2147483648
    %v815 = vmul.f32 %v814, 1.442695
    %v816 = vpow.pop %v815
    %v817 = vadd.f32 %v816, 1.0
    %v818 = vrcp.pop %v817
    %v819 = vmul.f32 %v817, %v818
    %v820 = vsub.f32 1.0, %v819
    %v821 = vmul.f32 %v818, %v820
    %v822 = vadd.f32 %v818, %v821
    %vm823 = vweird.f32 %v817
    %vm824 = vweird.f32 %v818
    %vm825 = vmor %vm823, %vm824
    %v826 = vsel %vm825, %v818, %v822
    %v827 = vand.u32 2147483647, %v817
    %vm828 = vcmp.eq.f32.partialorder %v827, 8.507059e+37
    %v829 = vand.u32 %v817, 2147483648
    %v830 = vor.u32 1.1754944e-38, %v829
    %v831 = vsel %vm828, %v830, %v826
    %v832 = vmul.f32 1.0, %v831
    %834 = vrot.lane.b32.xlu0 %v812, 64
    %v835 = vpop.permute.xlu0 %834
    %v837 = vmul.f32 %v832, %v835
    %839 = vrot.lane.b32.xlu0 %v837, 64
    %v840 = vpop.permute.xlu0 %839
    %v842 = vadd.f32 %v810, %v840
    %v843 = vtanh.pop %v842
    %v844 = vsub.f32 1.0, %v832
    %846 = vrot.lane.b32.xlu0 %v843, 96
    %v847 = vpop.permute.xlu0 %846
    %v849 = vmul.f32 %v844, %v847
    %v850 = vmul.f32 %v832, %v646
    %v851 = vadd.f32 %v849, %v850
    %v852 = vld [vmem:[#allocation14] sm:$0xff]
    %v853 = vld [vmem:[#allocation14 + $0x8] sm:$0xff]
    %v854 = vld [vmem:[#allocation14 + $0x10] sm:$0xff]
    %v855 = vld [vmem:[#allocation14 + $0x18] sm:$0xff]
    %857 = vrot.lane.b32.xlu0 %v851, 96
    %v858 = vpop.permute.xlu0 %857
    %v859 = vsel %vm189, %v858, 0
    %861 = vmatpush.msra.mxu0 0.0
    %862 = vmatpush.msra.mxu0 0.0
    %863 = vmatpush.msra.mxu0 0.0
    %864 = vmatpush.msra.mxu0 0.0
    %865 = vmatpush.msra.mxu0 0.0
    %866 = vmatpush.msra.mxu0 0.0
    %867 = vmatpush.msra.mxu0 0.0
    %868 = vmatpush.msra.mxu0 0.0
    %869 = vmatpush.msra.mxu0 0.0
    %870 = vmatpush.msra.mxu0 0.0
    %871 = vmatpush.msra.mxu0 0.0
    %872 = vmatpush.msra.mxu0 0.0
    %873 = vmatpush.msra.mxu0 %v855
    %874 = vmatpush.msra.mxu0 %v854
    %875 = vmatpush.msra.mxu0 %v853
    %876 = vmatpush.msra.mxu0 %v852
    %877 = vmatmul.f32.gmra.mxu0 %v859
    %v878 = vpop.f32.mrf.mxu0
    %v879 = vadd.f32 %v174, %v878
    %880 = vdwg.mxu0
    %v881 = vsel %vm470, %v879, -inf
    %882 = vmax.xlane.f32.xlu0 %v881
    %v883 = vpop.xlane.xlu0 %882
    %v884 = vsub.f32 %v879, %v883
    %v885 = vmul.f32 %v884, 1.442695
    %v886 = vpow.pop %v885
    %v887 = vsel %vm470, %v886, 0.0
    %888 = vadd.xlane.f32.xlu0 %v887
    %v889 = vpop.xlane.xlu0 %888
    %v890 = vlog2.pop %v889
    %v891 = vmul.f32 %v890, 0.6931472
    %v892 = vadd.f32 %v883, %v891
    %v893 = vsub.f32 %v879, %v892
    %894 = vst.msk [vmem:[#allocation17 + $0x2] sm:$0x1] %vm470, %v893
    %895 = vst.msk [vmem:[#allocation20] sm:$0x4] %vm743, %v754
    %v896 = vld [vmem:[#allocation10] sm:$0xff]
    %v897 = vld [vmem:[#allocation10 + $0x8] sm:$0xff]
    %v898 = vld [vmem:[#allocation10 + $0x10] sm:$0xff]
    %v899 = vld [vmem:[#allocation10 + $0x18] sm:$0xff]
    %v900 = vld [vmem:[#allocation10 + $0x20] sm:$0xff]
    %v901 = vld [vmem:[#allocation10 + $0x28] sm:$0xff]
    %v902 = vld [vmem:[#allocation10 + $0x30] sm:$0xff]
    %v903 = vld [vmem:[#allocation10 + $0x38] sm:$0xff]
    %904 = vmatpush.msra.mxu0 0.0
    %905 = vmatpush.msra.mxu0 0.0
    %906 = vmatpush.msra.mxu0 0.0
    %907 = vmatpush.msra.mxu0 0.0
    %908 = vmatpush.msra.mxu0 0.0
    %909 = vmatpush.msra.mxu0 0.0
    %910 = vmatpush.msra.mxu0 0.0
    %911 = vmatpush.msra.mxu0 0.0
    %912 = vmatpush.msra.mxu0 0.0
    %913 = vmatpush.msra.mxu0 0.0
    %914 = vmatpush.msra.mxu0 0.0
    %915 = vmatpush.msra.mxu0 0.0
    %916 = vmatpush.msra.mxu0 %v902
    %917 = vmatpush.msra.mxu0 %v900
    %918 = vmatpush.msra.mxu0 %v898
    %919 = vmatpush.msra.mxu0 %v896
    %920 = vmatmul.f32.gmra.mxu0 %v859
    %v921 = vpop.f32.mrf.mxu0
    %v922 = vadd.f32 0.0, %v921
    %923 = vdwg.mxu0
    %924 = vmatpush.msra.mxu0 0.0
    %925 = vmatpush.msra.mxu0 0.0
    %926 = vmatpush.msra.mxu0 0.0
    %927 = vmatpush.msra.mxu0 0.0
    %928 = vmatpush.msra.mxu0 0.0
    %929 = vmatpush.msra.mxu0 0.0
    %930 = vmatpush.msra.mxu0 0.0
    %931 = vmatpush.msra.mxu0 0.0
    %932 = vmatpush.msra.mxu0 0.0
    %933 = vmatpush.msra.mxu0 0.0
    %934 = vmatpush.msra.mxu0 0.0
    %935 = vmatpush.msra.mxu0 0.0
    %936 = vmatpush.msra.mxu0 %v903
    %937 = vmatpush.msra.mxu0 %v901
    %938 = vmatpush.msra.mxu0 %v899
    %939 = vmatpush.msra.mxu0 %v897
    %940 = vmatmul.f32.gmra.mxu0 %v859
    %v941 = vpop.f32.mrf.mxu0
    %v942 = vadd.f32 0.0, %v941
    %943 = vdwg.mxu0
    %v945 = vrot.slane %v922, 5
    %v947 = vadd.f32 %v211, %v945
    %vm948 = vcmask 158723
    %v949 = vsel %vm948, %v947, -inf
    %950 = vmax.xlane.f32.xlu0 %v949
    %v951 = vpop.xlane.xlu0 %950
    %v952 = vsub.f32 %v947, %v951
    %v953 = vmul.f32 %v952, 1.442695
    %v954 = vpow.pop %v953
    %v955 = vsel %vm948, %v954, 0.0
    %956 = vadd.xlane.f32.xlu0 %v955
    %v957 = vpop.xlane.xlu0 %956
    %v958 = vrcp.pop %v957
    %v959 = vmul.f32 %v954, %v958
    %v961 = vrot.slane %v959, 3
    %v962 = vsel %vm340, %v961, 0
    %964 = vmatpush.msra.mxu0 0.0
    %965 = vmatpush.msra.mxu0 0.0
    %966 = vmatpush.msra.mxu0 0.0
    %967 = vmatpush.msra.mxu0 0.0
    %968 = vmatpush.msra.mxu0 0.0
    %969 = vmatpush.msra.mxu0 0.0
    %970 = vmatpush.msra.mxu0 0.0
    %971 = vmatpush.msra.mxu0 0.0
    %972 = vmatpush.msra.mxu0 0.0
    %973 = vmatpush.msra.mxu0 0.0
    %974 = vmatpush.msra.mxu0 0.0
    %975 = vmatpush.msra.mxu0 0.0
    %976 = vmatpush.msra.mxu0 0.0
    %977 = vmatpush.msra.mxu0 %v346
    %978 = vmatpush.msra.mxu0 %v270
    %979 = vmatpush.msra.mxu0 %v267
    %980 = vmatmul.f32.gmra.mxu0 %v962
    %v981 = vpop.f32.mrf.mxu0
    %v982 = vadd.f32 0.0, %v981
    %983 = vdwg.mxu0
    %v985 = vrot.slane %v982, 5
    %v987 = vadd.f32 %v231, %v985
    %v988 = vmax.f32 %v987, 0.0
    %v989 = vld [vmem:[#allocation13] sm:$0xff]
    %v990 = vld [vmem:[#allocation13 + $0x8] sm:$0xff]
    %v991 = vld [vmem:[#allocation13 + $0x10] sm:$0xff]
    %v992 = vld [vmem:[#allocation13 + $0x18] sm:$0xff]
    %v994 = vrot.slane %v988, 3
    %v995 = vsel %vm189, %v994, 0
    %997 = vmatpush.msra.mxu0 0.0
    %998 = vmatpush.msra.mxu0 0.0
    %999 = vmatpush.msra.mxu0 0.0
    %1000 = vmatpush.msra.mxu0 0.0
    %1001 = vmatpush.msra.mxu0 0.0
    %1002 = vmatpush.msra.mxu0 0.0
    %1003 = vmatpush.msra.mxu0 0.0
    %1004 = vmatpush.msra.mxu0 0.0
    %1005 = vmatpush.msra.mxu0 0.0
    %1006 = vmatpush.msra.mxu0 0.0
    %1007 = vmatpush.msra.mxu0 0.0
    %1008 = vmatpush.msra.mxu0 0.0
    %1009 = vmatpush.msra.mxu0 %v992
    %1010 = vmatpush.msra.mxu0 %v991
    %1011 = vmatpush.msra.mxu0 %v990
    %1012 = vmatpush.msra.mxu0 %v989
    %1013 = vmatmul.f32.gmra.mxu0 %v995
    %v1014 = vpop.f32.mrf.mxu0
    %v1015 = vadd.f32 %v172, %v1014
    %1016 = vdwg.mxu0
    %v1017 = vadd.f32 %v942, %v173
    %v1018 = vadd.f32 %v1015, %v1017
    %v1019 = vxor.u32 %v1018, 2147483648
    %v1020 = vmul.f32 %v1019, 1.442695
    %v1021 = vpow.pop %v1020
    %v1022 = vadd.f32 %v1021, 1.0
    %v1023 = vrcp.pop %v1022
    %v1024 = vmul.f32 %v1022, %v1023
    %v1025 = vsub.f32 1.0, %v1024
    %v1026 = vmul.f32 %v1023, %v1025
    %v1027 = vadd.f32 %v1023, %v1026
    %vm1028 = vweird.f32 %v1022
    %vm1029 = vweird.f32 %v1023
    %vm1030 = vmor %vm1028, %vm1029
    %v1031 = vsel %vm1030, %v1023, %v1027
    %v1032 = vand.u32 2147483647, %v1022
    %vm1033 = vcmp.eq.f32.partialorder %v1032, 8.507059e+37
    %v1034 = vand.u32 %v1022, 2147483648
    %v1035 = vor.u32 1.1754944e-38, %v1034
    %v1036 = vsel %vm1033, %v1035, %v1031
    %v1037 = vmul.f32 1.0, %v1036
    %1039 = vrot.lane.b32.xlu0 %v1017, 64
    %v1040 = vpop.permute.xlu0 %1039
    %v1042 = vmul.f32 %v1037, %v1040
    %1044 = vrot.lane.b32.xlu0 %v1042, 64
    %v1045 = vpop.permute.xlu0 %1044
    %v1047 = vadd.f32 %v1015, %v1045
    %v1048 = vtanh.pop %v1047
    %v1049 = vsub.f32 1.0, %v1037
    %1051 = vrot.lane.b32.xlu0 %v1048, 96
    %v1052 = vpop.permute.xlu0 %1051
    %v1054 = vmul.f32 %v1049, %v1052
    %v1055 = vmul.f32 %v1037, %v851
    %v1056 = vadd.f32 %v1054, %v1055
    %v1057 = vld [vmem:[#allocation14] sm:$0xff]
    %v1058 = vld [vmem:[#allocation14 + $0x8] sm:$0xff]
    %v1059 = vld [vmem:[#allocation14 + $0x10] sm:$0xff]
    %v1060 = vld [vmem:[#allocation14 + $0x18] sm:$0xff]
    %1062 = vrot.lane.b32.xlu0 %v1056, 96
    %v1063 = vpop.permute.xlu0 %1062
    %v1064 = vsel %vm189, %v1063, 0
    %1066 = vmatpush.msra.mxu0 0.0
    %1067 = vmatpush.msra.mxu0 0.0
    %1068 = vmatpush.msra.mxu0 0.0
    %1069 = vmatpush.msra.mxu0 0.0
    %1070 = vmatpush.msra.mxu0 0.0
    %1071 = vmatpush.msra.mxu0 0.0
    %1072 = vmatpush.msra.mxu0 0.0
    %1073 = vmatpush.msra.mxu0 0.0
    %1074 = vmatpush.msra.mxu0 0.0
    %1075 = vmatpush.msra.mxu0 0.0
    %1076 = vmatpush.msra.mxu0 0.0
    %1077 = vmatpush.msra.mxu0 0.0
    %1078 = vmatpush.msra.mxu0 %v1060
    %1079 = vmatpush.msra.mxu0 %v1059
    %1080 = vmatpush.msra.mxu0 %v1058
    %1081 = vmatpush.msra.mxu0 %v1057
    %1082 = vmatmul.f32.gmra.mxu0 %v1064
    %v1083 = vpop.f32.mrf.mxu0
    %v1084 = vadd.f32 %v174, %v1083
    %1085 = vdwg.mxu0
    %v1086 = vsel %vm470, %v1084, -inf
    %1087 = vmax.xlane.f32.xlu0 %v1086
    %v1088 = vpop.xlane.xlu0 %1087
    %v1089 = vsub.f32 %v1084, %v1088
    %v1090 = vmul.f32 %v1089, 1.442695
    %v1091 = vpow.pop %v1090
    %v1092 = vsel %vm470, %v1091, 0.0
    %1093 = vadd.xlane.f32.xlu0 %v1092
    %v1094 = vpop.xlane.xlu0 %1093
    %v1095 = vlog2.pop %v1094
    %v1096 = vmul.f32 %v1095, 0.6931472
    %v1097 = vadd.f32 %v1088, %v1096
    %v1098 = vsub.f32 %v1084, %v1097
    %1099 = vst.msk [vmem:[#allocation17 + $0x3] sm:$0x1] %vm470, %v1098
    %1100 = vst.msk [vmem:[#allocation20] sm:$0x8] %vm948, %v959
    %v1101 = vld [vmem:[#allocation10] sm:$0xff]
    %v1102 = vld [vmem:[#allocation10 + $0x8] sm:$0xff]
    %v1103 = vld [vmem:[#allocation10 + $0x10] sm:$0xff]
    %v1104 = vld [vmem:[#allocation10 + $0x18] sm:$0xff]
    %v1105 = vld [vmem:[#allocation10 + $0x20] sm:$0xff]
    %v1106 = vld [vmem:[#allocation10 + $0x28] sm:$0xff]
    %v1107 = vld [vmem:[#allocation10 + $0x30] sm:$0xff]
    %v1108 = vld [vmem:[#allocation10 + $0x38] sm:$0xff]
    %1109 = vmatpush.msra.mxu0 0.0
    %1110 = vmatpush.msra.mxu0 0.0
    %1111 = vmatpush.msra.mxu0 0.0
    %1112 = vmatpush.msra.mxu0 0.0
    %1113 = vmatpush.msra.mxu0 0.0
    %1114 = vmatpush.msra.mxu0 0.0
    %1115 = vmatpush.msra.mxu0 0.0
    %1116 = vmatpush.msra.mxu0 0.0
    %1117 = vmatpush.msra.mxu0 0.0
    %1118 = vmatpush.msra.mxu0 0.0
    %1119 = vmatpush.msra.mxu0 0.0
    %1120 = vmatpush.msra.mxu0 0.0
    %1121 = vmatpush.msra.mxu0 %v1107
    %1122 = vmatpush.msra.mxu0 %v1105
    %1123 = vmatpush.msra.mxu0 %v1103
    %1124 = vmatpush.msra.mxu0 %v1101
    %1125 = vmatmul.f32.gmra.mxu0 %v1064
    %v1126 = vpop.f32.mrf.mxu0
    %v1127 = vadd.f32 0.0, %v1126
    %1128 = vdwg.mxu0
    %1129 = vmatpush.msra.mxu0 0.0
    %1130 = vmatpush.msra.mxu0 0.0
    %1131 = vmatpush.msra.mxu0 0.0
    %1132 = vmatpush.msra.mxu0 0.0
    %1133 = vmatpush.msra.mxu0 0.0
    %1134 = vmatpush.msra.mxu0 0.0
    %1135 = vmatpush.msra.mxu0 0.0
    %1136 = vmatpush.msra.mxu0 0.0
    %1137 = vmatpush.msra.mxu0 0.0
    %1138 = vmatpush.msra.mxu0 0.0
    %1139 = vmatpush.msra.mxu0 0.0
    %1140 = vmatpush.msra.mxu0 0.0
    %1141 = vmatpush.msra.mxu0 %v1108
    %1142 = vmatpush.msra.mxu0 %v1106
    %1143 = vmatpush.msra.mxu0 %v1104
    %1144 = vmatpush.msra.mxu0 %v1102
    %1145 = vmatmul.f32.gmra.mxu0 %v1064
    %v1146 = vpop.f32.mrf.mxu0
    %v1147 = vadd.f32 0.0, %v1146
    %1148 = vdwg.mxu0
    %v1150 = vrot.slane %v1127, 4
    %v1152 = vadd.f32 %v211, %v1150
    %vm1153 = vcmask 159748
    %v1154 = vsel %vm1153, %v1152, -inf
    %1155 = vmax.xlane.f32.xlu0 %v1154
    %v1156 = vpop.xlane.xlu0 %1155
    %v1157 = vsub.f32 %v1152, %v1156
    %v1158 = vmul.f32 %v1157, 1.442695
    %v1159 = vpow.pop %v1158
    %v1160 = vsel %vm1153, %v1159, 0.0
    %1161 = vadd.xlane.f32.xlu0 %v1160
    %v1162 = vpop.xlane.xlu0 %1161
    %v1163 = vrcp.pop %v1162
    %v1164 = vmul.f32 %v1159, %v1163
    %v1166 = vrot.slane %v1164, 4
    %v1167 = vsel %vm340, %v1166, 0
    %1169 = vmatpush.msra.mxu0 0.0
    %1170 = vmatpush.msra.mxu0 0.0
    %1171 = vmatpush.msra.mxu0 0.0
    %1172 = vmatpush.msra.mxu0 0.0
    %1173 = vmatpush.msra.mxu0 0.0
    %1174 = vmatpush.msra.mxu0 0.0
    %1175 = vmatpush.msra.mxu0 0.0
    %1176 = vmatpush.msra.mxu0 0.0
    %1177 = vmatpush.msra.mxu0 0.0
    %1178 = vmatpush.msra.mxu0 0.0
    %1179 = vmatpush.msra.mxu0 0.0
    %1180 = vmatpush.msra.mxu0 0.0
    %1181 = vmatpush.msra.mxu0 0.0
    %1182 = vmatpush.msra.mxu0 %v346
    %1183 = vmatpush.msra.mxu0 %v270
    %1184 = vmatpush.msra.mxu0 %v267
    %1185 = vmatmul.f32.gmra.mxu0 %v1167
    %v1186 = vpop.f32.mrf.mxu0
    %v1187 = vadd.f32 0.0, %v1186
    %1188 = vdwg.mxu0
    %v1190 = vrot.slane %v1187, 4
    %v1192 = vadd.f32 %v231, %v1190
    %v1193 = vmax.f32 %v1192, 0.0
    %v1194 = vld [vmem:[#allocation13] sm:$0xff]
    %v1195 = vld [vmem:[#allocation13 + $0x8] sm:$0xff]
    %v1196 = vld [vmem:[#allocation13 + $0x10] sm:$0xff]
    %v1197 = vld [vmem:[#allocation13 + $0x18] sm:$0xff]
    %v1199 = vrot.slane %v1193, 4
    %v1200 = vsel %vm189, %v1199, 0
    %1202 = vmatpush.msra.mxu0 0.0
    %1203 = vmatpush.msra.mxu0 0.0
    %1204 = vmatpush.msra.mxu0 0.0
    %1205 = vmatpush.msra.mxu0 0.0
    %1206 = vmatpush.msra.mxu0 0.0
    %1207 = vmatpush.msra.mxu0 0.0
    %1208 = vmatpush.msra.mxu0 0.0
    %1209 = vmatpush.msra.mxu0 0.0
    %1210 = vmatpush.msra.mxu0 0.0
    %1211 = vmatpush.msra.mxu0 0.0
    %1212 = vmatpush.msra.mxu0 0.0
    %1213 = vmatpush.msra.mxu0 0.0
    %1214 = vmatpush.msra.mxu0 %v1197
    %1215 = vmatpush.msra.mxu0 %v1196
    %1216 = vmatpush.msra.mxu0 %v1195
    %1217 = vmatpush.msra.mxu0 %v1194
    %1218 = vmatmul.f32.gmra.mxu0 %v1200
    %v1219 = vpop.f32.mrf.mxu0
    %v1220 = vadd.f32 %v172, %v1219
    %1221 = vdwg.mxu0
    %v1222 = vadd.f32 %v1147, %v173
    %v1223 = vadd.f32 %v1220, %v1222
    %v1224 = vxor.u32 %v1223, 2147483648
    %v1225 = vmul.f32 %v1224, 1.442695
    %v1226 = vpow.pop %v1225
    %v1227 = vadd.f32 %v1226, 1.0
    %v1228 = vrcp.pop %v1227
    %v1229 = vmul.f32 %v1227, %v1228
    %v1230 = vsub.f32 1.0, %v1229
    %v1231 = vmul.f32 %v1228, %v1230
    %v1232 = vadd.f32 %v1228, %v1231
    %vm1233 = vweird.f32 %v1227
    %vm1234 = vweird.f32 %v1228
    %vm1235 = vmor %vm1233, %vm1234
    %v1236 = vsel %vm1235, %v1228, %v1232
    %v1237 = vand.u32 2147483647, %v1227
    %vm1238 = vcmp.eq.f32.partialorder %v1237, 8.507059e+37
    %v1239 = vand.u32 %v1227, 2147483648
    %v1240 = vor.u32 1.1754944e-38, %v1239
    %v1241 = vsel %vm1238, %v1240, %v1236
    %v1242 = vmul.f32 1.0, %v1241
    %1244 = vrot.lane.b32.xlu0 %v1222, 64
    %v1245 = vpop.permute.xlu0 %1244
    %v1247 = vmul.f32 %v1242, %v1245
    %1249 = vrot.lane.b32.xlu0 %v1247, 64
    %v1250 = vpop.permute.xlu0 %1249
    %v1252 = vadd.f32 %v1220, %v1250
    %v1253 = vtanh.pop %v1252
    %v1254 = vsub.f32 1.0, %v1242
    %1256 = vrot.lane.b32.xlu0 %v1253, 96
    %v1257 = vpop.permute.xlu0 %1256
    %v1259 = vmul.f32 %v1254, %v1257
    %v1260 = vmul.f32 %v1242, %v1056
    %v1261 = vadd.f32 %v1259, %v1260
    %v1262 = vld [vmem:[#allocation14] sm:$0xff]
    %v1263 = vld [vmem:[#allocation14 + $0x8] sm:$0xff]
    %v1264 = vld [vmem:[#allocation14 + $0x10] sm:$0xff]
    %v1265 = vld [vmem:[#allocation14 + $0x18] sm:$0xff]
    %1267 = vrot.lane.b32.xlu0 %v1261, 96
    %v1268 = vpop.permute.xlu0 %1267
    %v1269 = vsel %vm189, %v1268, 0
    %1271 = vmatpush.msra.mxu0 0.0
    %1272 = vmatpush.msra.mxu0 0.0
    %1273 = vmatpush.msra.mxu0 0.0
    %1274 = vmatpush.msra.mxu0 0.0
    %1275 = vmatpush.msra.mxu0 0.0
    %1276 = vmatpush.msra.mxu0 0.0
    %1277 = vmatpush.msra.mxu0 0.0
    %1278 = vmatpush.msra.mxu0 0.0
    %1279 = vmatpush.msra.mxu0 0.0
    %1280 = vmatpush.msra.mxu0 0.0
    %1281 = vmatpush.msra.mxu0 0.0
    %1282 = vmatpush.msra.mxu0 0.0
    %1283 = vmatpush.msra.mxu0 %v1265
    %1284 = vmatpush.msra.mxu0 %v1264
    %1285 = vmatpush.msra.mxu0 %v1263
    %1286 = vmatpush.msra.mxu0 %v1262
    %1287 = vmatmul.f32.gmra.mxu0 %v1269
    %v1288 = vpop.f32.mrf.mxu0
    %v1289 = vadd.f32 %v174, %v1288
    %1290 = vdwg.mxu0
    %v1291 = vsel %vm470, %v1289, -inf
    %1292 = vmax.xlane.f32.xlu0 %v1291
    %v1293 = vpop.xlane.xlu0 %1292
    %v1294 = vsub.f32 %v1289, %v1293
    %v1295 = vmul.f32 %v1294, 1.442695
    %v1296 = vpow.pop %v1295
    %v1297 = vsel %vm470, %v1296, 0.0
    %1298 = vadd.xlane.f32.xlu0 %v1297
    %v1299 = vpop.xlane.xlu0 %1298
    %v1300 = vlog2.pop %v1299
    %v1301 = vmul.f32 %v1300, 0.6931472
    %v1302 = vadd.f32 %v1293, %v1301
    %v1303 = vsub.f32 %v1289, %v1302
    %1304 = vst.msk [vmem:[#allocation17 + $0x4] sm:$0x1] %vm470, %v1303
    %1305 = vst.msk [vmem:[#allocation20] sm:$0x10] %vm1153, %v1164
    %v1306 = vld [vmem:[#allocation10] sm:$0xff]
    %v1307 = vld [vmem:[#allocation10 + $0x8] sm:$0xff]
    %v1308 = vld [vmem:[#allocation10 + $0x10] sm:$0xff]
    %v1309 = vld [vmem:[#allocation10 + $0x18] sm:$0xff]
    %v1310 = vld [vmem:[#allocation10 + $0x20] sm:$0xff]
    %v1311 = vld [vmem:[#allocation10 + $0x28] sm:$0xff]
    %v1312 = vld [vmem:[#allocation10 + $0x30] sm:$0xff]
    %v1313 = vld [vmem:[#allocation10 + $0x38] sm:$0xff]
    %1314 = vmatpush.msra.mxu0 0.0
    %1315 = vmatpush.msra.mxu0 0.0
    %1316 = vmatpush.msra.mxu0 0.0
    %1317 = vmatpush.msra.mxu0 0.0
    %1318 = vmatpush.msra.mxu0 0.0
    %1319 = vmatpush.msra.mxu0 0.0
    %1320 = vmatpush.msra.mxu0 0.0
    %1321 = vmatpush.msra.mxu0 0.0
    %1322 = vmatpush.msra.mxu0 0.0
    %1323 = vmatpush.msra.mxu0 0.0
    %1324 = vmatpush.msra.mxu0 0.0
    %1325 = vmatpush.msra.mxu0 0.0
    %1326 = vmatpush.msra.mxu0 %v1312
    %1327 = vmatpush.msra.mxu0 %v1310
    %1328 = vmatpush.msra.mxu0 %v1308
    %1329 = vmatpush.msra.mxu0 %v1306
    %1330 = vmatmul.f32.gmra.mxu0 %v1269
    %v1331 = vpop.f32.mrf.mxu0
    %v1332 = vadd.f32 0.0, %v1331
    %1333 = vdwg.mxu0
    %1334 = vmatpush.msra.mxu0 0.0
    %1335 = vmatpush.msra.mxu0 0.0
    %1336 = vmatpush.msra.mxu0 0.0
    %1337 = vmatpush.msra.mxu0 0.0
    %1338 = vmatpush.msra.mxu0 0.0
    %1339 = vmatpush.msra.mxu0 0.0
    %1340 = vmatpush.msra.mxu0 0.0
    %1341 = vmatpush.msra.mxu0 0.0
    %1342 = vmatpush.msra.mxu0 0.0
    %1343 = vmatpush.msra.mxu0 0.0
    %1344 = vmatpush.msra.mxu0 0.0
    %1345 = vmatpush.msra.mxu0 0.0
    %1346 = vmatpush.msra.mxu0 %v1313
    %1347 = vmatpush.msra.mxu0 %v1311
    %1348 = vmatpush.msra.mxu0 %v1309
    %1349 = vmatpush.msra.mxu0 %v1307
    %1350 = vmatmul.f32.gmra.mxu0 %v1269
    %v1351 = vpop.f32.mrf.mxu0
    %v1352 = vadd.f32 0.0, %v1351
    %1353 = vdwg.mxu0
    %v1355 = vrot.slane %v1332, 3
    %v1357 = vadd.f32 %v211, %v1355
    %vm1358 = vcmask 160773
    %v1359 = vsel %vm1358, %v1357, -inf
    %1360 = vmax.xlane.f32.xlu0 %v1359
    %v1361 = vpop.xlane.xlu0 %1360
    %v1362 = vsub.f32 %v1357, %v1361
    %v1363 = vmul.f32 %v1362, 1.442695
    %v1364 = vpow.pop %v1363
    %v1365 = vsel %vm1358, %v1364, 0.0
    %1366 = vadd.xlane.f32.xlu0 %v1365
    %v1367 = vpop.xlane.xlu0 %1366
    %v1368 = vrcp.pop %v1367
    %v1369 = vmul.f32 %v1364, %v1368
    %v1371 = vrot.slane %v1369, 5
    %v1372 = vsel %vm340, %v1371, 0
    %1374 = vmatpush.msra.mxu0 0.0
    %1375 = vmatpush.msra.mxu0 0.0
    %1376 = vmatpush.msra.mxu0 0.0
    %1377 = vmatpush.msra.mxu0 0.0
    %1378 = vmatpush.msra.mxu0 0.0
    %1379 = vmatpush.msra.mxu0 0.0
    %1380 = vmatpush.msra.mxu0 0.0
    %1381 = vmatpush.msra.mxu0 0.0
    %1382 = vmatpush.msra.mxu0 0.0
    %1383 = vmatpush.msra.mxu0 0.0
    %1384 = vmatpush.msra.mxu0 0.0
    %1385 = vmatpush.msra.mxu0 0.0
    %1386 = vmatpush.msra.mxu0 0.0
    %1387 = vmatpush.msra.mxu0 %v346
    %1388 = vmatpush.msra.mxu0 %v270
    %1389 = vmatpush.msra.mxu0 %v267
    %1390 = vmatmul.f32.gmra.mxu0 %v1372
    %v1391 = vpop.f32.mrf.mxu0
    %v1392 = vadd.f32 0.0, %v1391
    %1393 = vdwg.mxu0
    %v1395 = vrot.slane %v1392, 3
    %v1397 = vadd.f32 %v231, %v1395
    %v1398 = vmax.f32 %v1397, 0.0
    %v1399 = vld [vmem:[#allocation13] sm:$0xff]
    %v1400 = vld [vmem:[#allocation13 + $0x8] sm:$0xff]
    %v1401 = vld [vmem:[#allocation13 + $0x10] sm:$0xff]
    %v1402 = vld [vmem:[#allocation13 + $0x18] sm:$0xff]
    %v1404 = vrot.slane %v1398, 5
    %v1405 = vsel %vm189, %v1404, 0
    %1407 = vmatpush.msra.mxu0 0.0
    %1408 = vmatpush.msra.mxu0 0.0
    %1409 = vmatpush.msra.mxu0 0.0
    %1410 = vmatpush.msra.mxu0 0.0
    %1411 = vmatpush.msra.mxu0 0.0
    %1412 = vmatpush.msra.mxu0 0.0
    %1413 = vmatpush.msra.mxu0 0.0
    %1414 = vmatpush.msra.mxu0 0.0
    %1415 = vmatpush.msra.mxu0 0.0
    %1416 = vmatpush.msra.mxu0 0.0
    %1417 = vmatpush.msra.mxu0 0.0
    %1418 = vmatpush.msra.mxu0 0.0
    %1419 = vmatpush.msra.mxu0 %v1402
    %1420 = vmatpush.msra.mxu0 %v1401
    %1421 = vmatpush.msra.mxu0 %v1400
    %1422 = vmatpush.msra.mxu0 %v1399
    %1423 = vmatmul.f32.gmra.mxu0 %v1405
    %v1424 = vpop.f32.mrf.mxu0
    %v1425 = vadd.f32 %v172, %v1424
    %1426 = vdwg.mxu0
    %v1427 = vadd.f32 %v1352, %v173
    %v1428 = vadd.f32 %v1425, %v1427
    %v1429 = vxor.u32 %v1428, 2147483648
    %v1430 = vmul.f32 %v1429, 1.442695
    %v1431 = vpow.pop %v1430
    %v1432 = vadd.f32 %v1431, 1.0
    %v1433 = vrcp.pop %v1432
    %v1434 = vmul.f32 %v1432, %v1433
    %v1435 = vsub.f32 1.0, %v1434
    %v1436 = vmul.f32 %v1433, %v1435
    %v1437 = vadd.f32 %v1433, %v1436
    %vm1438 = vweird.f32 %v1432
    %vm1439 = vweird.f32 %v1433
    %vm1440 = vmor %vm1438, %vm1439
    %v1441 = vsel %vm1440, %v1433, %v1437
    %v1442 = vand.u32 2147483647, %v1432
    %vm1443 = vcmp.eq.f32.partialorder %v1442, 8.507059e+37
    %v1444 = vand.u32 %v1432, 2147483648
    %v1445 = vor.u32 1.1754944e-38, %v1444
    %v1446 = vsel %vm1443, %v1445, %v1441
    %v1447 = vmul.f32 1.0, %v1446
    %1449 = vrot.lane.b32.xlu0 %v1427, 64
    %v1450 = vpop.permute.xlu0 %1449
    %v1452 = vmul.f32 %v1447, %v1450
    %1454 = vrot.lane.b32.xlu0 %v1452, 64
    %v1455 = vpop.permute.xlu0 %1454
    %v1457 = vadd.f32 %v1425, %v1455
    %v1458 = vtanh.pop %v1457
    %v1459 = vsub.f32 1.0, %v1447
    %1461 = vrot.lane.b32.xlu0 %v1458, 96
    %v1462 = vpop.permute.xlu0 %1461
    %v1464 = vmul.f32 %v1459, %v1462
    %v1465 = vmul.f32 %v1447, %v1261
    %v1466 = vadd.f32 %v1464, %v1465
    %v1467 = vld [vmem:[#allocation14] sm:$0xff]
    %v1468 = vld [vmem:[#allocation14 + $0x8] sm:$0xff]
    %v1469 = vld [vmem:[#allocation14 + $0x10] sm:$0xff]
    %v1470 = vld [vmem:[#allocation14 + $0x18] sm:$0xff]
    %1472 = vrot.lane.b32.xlu0 %v1466, 96
    %v1473 = vpop.permute.xlu0 %1472
    %v1474 = vsel %vm189, %v1473, 0
    %1476 = vmatpush.msra.mxu0 0.0
    %1477 = vmatpush.msra.mxu0 0.0
    %1478 = vmatpush.msra.mxu0 0.0
    %1479 = vmatpush.msra.mxu0 0.0
    %1480 = vmatpush.msra.mxu0 0.0
    %1481 = vmatpush.msra.mxu0 0.0
    %1482 = vmatpush.msra.mxu0 0.0
    %1483 = vmatpush.msra.mxu0 0.0
    %1484 = vmatpush.msra.mxu0 0.0
    %1485 = vmatpush.msra.mxu0 0.0
    %1486 = vmatpush.msra.mxu0 0.0
    %1487 = vmatpush.msra.mxu0 0.0
    %1488 = vmatpush.msra.mxu0 %v1470
    %1489 = vmatpush.msra.mxu0 %v1469
    %1490 = vmatpush.msra.mxu0 %v1468
    %1491 = vmatpush.msra.mxu0 %v1467
    %1492 = vmatmul.f32.gmra.mxu0 %v1474
    %v1493 = vpop.f32.mrf.mxu0
    %v1494 = vadd.f32 %v174, %v1493
    %1495 = vdwg.mxu0
    %v1496 = vsel %vm470, %v1494, -inf
    %1497 = vmax.xlane.f32.xlu0 %v1496
    %v1498 = vpop.xlane.xlu0 %1497
    %v1499 = vsub.f32 %v1494, %v1498
    %v1500 = vmul.f32 %v1499, 1.442695
    %v1501 = vpow.pop %v1500
    %v1502 = vsel %vm470, %v1501, 0.0
    %1503 = vadd.xlane.f32.xlu0 %v1502
    %v1504 = vpop.xlane.xlu0 %1503
    %v1505 = vlog2.pop %v1504
    %v1506 = vmul.f32 %v1505, 0.6931472
    %v1507 = vadd.f32 %v1498, %v1506
    %v1508 = vsub.f32 %v1494, %v1507
    %1509 = vst.msk [vmem:[#allocation17 + $0x5] sm:$0x1] %vm470, %v1508
    %1510 = vst.msk [vmem:[#allocation20] sm:$0x20] %vm1358, %v1369
    %v1511 = vld [vmem:[#allocation10] sm:$0xff]
    %v1512 = vld [vmem:[#allocation10 + $0x8] sm:$0xff]
    %v1513 = vld [vmem:[#allocation10 + $0x10] sm:$0xff]
    %v1514 = vld [vmem:[#allocation10 + $0x18] sm:$0xff]
    %v1515 = vld [vmem:[#allocation10 + $0x20] sm:$0xff]
    %v1516 = vld [vmem:[#allocation10 + $0x28] sm:$0xff]
    %v1517 = vld [vmem:[#allocation10 + $0x30] sm:$0xff]
    %v1518 = vld [vmem:[#allocation10 + $0x38] sm:$0xff]
    %1519 = vmatpush.msra.mxu0 0.0
    %1520 = vmatpush.msra.mxu0 0.0
    %1521 = vmatpush.msra.mxu0 0.0
    %1522 = vmatpush.msra.mxu0 0.0
    %1523 = vmatpush.msra.mxu0 0.0
    %1524 = vmatpush.msra.mxu0 0.0
    %1525 = vmatpush.msra.mxu0 0.0
    %1526 = vmatpush.msra.mxu0 0.0
    %1527 = vmatpush.msra.mxu0 0.0
    %1528 = vmatpush.msra.mxu0 0.0
    %1529 = vmatpush.msra.mxu0 0.0
    %1530 = vmatpush.msra.mxu0 0.0
    %1531 = vmatpush.msra.mxu0 %v1517
    %1532 = vmatpush.msra.mxu0 %v1515
    %1533 = vmatpush.msra.mxu0 %v1513
    %1534 = vmatpush.msra.mxu0 %v1511
    %1535 = vmatmul.f32.gmra.mxu0 %v1474
    %v1536 = vpop.f32.mrf.mxu0
    %v1537 = vadd.f32 0.0, %v1536
    %1538 = vdwg.mxu0
    %1539 = vmatpush.msra.mxu0 0.0
    %1540 = vmatpush.msra.mxu0 0.0
    %1541 = vmatpush.msra.mxu0 0.0
    %1542 = vmatpush.msra.mxu0 0.0
    %1543 = vmatpush.msra.mxu0 0.0
    %1544 = vmatpush.msra.mxu0 0.0
    %1545 = vmatpush.msra.mxu0 0.0
    %1546 = vmatpush.msra.mxu0 0.0
    %1547 = vmatpush.msra.mxu0 0.0
    %1548 = vmatpush.msra.mxu0 0.0
    %1549 = vmatpush.msra.mxu0 0.0
    %1550 = vmatpush.msra.mxu0 0.0
    %1551 = vmatpush.msra.mxu0 %v1518
    %1552 = vmatpush.msra.mxu0 %v1516
    %1553 = vmatpush.msra.mxu0 %v1514
    %1554 = vmatpush.msra.mxu0 %v1512
    %1555 = vmatmul.f32.gmra.mxu0 %v1474
    %v1556 = vpop.f32.mrf.mxu0
    %v1557 = vadd.f32 0.0, %v1556
    %1558 = vdwg.mxu0
    %v1560 = vrot.slane %v1537, 2
    %v1562 = vadd.f32 %v211, %v1560
    %vm1563 = vcmask 161798
    %v1564 = vsel %vm1563, %v1562, -inf
    %1565 = vmax.xlane.f32.xlu0 %v1564
    %v1566 = vpop.xlane.xlu0 %1565
    %v1567 = vsub.f32 %v1562, %v1566
    %v1568 = vmul.f32 %v1567, 1.442695
    %v1569 = vpow.pop %v1568
    %v1570 = vsel %vm1563, %v1569, 0.0
    %1571 = vadd.xlane.f32.xlu0 %v1570
    %v1572 = vpop.xlane.xlu0 %1571
    %v1573 = vrcp.pop %v1572
    %v1574 = vmul.f32 %v1569, %v1573
    %v1576 = vrot.slane %v1574, 6
    %v1577 = vsel %vm340, %v1576, 0
    %1579 = vmatpush.msra.mxu0 0.0
    %1580 = vmatpush.msra.mxu0 0.0
    %1581 = vmatpush.msra.mxu0 0.0
    %1582 = vmatpush.msra.mxu0 0.0
    %1583 = vmatpush.msra.mxu0 0.0
    %1584 = vmatpush.msra.mxu0 0.0
    %1585 = vmatpush.msra.mxu0 0.0
    %1586 = vmatpush.msra.mxu0 0.0
    %1587 = vmatpush.msra.mxu0 0.0
    %1588 = vmatpush.msra.mxu0 0.0
    %1589 = vmatpush.msra.mxu0 0.0
    %1590 = vmatpush.msra.mxu0 0.0
    %1591 = vmatpush.msra.mxu0 0.0
    %1592 = vmatpush.msra.mxu0 %v346
    %1593 = vmatpush.msra.mxu0 %v270
    %1594 = vmatpush.msra.mxu0 %v267
    %1595 = vmatmul.f32.gmra.mxu0 %v1577
    %v1596 = vpop.f32.mrf.mxu0
    %v1597 = vadd.f32 0.0, %v1596
    %1598 = vdwg.mxu0
    %v1600 = vrot.slane %v1597, 2
    %v1602 = vadd.f32 %v231, %v1600
    %v1603 = vmax.f32 %v1602, 0.0
    %v1604 = vld [vmem:[#allocation13] sm:$0xff]
    %v1605 = vld [vmem:[#allocation13 + $0x8] sm:$0xff]
    %v1606 = vld [vmem:[#allocation13 + $0x10] sm:$0xff]
    %v1607 = vld [vmem:[#allocation13 + $0x18] sm:$0xff]
    %v1609 = vrot.slane %v1603, 6
    %v1610 = vsel %vm189, %v1609, 0
    %1612 = vmatpush.msra.mxu0 0.0
    %1613 = vmatpush.msra.mxu0 0.0
    %1614 = vmatpush.msra.mxu0 0.0
    %1615 = vmatpush.msra.mxu0 0.0
    %1616 = vmatpush.msra.mxu0 0.0
    %1617 = vmatpush.msra.mxu0 0.0
    %1618 = vmatpush.msra.mxu0 0.0
    %1619 = vmatpush.msra.mxu0 0.0
    %1620 = vmatpush.msra.mxu0 0.0
    %1621 = vmatpush.msra.mxu0 0.0
    %1622 = vmatpush.msra.mxu0 0.0
    %1623 = vmatpush.msra.mxu0 0.0
    %1624 = vmatpush.msra.mxu0 %v1607
    %1625 = vmatpush.msra.mxu0 %v1606
    %1626 = vmatpush.msra.mxu0 %v1605
    %1627 = vmatpush.msra.mxu0 %v1604
    %1628 = vmatmul.f32.gmra.mxu0 %v1610
    %v1629 = vpop.f32.mrf.mxu0
    %v1630 = vadd.f32 %v172, %v1629
    %1631 = vdwg.mxu0
    %v1632 = vadd.f32 %v1557, %v173
    %v1633 = vadd.f32 %v1630, %v1632
    %v1634 = vxor.u32 %v1633, 2147483648
    %v1635 = vmul.f32 %v1634, 1.442695
    %v1636 = vpow.pop %v1635
    %v1637 = vadd.f32 %v1636, 1.0
    %v1638 = vrcp.pop %v1637
    %v1639 = vmul.f32 %v1637, %v1638
    %v1640 = vsub.f32 1.0, %v1639
    %v1641 = vmul.f32 %v1638, %v1640
    %v1642 = vadd.f32 %v1638, %v1641
    %vm1643 = vweird.f32 %v1637
    %vm1644 = vweird.f32 %v1638
    %vm1645 = vmor %vm1643, %vm1644
    %v1646 = vsel %vm1645, %v1638, %v1642
    %v1647 = vand.u32 2147483647, %v1637
    %vm1648 = vcmp.eq.f32.partialorder %v1647, 8.507059e+37
    %v1649 = vand.u32 %v1637, 2147483648
    %v1650 = vor.u32 1.1754944e-38, %v1649
    %v1651 = vsel %vm1648, %v1650, %v1646
    %v1652 = vmul.f32 1.0, %v1651
    %1654 = vrot.lane.b32.xlu0 %v1632, 64
    %v1655 = vpop.permute.xlu0 %1654
    %v1657 = vmul.f32 %v1652, %v1655
    %1659 = vrot.lane.b32.xlu0 %v1657, 64
    %v1660 = vpop.permute.xlu0 %1659
    %v1662 = vadd.f32 %v1630, %v1660
    %v1663 = vtanh.pop %v1662
    %v1664 = vsub.f32 1.0, %v1652
    %1666 = vrot.lane.b32.xlu0 %v1663, 96
    %v1667 = vpop.permute.xlu0 %1666
    %v1669 = vmul.f32 %v1664, %v1667
    %v1670 = vmul.f32 %v1652, %v1466
    %v1671 = vadd.f32 %v1669, %v1670
    %v1672 = vld [vmem:[#allocation14] sm:$0xff]
    %v1673 = vld [vmem:[#allocation14 + $0x8] sm:$0xff]
    %v1674 = vld [vmem:[#allocation14 + $0x10] sm:$0xff]
    %v1675 = vld [vmem:[#allocation14 + $0x18] sm:$0xff]
    %1677 = vrot.lane.b32.xlu0 %v1671, 96
    %v1678 = vpop.permute.xlu0 %1677
    %v1679 = vsel %vm189, %v1678, 0
    %1681 = vmatpush.msra.mxu0 0.0
    %1682 = vmatpush.msra.mxu0 0.0
    %1683 = vmatpush.msra.mxu0 0.0
    %1684 = vmatpush.msra.mxu0 0.0
    %1685 = vmatpush.msra.mxu0 0.0
    %1686 = vmatpush.msra.mxu0 0.0
    %1687 = vmatpush.msra.mxu0 0.0
    %1688 = vmatpush.msra.mxu0 0.0
    %1689 = vmatpush.msra.mxu0 0.0
    %1690 = vmatpush.msra.mxu0 0.0
    %1691 = vmatpush.msra.mxu0 0.0
    %1692 = vmatpush.msra.mxu0 0.0
    %1693 = vmatpush.msra.mxu0 %v1675
    %1694 = vmatpush.msra.mxu0 %v1674
    %1695 = vmatpush.msra.mxu0 %v1673
    %1696 = vmatpush.msra.mxu0 %v1672
    %1697 = vmatmul.f32.gmra.mxu0 %v1679
    %v1698 = vpop.f32.mrf.mxu0
    %v1699 = vadd.f32 %v174, %v1698
    %1700 = vdwg.mxu0
    %v1701 = vsel %vm470, %v1699, -inf
    %1702 = vmax.xlane.f32.xlu0 %v1701
    %v1703 = vpop.xlane.xlu0 %1702
    %v1704 = vsub.f32 %v1699, %v1703
    %v1705 = vmul.f32 %v1704, 1.442695
    %v1706 = vpow.pop %v1705
    %v1707 = vsel %vm470, %v1706, 0.0
    %1708 = vadd.xlane.f32.xlu0 %v1707
    %v1709 = vpop.xlane.xlu0 %1708
    %v1710 = vlog2.pop %v1709
    %v1711 = vmul.f32 %v1710, 0.6931472
    %v1712 = vadd.f32 %v1703, %v1711
    %v1713 = vsub.f32 %v1699, %v1712
    %1714 = vst.msk [vmem:[#allocation17 + $0x6] sm:$0x1] %vm470, %v1713
    %1715 = vst.msk [vmem:[#allocation20] sm:$0x40] %vm1563, %v1574
    %v1716 = vld [vmem:[#allocation10] sm:$0xff]
    %v1717 = vld [vmem:[#allocation10 + $0x8] sm:$0xff]
    %v1718 = vld [vmem:[#allocation10 + $0x10] sm:$0xff]
    %v1719 = vld [vmem:[#allocation10 + $0x18] sm:$0xff]
    %v1720 = vld [vmem:[#allocation10 + $0x20] sm:$0xff]
    %v1721 = vld [vmem:[#allocation10 + $0x28] sm:$0xff]
    %v1722 = vld [vmem:[#allocation10 + $0x30] sm:$0xff]
    %v1723 = vld [vmem:[#allocation10 + $0x38] sm:$0xff]
    %1724 = vmatpush.msra.mxu0 0.0
    %1725 = vmatpush.msra.mxu0 0.0
    %1726 = vmatpush.msra.mxu0 0.0
    %1727 = vmatpush.msra.mxu0 0.0
    %1728 = vmatpush.msra.mxu0 0.0
    %1729 = vmatpush.msra.mxu0 0.0
    %1730 = vmatpush.msra.mxu0 0.0
    %1731 = vmatpush.msra.mxu0 0.0
    %1732 = vmatpush.msra.mxu0 0.0
    %1733 = vmatpush.msra.mxu0 0.0
    %1734 = vmatpush.msra.mxu0 0.0
    %1735 = vmatpush.msra.mxu0 0.0
    %1736 = vmatpush.msra.mxu0 %v1722
    %1737 = vmatpush.msra.mxu0 %v1720
    %1738 = vmatpush.msra.mxu0 %v1718
    %1739 = vmatpush.msra.mxu0 %v1716
    %1740 = vmatmul.f32.gmra.mxu0 %v1679
    %v1741 = vpop.f32.mrf.mxu0
    %v1742 = vadd.f32 0.0, %v1741
    %1743 = vdwg.mxu0
    %1744 = vmatpush.msra.mxu0 0.0
    %1745 = vmatpush.msra.mxu0 0.0
    %1746 = vmatpush.msra.mxu0 0.0
    %1747 = vmatpush.msra.mxu0 0.0
    %1748 = vmatpush.msra.mxu0 0.0
    %1749 = vmatpush.msra.mxu0 0.0
    %1750 = vmatpush.msra.mxu0 0.0
    %1751 = vmatpush.msra.mxu0 0.0
    %1752 = vmatpush.msra.mxu0 0.0
    %1753 = vmatpush.msra.mxu0 0.0
    %1754 = vmatpush.msra.mxu0 0.0
    %1755 = vmatpush.msra.mxu0 0.0
    %1756 = vmatpush.msra.mxu0 %v1723
    %1757 = vmatpush.msra.mxu0 %v1721
    %1758 = vmatpush.msra.mxu0 %v1719
    %1759 = vmatpush.msra.mxu0 %v1717
    %1760 = vmatmul.f32.gmra.mxu0 %v1679
    %v1761 = vpop.f32.mrf.mxu0
    %v1762 = vadd.f32 0.0, %v1761
    %1763 = vdwg.mxu0
    %v1765 = vrot.slane %v1742, 1
    %v1767 = vadd.f32 %v211, %v1765
    %vm1768 = vcmask 162823
    %v1769 = vsel %vm1768, %v1767, -inf
    %1770 = vmax.xlane.f32.xlu0 %v1769
    %v1771 = vpop.xlane.xlu0 %1770
    %v1772 = vsub.f32 %v1767, %v1771
    %v1773 = vmul.f32 %v1772, 1.442695
    %v1774 = vpow.pop %v1773
    %v1775 = vsel %vm1768, %v1774, 0.0
    %1776 = vadd.xlane.f32.xlu0 %v1775
    %v1777 = vpop.xlane.xlu0 %1776
    %v1778 = vrcp.pop %v1777
    %v1779 = vmul.f32 %v1774, %v1778
    %v1781 = vrot.slane %v1779, 7
    %v1782 = vsel %vm340, %v1781, 0
    %1784 = vmatpush.msra.mxu0 0.0
    %1785 = vmatpush.msra.mxu0 0.0
    %1786 = vmatpush.msra.mxu0 0.0
    %1787 = vmatpush.msra.mxu0 0.0
    %1788 = vmatpush.msra.mxu0 0.0
    %1789 = vmatpush.msra.mxu0 0.0
    %1790 = vmatpush.msra.mxu0 0.0
    %1791 = vmatpush.msra.mxu0 0.0
    %1792 = vmatpush.msra.mxu0 0.0
    %1793 = vmatpush.msra.mxu0 0.0
    %1794 = vmatpush.msra.mxu0 0.0
    %1795 = vmatpush.msra.mxu0 0.0
    %1796 = vmatpush.msra.mxu0 0.0
    %1797 = vmatpush.msra.mxu0 %v346
    %1798 = vmatpush.msra.mxu0 %v270
    %1799 = vmatpush.msra.mxu0 %v267
    %1800 = vmatmul.f32.gmra.mxu0 %v1782
    %v1801 = vpop.f32.mrf.mxu0
    %v1802 = vadd.f32 0.0, %v1801
    %1803 = vdwg.mxu0
    %v1805 = vrot.slane %v1802, 1
    %v1807 = vadd.f32 %v231, %v1805
    %v1808 = vmax.f32 %v1807, 0.0
    %v1809 = vld [vmem:[#allocation13] sm:$0xff]
    %v1810 = vld [vmem:[#allocation13 + $0x8] sm:$0xff]
    %v1811 = vld [vmem:[#allocation13 + $0x10] sm:$0xff]
    %v1812 = vld [vmem:[#allocation13 + $0x18] sm:$0xff]
    %v1814 = vrot.slane %v1808, 7
    %v1815 = vsel %vm189, %v1814, 0
    %1817 = vmatpush.msra.mxu0 0.0
    %1818 = vmatpush.msra.mxu0 0.0
    %1819 = vmatpush.msra.mxu0 0.0
    %1820 = vmatpush.msra.mxu0 0.0
    %1821 = vmatpush.msra.mxu0 0.0
    %1822 = vmatpush.msra.mxu0 0.0
    %1823 = vmatpush.msra.mxu0 0.0
    %1824 = vmatpush.msra.mxu0 0.0
    %1825 = vmatpush.msra.mxu0 0.0
    %1826 = vmatpush.msra.mxu0 0.0
    %1827 = vmatpush.msra.mxu0 0.0
    %1828 = vmatpush.msra.mxu0 0.0
    %1829 = vmatpush.msra.mxu0 %v1812
    %1830 = vmatpush.msra.mxu0 %v1811
    %1831 = vmatpush.msra.mxu0 %v1810
    %1832 = vmatpush.msra.mxu0 %v1809
    %1833 = vmatmul.f32.gmra.mxu0 %v1815
    %v1834 = vpop.f32.mrf.mxu0
    %v1835 = vadd.f32 %v172, %v1834
    %1836 = vdwg.mxu0
    %v1837 = vadd.f32 %v1762, %v173
    %v1838 = vadd.f32 %v1835, %v1837
    %v1839 = vxor.u32 %v1838, 2147483648
    %v1840 = vmul.f32 %v1839, 1.442695
    %v1841 = vpow.pop %v1840
    %v1842 = vadd.f32 %v1841, 1.0
    %v1843 = vrcp.pop %v1842
    %v1844 = vmul.f32 %v1842, %v1843
    %v1845 = vsub.f32 1.0, %v1844
    %v1846 = vmul.f32 %v1843, %v1845
    %v1847 = vadd.f32 %v1843, %v1846
    %vm1848 = vweird.f32 %v1842
    %vm1849 = vweird.f32 %v1843
    %vm1850 = vmor %vm1848, %vm1849
    %v1851 = vsel %vm1850, %v1843, %v1847
    %v1852 = vand.u32 2147483647, %v1842
    %vm1853 = vcmp.eq.f32.partialorder %v1852, 8.507059e+37
    %v1854 = vand.u32 %v1842, 2147483648
    %v1855 = vor.u32 1.1754944e-38, %v1854
    %v1856 = vsel %vm1853, %v1855, %v1851
    %v1857 = vmul.f32 1.0, %v1856
    %1859 = vrot.lane.b32.xlu0 %v1837, 64
    %v1860 = vpop.permute.xlu0 %1859
    %v1862 = vmul.f32 %v1857, %v1860
    %1864 = vrot.lane.b32.xlu0 %v1862, 64
    %v1865 = vpop.permute.xlu0 %1864
    %v1867 = vadd.f32 %v1835, %v1865
    %v1868 = vtanh.pop %v1867
    %v1869 = vsub.f32 1.0, %v1857
    %1871 = vrot.lane.b32.xlu0 %v1868, 96
    %v1872 = vpop.permute.xlu0 %1871
    %v1874 = vmul.f32 %v1869, %v1872
    %v1875 = vmul.f32 %v1857, %v1671
    %v1876 = vadd.f32 %v1874, %v1875
    %v1877 = vld [vmem:[#allocation14] sm:$0xff]
    %v1878 = vld [vmem:[#allocation14 + $0x8] sm:$0xff]
    %v1879 = vld [vmem:[#allocation14 + $0x10] sm:$0xff]
    %v1880 = vld [vmem:[#allocation14 + $0x18] sm:$0xff]
    %1882 = vrot.lane.b32.xlu0 %v1876, 96
    %v1883 = vpop.permute.xlu0 %1882
    %v1884 = vsel %vm189, %v1883, 0
    %1886 = vmatpush.msra.mxu0 0.0
    %1887 = vmatpush.msra.mxu0 0.0
    %1888 = vmatpush.msra.mxu0 0.0
    %1889 = vmatpush.msra.mxu0 0.0
    %1890 = vmatpush.msra.mxu0 0.0
    %1891 = vmatpush.msra.mxu0 0.0
    %1892 = vmatpush.msra.mxu0 0.0
    %1893 = vmatpush.msra.mxu0 0.0
    %1894 = vmatpush.msra.mxu0 0.0
    %1895 = vmatpush.msra.mxu0 0.0
    %1896 = vmatpush.msra.mxu0 0.0
    %1897 = vmatpush.msra.mxu0 0.0
    %1898 = vmatpush.msra.mxu0 %v1880
    %1899 = vmatpush.msra.mxu0 %v1879
    %1900 = vmatpush.msra.mxu0 %v1878
    %1901 = vmatpush.msra.mxu0 %v1877
    %1902 = vmatmul.f32.gmra.mxu0 %v1884
    %v1903 = vpop.f32.mrf.mxu0
    %v1904 = vadd.f32 %v174, %v1903
    %1905 = vdwg.mxu0
    %v1906 = vsel %vm470, %v1904, -inf
    %1907 = vmax.xlane.f32.xlu0 %v1906
    %v1908 = vpop.xlane.xlu0 %1907
    %v1909 = vsub.f32 %v1904, %v1908
    %v1910 = vmul.f32 %v1909, 1.442695
    %v1911 = vpow.pop %v1910
    %v1912 = vsel %vm470, %v1911, 0.0
    %1913 = vadd.xlane.f32.xlu0 %v1912
    %v1914 = vpop.xlane.xlu0 %1913
    %v1915 = vlog2.pop %v1914
    %v1916 = vmul.f32 %v1915, 0.6931472
    %v1917 = vadd.f32 %v1908, %v1916
    %v1918 = vsub.f32 %v1904, %v1917
    %1919 = vst.msk [vmem:[#allocation17 + $0x7] sm:$0x1] %vm470, %v1918
    %1920 = vst.msk [vmem:[#allocation20] sm:$0x80] %vm1768, %v1779
    %vm1922 = vcmask 253952
    %1923 = vst.msk [vmem:[#allocation18] sm:$0x1] %vm1922, %v1883
    // Predicated region
    $region74: #{tpu_custom_call.1} parent=1 // pred_check
      _
    $region75: #{tpu_custom_call.1} parent=1 // pred_check_branch
      %1925 = sbr.rel (0) target = $region77
    $region76: #{tpu_custom_call.1} parent=1 // pred_region
      %1927 = vsyncadd [#allocation4], 0
      %s1929 = sshll.u32 [#allocation17], 4
      %s1930 = int_to_ptr.vmem [resolvable:$true] %s1929
      %s1931 = sshll.u32 %s9, 4
      %s1932 = int_to_ptr.hbm [resolvable:$true] %s1931
      %1934 = dma.vmem_to_hbm [thread:$0]  %s1930, 128, %s1932, [#allocation4]
    $region77: #{tpu_custom_call.1} parent=1 // pred_fallthru
      _
    // Predicated region
    $region78: #{tpu_custom_call.1} parent=1 // pred_check
      _
    $region79: #{tpu_custom_call.1} parent=1 // pred_check_branch
      %1936 = sbr.rel (0) target = $region81
    $region80: #{tpu_custom_call.1} parent=1 // pred_region
      %1938 = vsyncadd [#allocation19], 0
      %s1940 = sshll.u32 [#allocation18], 4
      %s1941 = int_to_ptr.vmem [resolvable:$true] %s1940
      %s1942 = sshll.u32 %s10, 4
      %s1943 = int_to_ptr.hbm [resolvable:$true] %s1942
      %1945 = dma.vmem_to_hbm [thread:$0]  %s1941, 16, %s1943, [#allocation19]
    $region81: #{tpu_custom_call.1} parent=1 // pred_fallthru
      _
    // Predicated region
    $region82: #{tpu_custom_call.1} parent=1 // pred_check
      _
    $region83: #{tpu_custom_call.1} parent=1 // pred_check_branch
      %1947 = sbr.rel (0) target = $region85
    $region84: #{tpu_custom_call.1} parent=1 // pred_region
      %1949 = vsyncadd [#allocation19], 0
      %s1951 = sshll.u32 [#allocation20], 4
      %s1952 = int_to_ptr.vmem [resolvable:$true] %s1951
      %s1953 = sshll.u32 %s11, 4
      %s1954 = int_to_ptr.hbm [resolvable:$true] %s1953
      %1956 = dma.vmem_to_hbm [thread:$0]  %s1952, 128, %s1954, [#allocation19]
    $region85: #{tpu_custom_call.1} parent=1 // pred_fallthru
      _
    // Predicated region
    $region86: #{tpu_custom_call.1} parent=1 // pred_check
      _
    $region87: #{tpu_custom_call.1} parent=1 // pred_check_branch
      %1958 = sbr.rel (0) target = $region89
    $region88: #{tpu_custom_call.1} parent=1 // pred_region
      %1960 = dma.done [#allocation4], 128
    $region89: #{tpu_custom_call.1} parent=1 // pred_fallthru
      _
    // Predicated region
    $region90: #{tpu_custom_call.1} parent=1 // pred_check
      _
    $region91: #{tpu_custom_call.1} parent=1 // pred_check_branch
      %1962 = sbr.rel (0) target = $region93
    $region92: #{tpu_custom_call.1} parent=1 // pred_region
      %1964 = dma.done [#allocation19], 16
    $region93: #{tpu_custom_call.1} parent=1 // pred_fallthru
      _
    // Predicated region
    $region94: #{tpu_custom_call.1} parent=1 // pred_check
      _
    $region95: #{tpu_custom_call.1} parent=1 // pred_check_branch
      %1966 = sbr.rel (0) target = $region97
    $region96: #{tpu_custom_call.1} parent=1 // pred_region
      %1968 = dma.done [#allocation19], 128
    $region97: #{tpu_custom_call.1} parent=1 // pred_fallthru
      _
    %1969 = vsyncpa [#allocation3], 1
    %1970 = vsyncpa [#allocation6], 1
    %1971 = vsyncpa [#allocation9], 1
    %1972 = vsyncpa [#allocation12], 1
    %1973 = vsyncpa [#allocation15], 1
    %1974 = vsyncpa [#allocation4], 1
    %1975 = vsyncpa [#allocation19], 1

</llo_original>
